<compile_context>
chip_gen: v6e
topology: v6e:2x2x1
jax: 0.10.0
libtpu: 0.0.40
codegen_flags: <defaults>
</compile_context>

<pallas_src>
import functools

import numpy as np
import jax
import jax.numpy as jnp
from jax.experimental import pallas as pl
from jax.experimental.pallas import tpu as pltpu


NEG_BIG = jnp.float32(-1e30)   # finite "-inf": avoids NaN on fully-masked rows


# ---------------------------------------------------------------------------
# TPU-generation aware sizing helpers
# ---------------------------------------------------------------------------
@functools.lru_cache(maxsize=1)
def _device_kind():
    try:
        return jax.devices()[0].device_kind.lower()
    except Exception:
        return ""


def _vmem_cap_bytes():
    kind = _device_kind()
    if "v7" in kind:
        return 48 << 20      # 64 MiB physical per TC -> leave compiler headroom
    if "v5" in kind or "v6" in kind:
        return 100 << 20     # 128 MiB physical -> don't clamp at half of it
    return 64 << 20


def _preferred_row_tile():
    kind = _device_kind()
    if "v6" in kind:
        return 512           # bigger tiles reach ~85% of HBM roofline on v6e
    return 256               # v5e MXU saturates at 128/256; v7x VMEM is smaller


def _default_heads_per_block(num_heads):
    kind = _device_kind()
    if "v5" in kind:         # v5e: single vst slot -> keep live (hb,L,L) small
        for hb in (4, 2, 1):
            if num_heads % hb == 0:
                return hb
    return num_heads


def _row_tile(n, preferred=None):
    """Largest row tile <= preferred that evenly divides n (multiple of 8)."""
    if preferred is None:
        preferred = _preferred_row_tile()
    if n <= preferred:
        return n
    start = preferred - (preferred % 8)
    for t in range(start, 7, -8):
        if n % t == 0:
            return t
    # Fallback: whole extent (valid, but VMEM-heavy for awkward n).
    return n


def _block_bytes(*shapes, itemsize=4):
    total = 0
    for s in shapes:
        k = 1
        for d in s:
            k *= int(d)
        total += k * itemsize
    return total


def _mosaic_params(block_bytes, parallel_axes=1):
    # 2x for double-buffered pipelining + headroom, clamped per generation.
    limit = int(min(max(2 * block_bytes + (4 << 20), 16 << 20), _vmem_cap_bytes()))
    return pltpu.CompilerParams(
        dimension_semantics=("parallel",) * parallel_axes,
        vmem_limit_bytes=limit,
    )


# ---------------------------------------------------------------------------
# Kernels
# ---------------------------------------------------------------------------
def _qkv_kernel(x_ref, w_ref, b_ref, q_ref, k_ref, v_ref, *, dm):
    """One fused matmul against packed [Dm, 3*Dm] weight, sliced into Q/K/V."""
    y = (jnp.dot(x_ref[...], w_ref[...], preferred_element_type=jnp.float32)
         + b_ref[...])                               # f32 accumulation + bias
    q_ref[...] = y[:, :dm].astype(q_ref.dtype)
    k_ref[...] = y[:, dm:2 * dm].astype(k_ref.dtype)
    v_ref[...] = y[:, 2 * dm:].astype(v_ref.dtype)


def _attention_kernel(bias_ref, q_ref, k_ref, v_ref, ctx_ref, *attn_refs, scale):
    """Scaled dot-product attention for a block of `hb` (virtual-batch) heads.

    bias_ref is the tiny additive key bias (0 / -1e30), shape (hb, 1, L),
    already paired per head exactly like torch's attn_mask.repeat(H, 1, 1).
    Softmax math is f32 with an exact denominator (probs sum to 1).
    """
    q = q_ref[...]                       # [hb, L, d]  (compute dtype)
    k = k_ref[...]
    v = v_ref[...]
    s = jnp.einsum("hqd,hkd->hqk", q, k,
                   preferred_element_type=jnp.float32) * scale
    s = s + bias_ref[...]                # broadcast (hb,1,L) over queries
    s = s - jnp.max(s, axis=-1, keepdims=True)
    p = jnp.exp(s)
    p = p / jnp.sum(p, axis=-1, keepdims=True)       # exact softmax
    ctx = jnp.einsum("hqk,hkd->hqd", p.astype(v.dtype), v,
                     preferred_element_type=jnp.float32)
    ctx_ref[...] = ctx.astype(ctx_ref.dtype)
    if attn_refs:                        # attention-prob output is optional
        attn_refs[0][...] = p.astype(attn_refs[0].dtype)


def _tail_kernel(ctx_ref, res_ref, wf_ref, bf_ref, g1_ref, bn1_ref,
                 w1_ref, bh1_ref, w2_ref, bh2_ref, g2_ref, bn2_ref, o_ref, *, eps):
    """Fused: out-proj + residual + LN1 + FFN + residual + LN2 (one row tile).

    Matmul operands are in the compute dtype (bf16 on the perf path), all
    accumulation / LayerNorm math is f32.
    """
    # --- attention sublayer tail: output projection + residual + LN1 -------
    y = (jnp.dot(ctx_ref[...], wf_ref[...], preferred_element_type=jnp.float32)
         + bf_ref[...])
    y = y + res_ref[...].astype(jnp.float32)
    mean = jnp.mean(y, axis=-1, keepdims=True)
    var = jnp.mean((y - mean) ** 2, axis=-1, keepdims=True)   # biased, like torch
    x1 = (y - mean) * jax.lax.rsqrt(var + eps) * g1_ref[...] + bn1_ref[...]

    # --- position-wise FFN (1x1 convs == linears) + residual + LN2 ---------
    xc = x1.astype(w1_ref.dtype)
    h = jnp.maximum(
        jnp.dot(xc, w1_ref[...], preferred_element_type=jnp.float32) + bh1_ref[...],
        0.0)
    y2 = (jnp.dot(h.astype(w2_ref.dtype), w2_ref[...],
                  preferred_element_type=jnp.float32) + bh2_ref[...])
    y2 = y2 + x1
    mean2 = jnp.mean(y2, axis=-1, keepdims=True)
    var2 = jnp.mean((y2 - mean2) ** 2, axis=-1, keepdims=True)
    o_ref[...] = ((y2 - mean2) * jax.lax.rsqrt(var2 + eps) * g2_ref[...]
                  + bn2_ref[...]).astype(o_ref.dtype)


def _head_kernel(x_ref, w_ref, b_ref, o_ref):
    """Final dense (out_features=1) as an MXU dot + sigmoid, row-tiled."""
    y = (jnp.dot(x_ref[...], w_ref[...], preferred_element_type=jnp.float32)
         + b_ref[...])
    o_ref[...] = (1.0 / (1.0 + jnp.exp(-y))).astype(o_ref.dtype)


# ---------------------------------------------------------------------------
# Pallas wrappers
# ---------------------------------------------------------------------------
def _qkv_proj(x2d, layer, cd):
    n, dm = x2d.shape
    w = jnp.concatenate([layer["wq"], layer["wk"], layer["wv"]], axis=1).astype(cd)
    b = jnp.concatenate([layer["bq"], layer["bk"], layer["bv"]]
                        ).reshape(1, 3 * dm).astype(jnp.float32)
    tm = _row_tile(n)
    row = pl.BlockSpec((tm, dm), lambda i: (i, 0))
    w_spec = pl.BlockSpec((dm, 3 * dm), lambda i: (0, 0))
    b_spec = pl.BlockSpec((1, 3 * dm), lambda i: (0, 0))
    blk = (_block_bytes((tm, dm)) * 4 + _block_bytes((tm, 3 * dm))
           + _block_bytes((dm, 3 * dm)) + _block_bytes((1, 3 * dm)))
    return pl.pallas_call(
        functools.partial(_qkv_kernel, dm=dm),
        grid=(pl.cdiv(n, tm),),
        out_shape=tuple(jax.ShapeDtypeStruct((n, dm), cd) for _ in range(3)),
        in_specs=[row, w_spec, b_spec],
        out_specs=(row, row, row),
        compiler_params=_mosaic_params(blk),
    )(x2d, w, b)


def _attention(key_bias_bh, qh, kh, vh, scale, *, heads_per_block, collect_attn):
    bh, L, d = qh.shape
    hb = heads_per_block
    assert bh % hb == 0
    qkv_spec = pl.BlockSpec((hb, L, d), lambda i: (i, 0, 0))
    bias_spec = pl.BlockSpec((hb, 1, L), lambda i: (i, 0, 0))
    sq_spec = pl.BlockSpec((hb, L, L), lambda i: (i, 0, 0))
    ctx_sds = jax.ShapeDtypeStruct((bh, L, d), qh.dtype)
    blk = (_block_bytes((hb, L, d)) * 4 + _block_bytes((hb, 1, L))
           + _block_bytes((hb, L, L)) * (2 if collect_attn else 1))
    if collect_attn:
        out_shape = (ctx_sds, jax.ShapeDtypeStruct((bh, L, L), jnp.float32))
        out_specs = (qkv_spec, sq_spec)
    else:
        out_shape = ctx_sds
        out_specs = qkv_spec
    res = pl.pallas_call(
        functools.partial(_attention_kernel, scale=scale),
        grid=(bh // hb,),
        out_shape=out_shape,
        in_specs=[bias_spec, qkv_spec, qkv_spec, qkv_spec],
        out_specs=out_specs,
        compiler_params=_mosaic_params(blk),
    )(key_bias_bh, qh, kh, vh)
    if collect_attn:
        return res[0], res[1]
    return res, None


def _attn_tail_ffn(ctx2d, res2d, layer, cd, eps=1e-5):
    n, dm = ctx2d.shape
    dff = layer["w1"].shape[1]
    tm = _row_tile(n)
    row = pl.BlockSpec((tm, dm), lambda i: (i, 0))
    wf_spec = pl.BlockSpec((dm, dm), lambda i: (0, 0))
    vdm = pl.BlockSpec((1, dm), lambda i: (0, 0))
    w1_spec = pl.BlockSpec((dm, dff), lambda i: (0, 0))
    vdf = pl.BlockSpec((1, dff), lambda i: (0, 0))
    w2_spec = pl.BlockSpec((dff, dm), lambda i: (0, 0))
    blk = (_block_bytes((tm, dm)) * 3 + _block_bytes((tm, dff))
           + _block_bytes((dm, dm)) + _block_bytes((dm, dff)) + _block_bytes((dff, dm))
           + _block_bytes((1, dm)) * 5 + _block_bytes((1, dff)))
    return pl.pallas_call(
        functools.partial(_tail_kernel, eps=eps),
        grid=(pl.cdiv(n, tm),),
        out_shape=jax.ShapeDtypeStruct((n, dm), cd),
        in_specs=[row, row, wf_spec, vdm, vdm, vdm, w1_spec, vdf, w2_spec,
                  vdm, vdm, vdm],
        out_specs=row,
        compiler_params=_mosaic_params(blk),
    )(ctx2d, res2d,
      layer["wf"].astype(cd), layer["bf"].reshape(1, dm).astype(jnp.float32),
      layer["ln1_g"].reshape(1, dm), layer["ln1_b"].reshape(1, dm),
      layer["w1"].astype(cd), layer["b1"].reshape(1, dff).astype(jnp.float32),
      layer["w2"].astype(cd), layer["b2"].reshape(1, dm).astype(jnp.float32),
      layer["ln2_g"].reshape(1, dm), layer["ln2_b"].reshape(1, dm))


def _dense_sigmoid(x2d, w, b, cd):
    n, din = x2d.shape
    w_cd = w.astype(cd)                      # (din, 1)
    b_11 = b.reshape(1, 1).astype(jnp.float32)
    tm = _row_tile(n)
    row = pl.BlockSpec((tm, din), lambda i: (i, 0))
    w_spec = pl.BlockSpec((din, 1), lambda i: (0, 0))
    b_spec = pl.BlockSpec((1, 1), lambda i: (0, 0))
    out_spec = pl.BlockSpec((tm, 1), lambda i: (i, 0))
    blk = _block_bytes((tm, din), (din, 1), (1, 1), (tm, 1))
    return pl.pallas_call(
        _head_kernel,
        grid=(pl.cdiv(n, tm),),
        out_shape=jax.ShapeDtypeStruct((n, 1), jnp.float32),
        in_specs=[row, w_spec, b_spec],
        out_specs=out_spec,
        compiler_params=_mosaic_params(blk),
    )(x2d, w_cd, b_11)


# ---------------------------------------------------------------------------
# Full Encoder forward (Pallas path)
# ---------------------------------------------------------------------------
def encoder_forward(params, inputs, inputs_len, *, num_heads,
                    compute_dtype=jnp.bfloat16, collect_attn=False,
                    heads_per_block=None):
    B, L = inputs.shape
    Dm = params["embed"].shape[1]
    H = num_heads
    dph = Dm // H
    cd = compute_dtype
    hb = _default_heads_per_block(H) if heads_per_block is None else heads_per_block
    assert (B * H) % hb == 0

    # --- embedding + positional encoding (plain-JAX gathers; tiny) ---------
    x = params["embed"][inputs]                                   # [B, L, Dm] f32
    positions = jnp.arange(1, L + 1, dtype=jnp.int32)[None, :]
    pos_idx = jnp.where(positions <= inputs_len[:, None], positions, 0)
    x = (x + params["pos_table"][pos_idx]).astype(cd)

    # --- padding mask -> tiny additive key bias, repeated per head exactly
    #     like torch's attn_mask.repeat(num_heads, 1, 1) pairing (row m uses
    #     batch m % B).  Shape [B*H, 1, L]; broadcast over queries in-kernel.
    key_bias = jnp.where(inputs == 0, NEG_BIG, jnp.float32(0.0))  # [B, L]
    key_bias_bh = jnp.tile(key_bias, (H, 1))[:, None, :]          # [B*H, 1, L]

    denom = dph // H                                              # module's scale defn
    if denom <= 0:
        raise ValueError("dim_per_head // num_heads must be > 0 for the "
                         "module's scale = (dim_per_head // num_heads)**-0.5")
    scale = float(denom ** -0.5)

    attentions = []
    for layer in params["layers"]:
        res2d = x.reshape(B * L, Dm)
        q2, k2, v2 = _qkv_proj(res2d, layer, cd)
        # contiguous reshape == torch .view(B*num_heads, -1, dim_per_head)
        qh = q2.reshape(B * H, L, dph)
        kh = k2.reshape(B * H, L, dph)
        vh = v2.reshape(B * H, L, dph)
        ctx, attn = _attention(key_bias_bh, qh, kh, vh, scale,
                               heads_per_block=hb, collect_attn=collect_attn)
        ctx2d = ctx.reshape(B * L, Dm)            # == .view(B, -1, Dm)
        x2d = _attn_tail_ffn(ctx2d, res2d, layer, cd)   # out-proj+LN1+FFN+LN2
        x = x2d.reshape(B, L, Dm)
        if collect_attn:
            attentions.append(attn)

    flat = x.reshape(B, L * Dm)
    out = _dense_sigmoid(flat, params["dense_w"], params["dense_b"], cd)
    return out, attentions


# ---------------------------------------------------------------------------
# Parameters / positional table
# ---------------------------------------------------------------------------
def make_positional_table(max_seq_len, d_model):
    j = np.arange(d_model)
    pos = np.arange(max_seq_len, dtype=np.float64)
    angles = pos[:, None] / np.power(10000.0, 2.0 * (j // 2) / d_model)[None, :]
    pe = np.array(angles)
    pe[:, 0::2] = np.sin(angles[:, 0::2])
    pe[:, 1::2] = np.cos(angles[:, 1::2])
    table = np.concatenate([np.zeros((1, d_model)), pe], axis=0)  # row 0 = pad
    return jnp.asarray(table, dtype=jnp.float32)


def init_params(key, *, vocab_size, max_seq_len, model_dim, ffn_dim, num_layers):
    keys = jax.random.split(key, 4 + num_layers)
    init = lambda k, shp, s=0.1: (s * jax.random.normal(k, shp)).astype(jnp.float32)
    params = {
        "embed": init(keys[0], (vocab_size, model_dim), 1.0),
        "pos_table": make_positional_table(max_seq_len, model_dim),
        "dense_w": init(keys[1], (max_seq_len * model_dim, 1)),
        "dense_b": init(keys[2], (1,)),
        "layers": [],
    }
    for li in range(num_layers):
        lk = jax.random.split(keys[4 + li], 12)
        params["layers"].append({
            "wq": init(lk[0], (model_dim, model_dim)), "bq": init(lk[1], (model_dim,)),
            "wk": init(lk[2], (model_dim, model_dim)), "bk": init(lk[3], (model_dim,)),
            "wv": init(lk[4], (model_dim, model_dim)), "bv": init(lk[5], (model_dim,)),
            "wf": init(lk[6], (model_dim, model_dim)), "bf": init(lk[7], (model_dim,)),
            "ln1_g": jnp.ones((model_dim,), jnp.float32),
            "ln1_b": jnp.zeros((model_dim,), jnp.float32),
            "w1": init(lk[8], (model_dim, ffn_dim)), "b1": init(lk[9], (ffn_dim,)),
            "w2": init(lk[10], (ffn_dim, model_dim)), "b2": init(lk[11], (model_dim,)),
            "ln2_g": jnp.ones((model_dim,), jnp.float32),
            "ln2_b": jnp.zeros((model_dim,), jnp.float32),
        })
    return params


# ---------------------------------------------------------------------------
# Pure-JAX reference (for sanity check)
# ---------------------------------------------------------------------------
def reference_forward(params, inputs, inputs_len, *, num_heads):
    B, L = inputs.shape
    Dm = params["embed"].shape[1]
    H = num_heads
    dph = Dm // H
    eps = 1e-5

    def ln(y, g, b):
        m = y.mean(-1, keepdims=True)
        v = ((y - m) ** 2).mean(-1, keepdims=True)
        return (y - m) / jnp.sqrt(v + eps) * g + b

    x = params["embed"][inputs]
    positions = jnp.arange(1, L + 1, dtype=jnp.int32)[None, :]
    pos_idx = jnp.where(positions <= inputs_len[:, None], positions, 0)
    x = x + params["pos_table"][pos_idx]

    key_bias = jnp.where(inputs == 0, NEG_BIG, jnp.float32(0.0))
    bias_bh = jnp.tile(key_bias, (H, 1))[:, None, :]              # [B*H, 1, L]
    scale = float((dph // H) ** -0.5)

    attns = []
    for layer in params["layers"]:
        res = x
        q = x @ layer["wq"] + layer["bq"]
        k = x @ layer["wk"] + layer["bk"]
        v = x @ layer["wv"] + layer["bv"]
        qh = q.reshape(B * H, L, dph)
        kh = k.reshape(B * H, L, dph)
        vh = v.reshape(B * H, L, dph)
        s = jnp.einsum("bqd,bkd->bqk", qh, kh) * scale + bias_bh
        p = jax.nn.softmax(s, axis=-1)
        attns.append(p)
        ctx = jnp.einsum("bqk,bkd->bqd", p, vh).reshape(B, L, Dm)
        o = ln(ctx @ layer["wf"] + layer["bf"] + res, layer["ln1_g"], layer["ln1_b"])
        h = jnp.maximum(o @ layer["w1"] + layer["b1"], 0.0)
        f = h @ layer["w2"] + layer["b2"] + o
        x = ln(f, layer["ln2_g"], layer["ln2_b"])
    flat = x.reshape(B, L * Dm)
    out = jax.nn.sigmoid(flat @ params["dense_w"] + params["dense_b"])
    return out, attns


# ---------------------------------------------------------------------------
if __name__ == "__main__":
    B, L = 2, 16
    VOCAB, MODEL_DIM, NUM_HEADS, FFN_DIM, NUM_LAYERS = 32, 128, 8, 256, 2

    root = jax.random.PRNGKey(0)
    k_param, k_tok = jax.random.split(root)

    params = init_params(k_param, vocab_size=VOCAB, max_seq_len=L,
                         model_dim=MODEL_DIM, ffn_dim=FFN_DIM,
                         num_layers=NUM_LAYERS)

    lengths = jnp.array([L, L - 5], dtype=jnp.int32)             # batch 1 is padded
    tok = jax.random.randint(k_tok, (B, L), 1, VOCAB, dtype=jnp.int32)
    pos0 = jnp.arange(L, dtype=jnp.int32)[None, :]
    inputs = jnp.where(pos0 < lengths[:, None], tok, 0)          # 0 == padding id

    ref_out, ref_attns = reference_forward(params, inputs, lengths,
                                           num_heads=NUM_HEADS)

    # --- strict correctness check: f32 compute path vs pure-JAX reference --
    fwd_f32 = jax.jit(functools.partial(encoder_forward, num_heads=NUM_HEADS,
                                        compute_dtype=jnp.float32,
                                        collect_attn=True))
    out32, attns32 = fwd_f32(params, inputs, lengths)
    out32 = jax.block_until_ready(out32)
    attns32 = [jax.block_until_ready(a) for a in attns32]

    assert out32.shape == (B, 1)
    assert len(attns32) == NUM_LAYERS
    for a, ra in zip(attns32, ref_attns):
        assert a.shape == (B * NUM_HEADS, L, L)
        assert jnp.allclose(a, ra, atol=1e-3, rtol=1e-3)
    assert jnp.allclose(out32, ref_out, atol=1e-3, rtol=1e-3)

    # --- performance path: bf16 matmul operands (f32 accum/LN), no attention
    #     prob writeback.  Loose tolerance only accounts for bf16 rounding.
    fwd_bf16 = jax.jit(functools.partial(encoder_forward, num_heads=NUM_HEADS,
                                         compute_dtype=jnp.bfloat16,
                                         collect_attn=False))
    out16, attns16 = fwd_bf16(params, inputs, lengths)
    out16 = jax.block_until_ready(out16)

    assert out16.shape == (B, 1)
    assert attns16 == []
    assert bool(jnp.all(jnp.isfinite(out16)))
    assert jnp.allclose(out16, ref_out, atol=0.15)

    print("KERNEL_OK")
</pallas_src>

<mosaic_0001>
module attributes {stable_mosaic.version = 11 : i64} {
  func.func @_qkv_kernel(%arg0: i32, %arg1: memref<32x128xf32, #tpu.memory_space<vmem>>, %arg2: memref<128x384xf32, #tpu.memory_space<vmem>>, %arg3: memref<1x384xf32, #tpu.memory_space<vmem>>, %arg4: memref<32x128xf32, #tpu.memory_space<vmem>>, %arg5: memref<32x128xf32, #tpu.memory_space<vmem>>, %arg6: memref<32x128xf32, #tpu.memory_space<vmem>>) attributes {dimension_semantics = [#tpu.dimension_semantics<parallel>], iteration_bounds = array<i64: 1>, scalar_prefetch = 0 : i64, scratch_operands = 0 : i64, tpu.core_type = #tpu.core_type<tc>, window_params = [{transform_indices = @transform_0, window_bounds = array<i64: 32, 128>}, {pipeline_mode = #tpu.pipeline_mode<synchronous>, transform_indices = @transform_1, window_bounds = array<i64: 128, 384>}, {pipeline_mode = #tpu.pipeline_mode<synchronous>, transform_indices = @transform_2, window_bounds = array<i64: 1, 384>}, {transform_indices = @transform_3, window_bounds = array<i64: 32, 128>}, {transform_indices = @transform_4, window_bounds = array<i64: 32, 128>}, {transform_indices = @transform_5, window_bounds = array<i64: 32, 128>}]} {
    %c0 = arith.constant 0 : index
    %c0_0 = arith.constant 0 : index
    %0 = vector.load %arg1[%c0, %c0_0] : memref<32x128xf32, #tpu.memory_space<vmem>>, vector<32x128xf32>
    %c0_1 = arith.constant 0 : index
    %c0_2 = arith.constant 0 : index
    %1 = vector.load %arg2[%c0_1, %c0_2] : memref<128x384xf32, #tpu.memory_space<vmem>>, vector<128x384xf32>
    %cst = arith.constant dense<0.000000e+00> : vector<32x384xf32>
    %2 = tpu.matmul %0, %1, %cst {dimension_numbers = #tpu.dot_dimension_numbers<[1], [0], [0], [1], [0, 0, 1, 1], [], []>} : vector<32x128xf32>, vector<128x384xf32>, vector<32x384xf32> -> vector<32x384xf32>
    %c0_3 = arith.constant 0 : index
    %c0_4 = arith.constant 0 : index
    %3 = vector.load %arg3[%c0_3, %c0_4] : memref<1x384xf32, #tpu.memory_space<vmem>>, vector<1x384xf32>
    %4 = vector.broadcast %3 : vector<1x384xf32> to vector<32x384xf32>
    %5 = arith.addf %2, %4 : vector<32x384xf32>
    %6 = vector.extract_strided_slice %5 {offsets = [0, 0], sizes = [32, 128], strides = [1, 1]} : vector<32x384xf32> to vector<32x128xf32>
    %c0_5 = arith.constant 0 : index
    %c0_6 = arith.constant 0 : index
    %7 = vector.load %arg4[%c0_5, %c0_6] : memref<32x128xf32, #tpu.memory_space<vmem>>, vector<32x128xf32>
    tpu.vector_store %arg4[%c0_5, %c0_6], %6 {strides = array<i32>} : memref<32x128xf32, #tpu.memory_space<vmem>>, vector<32x128xf32>,
    %8 = vector.extract_strided_slice %5 {offsets = [0, 128], sizes = [32, 128], strides = [1, 1]} : vector<32x384xf32> to vector<32x128xf32>
    %c0_7 = arith.constant 0 : index
    %c0_8 = arith.constant 0 : index
    %9 = vector.load %arg5[%c0_7, %c0_8] : memref<32x128xf32, #tpu.memory_space<vmem>>, vector<32x128xf32>
    tpu.vector_store %arg5[%c0_7, %c0_8], %8 {strides = array<i32>} : memref<32x128xf32, #tpu.memory_space<vmem>>, vector<32x128xf32>,
    %10 = vector.extract_strided_slice %5 {offsets = [0, 256], sizes = [32, 128], strides = [1, 1]} : vector<32x384xf32> to vector<32x128xf32>
    %c0_9 = arith.constant 0 : index
    %c0_10 = arith.constant 0 : index
    %11 = vector.load %arg6[%c0_9, %c0_10] : memref<32x128xf32, #tpu.memory_space<vmem>>, vector<32x128xf32>
    tpu.vector_store %arg6[%c0_9, %c0_10], %10 {strides = array<i32>} : memref<32x128xf32, #tpu.memory_space<vmem>>, vector<32x128xf32>,
    return
  }
  func.func @transform_0(%arg0: i32) -> (i32, i32) {
    %c0_i32 = arith.constant 0 : i32
    %c0_i32_0 = arith.constant 0 : i32
    return %arg0, %c0_i32 : i32, i32
  }
  func.func @transform_1(%arg0: i32) -> (i32, i32) {
    %c0_i32 = arith.constant 0 : i32
    %c0_i32_0 = arith.constant 0 : i32
    %c0_i32_1 = arith.constant 0 : i32
    return %c0_i32, %c0_i32_0 : i32, i32
  }
  func.func @transform_2(%arg0: i32) -> (i32, i32) {
    %c0_i32 = arith.constant 0 : i32
    %c0_i32_0 = arith.constant 0 : i32
    %c0_i32_1 = arith.constant 0 : i32
    return %c0_i32, %c0_i32_0 : i32, i32
  }
  func.func @transform_3(%arg0: i32) -> (i32, i32) {
    %c0_i32 = arith.constant 0 : i32
    %c0_i32_0 = arith.constant 0 : i32
    return %arg0, %c0_i32 : i32, i32
  }
  func.func @transform_4(%arg0: i32) -> (i32, i32) {
    %c0_i32 = arith.constant 0 : i32
    %c0_i32_0 = arith.constant 0 : i32
    return %arg0, %c0_i32 : i32, i32
  }
  func.func @transform_5(%arg0: i32) -> (i32, i32) {
    %c0_i32 = arith.constant 0 : i32
    %c0_i32_0 = arith.constant 0 : i32
    return %arg0, %c0_i32 : i32, i32
  }
}

module attributes {stable_mosaic.version = 11 : i64} {
  func.func @_tail_kernel(%arg0: i32, %arg1: memref<32x128xf32, #tpu.memory_space<vmem>>, %arg2: memref<32x128xf32, #tpu.memory_space<vmem>>, %arg3: memref<128x128xf32, #tpu.memory_space<vmem>>, %arg4: memref<1x128xf32, #tpu.memory_space<vmem>>, %arg5: memref<1x128xf32, #tpu.memory_space<vmem>>, %arg6: memref<1x128xf32, #tpu.memory_space<vmem>>, %arg7: memref<128x256xf32, #tpu.memory_space<vmem>>, %arg8: memref<1x256xf32, #tpu.memory_space<vmem>>, %arg9: memref<256x128xf32, #tpu.memory_space<vmem>>, %arg10: memref<1x128xf32, #tpu.memory_space<vmem>>, %arg11: memref<1x128xf32, #tpu.memory_space<vmem>>, %arg12: memref<1x128xf32, #tpu.memory_space<vmem>>, %arg13: memref<32x128xf32, #tpu.memory_space<vmem>>) attributes {dimension_semantics = [#tpu.dimension_semantics<parallel>], iteration_bounds = array<i64: 1>, scalar_prefetch = 0 : i64, scratch_operands = 0 : i64, tpu.core_type = #tpu.core_type<tc>, window_params = [{transform_indices = @transform_0, window_bounds = array<i64: 32, 128>}, {transform_indices = @transform_1, window_bounds = array<i64: 32, 128>}, {pipeline_mode = #tpu.pipeline_mode<synchronous>, transform_indices = @transform_2, window_bounds = array<i64: 128, 128>}, {pipeline_mode = #tpu.pipeline_mode<synchronous>, transform_indices = @transform_3, window_bounds = array<i64: 1, 128>}, {pipeline_mode = #tpu.pipeline_mode<synchronous>, transform_indices = @transform_4, window_bounds = array<i64: 1, 128>}, {pipeline_mode = #tpu.pipeline_mode<synchronous>, transform_indices = @transform_5, window_bounds = array<i64: 1, 128>}, {pipeline_mode = #tpu.pipeline_mode<synchronous>, transform_indices = @transform_6, window_bounds = array<i64: 128, 256>}, {pipeline_mode = #tpu.pipeline_mode<synchronous>, transform_indices = @transform_7, window_bounds = array<i64: 1, 256>}, {pipeline_mode = #tpu.pipeline_mode<synchronous>, transform_indices = @transform_8, window_bounds = array<i64: 256, 128>}, {pipeline_mode = #tpu.pipeline_mode<synchronous>, transform_indices = @transform_9, window_bounds = array<i64: 1, 128>}, {pipeline_mode = #tpu.pipeline_mode<synchronous>, transform_indices = @transform_10, window_bounds = array<i64: 1, 128>}, {pipeline_mode = #tpu.pipeline_mode<synchronous>, transform_indices = @transform_11, window_bounds = array<i64: 1, 128>}, {transform_indices = @transform_12, window_bounds = array<i64: 32, 128>}]} {
    %c0 = arith.constant 0 : index
    %c0_0 = arith.constant 0 : index
    %0 = vector.load %arg1[%c0, %c0_0] : memref<32x128xf32, #tpu.memory_space<vmem>>, vector<32x128xf32>
    %c0_1 = arith.constant 0 : index
    %c0_2 = arith.constant 0 : index
    %1 = vector.load %arg3[%c0_1, %c0_2] : memref<128x128xf32, #tpu.memory_space<vmem>>, vector<128x128xf32>
    %cst = arith.constant dense<0.000000e+00> : vector<32x128xf32>
    %2 = tpu.matmul %0, %1, %cst {dimension_numbers = #tpu.dot_dimension_numbers<[1], [0], [0], [1], [0, 0, 1, 1], [], []>} : vector<32x128xf32>, vector<128x128xf32>, vector<32x128xf32> -> vector<32x128xf32>
    %c0_3 = arith.constant 0 : index
    %c0_4 = arith.constant 0 : index
    %3 = vector.load %arg4[%c0_3, %c0_4] : memref<1x128xf32, #tpu.memory_space<vmem>>, vector<1x128xf32>
    %4 = vector.broadcast %3 : vector<1x128xf32> to vector<32x128xf32>
    %5 = arith.addf %2, %4 : vector<32x128xf32>
    %c0_5 = arith.constant 0 : index
    %c0_6 = arith.constant 0 : index
    %6 = vector.load %arg2[%c0_5, %c0_6] : memref<32x128xf32, #tpu.memory_space<vmem>>, vector<32x128xf32>
    %7 = arith.addf %5, %6 : vector<32x128xf32>
    %cst_7 = arith.constant dense<0.000000e+00> : vector<32xf32>
    %8 = vector.multi_reduction <add>, %7, %cst_7 [1] : vector<32x128xf32> to vector<32xf32>
    %9 = vector.shape_cast %8 : vector<32xf32> to vector<32x1xf32>
    %cst_8 = arith.constant 1.280000e+02 : f32
    %10 = vector.broadcast %cst_8 : f32 to vector<32x1xf32>
    %11 = arith.divf %9, %10 : vector<32x1xf32>
    %12 = vector.broadcast %11 : vector<32x1xf32> to vector<32x128xf32>
    %13 = arith.subf %7, %12 : vector<32x128xf32>
    %14 = arith.mulf %13, %13 : vector<32x128xf32>
    %cst_9 = arith.constant dense<0.000000e+00> : vector<32xf32>
    %15 = vector.multi_reduction <add>, %14, %cst_9 [1] : vector<32x128xf32> to vector<32xf32>
    %16 = vector.shape_cast %15 : vector<32xf32> to vector<32x1xf32>
    %cst_10 = arith.constant 1.280000e+02 : f32
    %17 = vector.broadcast %cst_10 : f32 to vector<32x1xf32>
    %18 = arith.divf %16, %17 : vector<32x1xf32>
    %19 = vector.broadcast %11 : vector<32x1xf32> to vector<32x128xf32>
    %20 = arith.subf %7, %19 : vector<32x128xf32>
    %cst_11 = arith.constant 9.99999974E-6 : f32
    %21 = vector.broadcast %cst_11 : f32 to vector<32x1xf32>
    %22 = arith.addf %18, %21 : vector<32x1xf32>
    %23 = math.rsqrt %22 : vector<32x1xf32>
    %24 = vector.broadcast %23 : vector<32x1xf32> to vector<32x128xf32>
    %25 = arith.mulf %20, %24 : vector<32x128xf32>
    %c0_12 = arith.constant 0 : index
    %c0_13 = arith.constant 0 : index
    %26 = vector.load %arg5[%c0_12, %c0_13] : memref<1x128xf32, #tpu.memory_space<vmem>>, vector<1x128xf32>
    %27 = vector.broadcast %26 : vector<1x128xf32> to vector<32x128xf32>
    %28 = arith.mulf %25, %27 : vector<32x128xf32>
    %c0_14 = arith.constant 0 : index
    %c0_15 = arith.constant 0 : index
    %29 = vector.load %arg6[%c0_14, %c0_15] : memref<1x128xf32, #tpu.memory_space<vmem>>, vector<1x128xf32>
    %30 = vector.broadcast %29 : vector<1x128xf32> to vector<32x128xf32>
    %31 = arith.addf %28, %30 : vector<32x128xf32>
    %c0_16 = arith.constant 0 : index
    %c0_17 = arith.constant 0 : index
    %32 = vector.load %arg7[%c0_16, %c0_17] : memref<128x256xf32, #tpu.memory_space<vmem>>, vector<128x256xf32>
    %cst_18 = arith.constant dense<0.000000e+00> : vector<32x256xf32>
    %33 = tpu.matmul %31, %32, %cst_18 {dimension_numbers = #tpu.dot_dimension_numbers<[1], [0], [0], [1], [0, 0, 1, 1], [], []>} : vector<32x128xf32>, vector<128x256xf32>, vector<32x256xf32> -> vector<32x256xf32>
    %c0_19 = arith.constant 0 : index
    %c0_20 = arith.constant 0 : index
    %34 = vector.load %arg8[%c0_19, %c0_20] : memref<1x256xf32, #tpu.memory_space<vmem>>, vector<1x256xf32>
    %35 = vector.broadcast %34 : vector<1x256xf32> to vector<32x256xf32>
    %36 = arith.addf %33, %35 : vector<32x256xf32>
    %cst_21 = arith.constant 0.000000e+00 : f32
    %37 = vector.broadcast %cst_21 : f32 to vector<32x256xf32>
    %38 = arith.maximumf %36, %37 : vector<32x256xf32>
    %c0_22 = arith.constant 0 : index
    %c0_23 = arith.constant 0 : index
    %39 = vector.load %arg9[%c0_22, %c0_23] : memref<256x128xf32, #tpu.memory_space<vmem>>, vector<256x128xf32>
    %cst_24 = arith.constant dense<0.000000e+00> : vector<32x128xf32>
    %40 = tpu.matmul %38, %39, %cst_24 {dimension_numbers = #tpu.dot_dimension_numbers<[1], [0], [0], [1], [0, 0, 1, 1], [], []>} : vector<32x256xf32>, vector<256x128xf32>, vector<32x128xf32> -> vector<32x128xf32>
    %c0_25 = arith.constant 0 : index
    %c0_26 = arith.constant 0 : index
    %41 = vector.load %arg10[%c0_25, %c0_26] : memref<1x128xf32, #tpu.memory_space<vmem>>, vector<1x128xf32>
    %42 = vector.broadcast %41 : vector<1x128xf32> to vector<32x128xf32>
    %43 = arith.addf %40, %42 : vector<32x128xf32>
    %44 = arith.addf %43, %31 : vector<32x128xf32>
    %cst_27 = arith.constant dense<0.000000e+00> : vector<32xf32>
    %45 = vector.multi_reduction <add>, %44, %cst_27 [1] : vector<32x128xf32> to vector<32xf32>
    %46 = vector.shape_cast %45 : vector<32xf32> to vector<32x1xf32>
    %cst_28 = arith.constant 1.280000e+02 : f32
    %47 = vector.broadcast %cst_28 : f32 to vector<32x1xf32>
    %48 = arith.divf %46, %47 : vector<32x1xf32>
    %49 = vector.broadcast %48 : vector<32x1xf32> to vector<32x128xf32>
    %50 = arith.subf %44, %49 : vector<32x128xf32>
    %51 = arith.mulf %50, %50 : vector<32x128xf32>
    %cst_29 = arith.constant dense<0.000000e+00> : vector<32xf32>
    %52 = vector.multi_reduction <add>, %51, %cst_29 [1] : vector<32x128xf32> to vector<32xf32>
    %53 = vector.shape_cast %52 : vector<32xf32> to vector<32x1xf32>
    %cst_30 = arith.constant 1.280000e+02 : f32
    %54 = vector.broadcast %cst_30 : f32 to vector<32x1xf32>
    %55 = arith.divf %53, %54 : vector<32x1xf32>
    %56 = vector.broadcast %48 : vector<32x1xf32> to vector<32x128xf32>
    %57 = arith.subf %44, %56 : vector<32x128xf32>
    %cst_31 = arith.constant 9.99999974E-6 : f32
    %58 = vector.broadcast %cst_31 : f32 to vector<32x1xf32>
    %59 = arith.addf %55, %58 : vector<32x1xf32>
    %60 = math.rsqrt %59 : vector<32x1xf32>
    %61 = vector.broadcast %60 : vector<32x1xf32> to vector<32x128xf32>
    %62 = arith.mulf %57, %61 : vector<32x128xf32>
    %c0_32 = arith.constant 0 : index
    %c0_33 = arith.constant 0 : index
    %63 = vector.load %arg11[%c0_32, %c0_33] : memref<1x128xf32, #tpu.memory_space<vmem>>, vector<1x128xf32>
    %64 = vector.broadcast %63 : vector<1x128xf32> to vector<32x128xf32>
    %65 = arith.mulf %62, %64 : vector<32x128xf32>
    %c0_34 = arith.constant 0 : index
    %c0_35 = arith.constant 0 : index
    %66 = vector.load %arg12[%c0_34, %c0_35] : memref<1x128xf32, #tpu.memory_space<vmem>>, vector<1x128xf32>
    %67 = vector.broadcast %66 : vector<1x128xf32> to vector<32x128xf32>
    %68 = arith.addf %65, %67 : vector<32x128xf32>
    %c0_36 = arith.constant 0 : index
    %c0_37 = arith.constant 0 : index
    %69 = vector.load %arg13[%c0_36, %c0_37] : memref<32x128xf32, #tpu.memory_space<vmem>>, vector<32x128xf32>
    tpu.vector_store %arg13[%c0_36, %c0_37], %68 {strides = array<i32>} : memref<32x128xf32, #tpu.memory_space<vmem>>, vector<32x128xf32>,
    return
  }
  func.func @transform_0(%arg0: i32) -> (i32, i32) {
    %c0_i32 = arith.constant 0 : i32
    %c0_i32_0 = arith.constant 0 : i32
    return %arg0, %c0_i32 : i32, i32
  }
  func.func @transform_1(%arg0: i32) -> (i32, i32) {
    %c0_i32 = arith.constant 0 : i32
    %c0_i32_0 = arith.constant 0 : i32
    return %arg0, %c0_i32 : i32, i32
  }
  func.func @transform_2(%arg0: i32) -> (i32, i32) {
    %c0_i32 = arith.constant 0 : i32
    %c0_i32_0 = arith.constant 0 : i32
    %c0_i32_1 = arith.constant 0 : i32
    return %c0_i32, %c0_i32_0 : i32, i32
  }
  func.func @transform_3(%arg0: i32) -> (i32, i32) {
    %c0_i32 = arith.constant 0 : i32
    %c0_i32_0 = arith.constant 0 : i32
    %c0_i32_1 = arith.constant 0 : i32
    return %c0_i32, %c0_i32_0 : i32, i32
  }
  func.func @transform_4(%arg0: i32) -> (i32, i32) {
    %c0_i32 = arith.constant 0 : i32
    %c0_i32_0 = arith.constant 0 : i32
    %c0_i32_1 = arith.constant 0 : i32
    return %c0_i32, %c0_i32_0 : i32, i32
  }
  func.func @transform_5(%arg0: i32) -> (i32, i32) {
    %c0_i32 = arith.constant 0 : i32
    %c0_i32_0 = arith.constant 0 : i32
    %c0_i32_1 = arith.constant 0 : i32
    return %c0_i32, %c0_i32_0 : i32, i32
  }
  func.func @transform_6(%arg0: i32) -> (i32, i32) {
    %c0_i32 = arith.constant 0 : i32
    %c0_i32_0 = arith.constant 0 : i32
    %c0_i32_1 = arith.constant 0 : i32
    return %c0_i32, %c0_i32_0 : i32, i32
  }
  func.func @transform_7(%arg0: i32) -> (i32, i32) {
    %c0_i32 = arith.constant 0 : i32
    %c0_i32_0 = arith.constant 0 : i32
    %c0_i32_1 = arith.constant 0 : i32
    return %c0_i32, %c0_i32_0 : i32, i32
  }
  func.func @transform_8(%arg0: i32) -> (i32, i32) {
    %c0_i32 = arith.constant 0 : i32
    %c0_i32_0 = arith.constant 0 : i32
    %c0_i32_1 = arith.constant 0 : i32
    return %c0_i32, %c0_i32_0 : i32, i32
  }
  func.func @transform_9(%arg0: i32) -> (i32, i32) {
    %c0_i32 = arith.constant 0 : i32
    %c0_i32_0 = arith.constant 0 : i32
    %c0_i32_1 = arith.constant 0 : i32
    return %c0_i32, %c0_i32_0 : i32, i32
  }
  func.func @transform_10(%arg0: i32) -> (i32, i32) {
    %c0_i32 = arith.constant 0 : i32
    %c0_i32_0 = arith.constant 0 : i32
    %c0_i32_1 = arith.constant 0 : i32
    return %c0_i32, %c0_i32_0 : i32, i32
  }
  func.func @transform_11(%arg0: i32) -> (i32, i32) {
    %c0_i32 = arith.constant 0 : i32
    %c0_i32_0 = arith.constant 0 : i32
    %c0_i32_1 = arith.constant 0 : i32
    return %c0_i32, %c0_i32_0 : i32, i32
  }
  func.func @transform_12(%arg0: i32) -> (i32, i32) {
    %c0_i32 = arith.constant 0 : i32
    %c0_i32_0 = arith.constant 0 : i32
    return %arg0, %c0_i32 : i32, i32
  }
}

module attributes {stable_mosaic.version = 11 : i64} {
  func.func @_attention_kernel(%arg0: i32, %arg1: memref<8x1x16xf32, #tpu.memory_space<vmem>>, %arg2: memref<8x16x16xf32, #tpu.memory_space<vmem>>, %arg3: memref<8x16x16xf32, #tpu.memory_space<vmem>>, %arg4: memref<8x16x16xf32, #tpu.memory_space<vmem>>, %arg5: memref<8x16x16xf32, #tpu.memory_space<vmem>>, %arg6: memref<8x16x16xf32, #tpu.memory_space<vmem>>) attributes {dimension_semantics = [#tpu.dimension_semantics<parallel>], iteration_bounds = array<i64: 2>, scalar_prefetch = 0 : i64, scratch_operands = 0 : i64, tpu.core_type = #tpu.core_type<tc>, window_params = [{transform_indices = @transform_0, window_bounds = array<i64: 8, 1, 16>}, {transform_indices = @transform_1, window_bounds = array<i64: 8, 16, 16>}, {transform_indices = @transform_2, window_bounds = array<i64: 8, 16, 16>}, {transform_indices = @transform_3, window_bounds = array<i64: 8, 16, 16>}, {transform_indices = @transform_4, window_bounds = array<i64: 8, 16, 16>}, {transform_indices = @transform_5, window_bounds = array<i64: 8, 16, 16>}]} {
    %c0 = arith.constant 0 : index
    %c0_0 = arith.constant 0 : index
    %c0_1 = arith.constant 0 : index
    %0 = vector.load %arg2[%c0, %c0_0, %c0_1] : memref<8x16x16xf32, #tpu.memory_space<vmem>>, vector<8x16x16xf32>
    %c0_2 = arith.constant 0 : index
    %c0_3 = arith.constant 0 : index
    %c0_4 = arith.constant 0 : index
    %1 = vector.load %arg3[%c0_2, %c0_3, %c0_4] : memref<8x16x16xf32, #tpu.memory_space<vmem>>, vector<8x16x16xf32>
    %c0_5 = arith.constant 0 : index
    %c0_6 = arith.constant 0 : index
    %c0_7 = arith.constant 0 : index
    %2 = vector.load %arg4[%c0_5, %c0_6, %c0_7] : memref<8x16x16xf32, #tpu.memory_space<vmem>>, vector<8x16x16xf32>
    "tpu.trace_start"() <{level = 10 : i32, message = "hqd,hkd->hqk"}> : () -> ()
    %cst = arith.constant dense<0.000000e+00> : vector<8x16x16xf32>
    %3 = tpu.matmul %0, %1, %cst {dimension_numbers = #tpu.dot_dimension_numbers<[2], [2], [1], [1], [0, 0, 0, 1, 1, 1], [0], [0]>} : vector<8x16x16xf32>, vector<8x16x16xf32>, vector<8x16x16xf32> -> vector<8x16x16xf32>
    "tpu.trace_stop"() : () -> ()
    %cst_8 = arith.constant 0.707106769 : f32
    %4 = vector.broadcast %cst_8 : f32 to vector<8x16x16xf32>
    %5 = arith.mulf %3, %4 : vector<8x16x16xf32>
    %c0_9 = arith.constant 0 : index
    %c0_10 = arith.constant 0 : index
    %c0_11 = arith.constant 0 : index
    %6 = vector.load %arg1[%c0_9, %c0_10, %c0_11] : memref<8x1x16xf32, #tpu.memory_space<vmem>>, vector<8x1x16xf32>
    %7 = vector.broadcast %6 : vector<8x1x16xf32> to vector<8x16x16xf32>
    %8 = arith.addf %5, %7 : vector<8x16x16xf32>
    %cst_12 = arith.constant dense<0xFF800000> : vector<8x16xf32>
    %9 = vector.multi_reduction <maximumf>, %8, %cst_12 [2] : vector<8x16x16xf32> to vector<8x16xf32>
    %10 = vector.shape_cast %9 : vector<8x16xf32> to vector<8x16x1xf32>
    %11 = vector.broadcast %10 : vector<8x16x1xf32> to vector<8x16x16xf32>
    %12 = arith.subf %8, %11 : vector<8x16x16xf32>
    %13 = math.exp %12 : vector<8x16x16xf32>
    %cst_13 = arith.constant dense<0.000000e+00> : vector<8x16xf32>
    %14 = vector.multi_reduction <add>, %13, %cst_13 [2] : vector<8x16x16xf32> to vector<8x16xf32>
    %15 = vector.shape_cast %14 : vector<8x16xf32> to vector<8x16x1xf32>
    %16 = vector.broadcast %15 : vector<8x16x1xf32> to vector<8x16x16xf32>
    %17 = arith.divf %13, %16 : vector<8x16x16xf32>
    "tpu.trace_start"() <{level = 10 : i32, message = "hqk,hkd->hqd"}> : () -> ()
    %cst_14 = arith.constant dense<0.000000e+00> : vector<8x16x16xf32>
    %18 = tpu.matmul %17, %2, %cst_14 {dimension_numbers = #tpu.dot_dimension_numbers<[2], [1], [1], [2], [0, 0, 0, 1, 1, 2], [0], [0]>} : vector<8x16x16xf32>, vector<8x16x16xf32>, vector<8x16x16xf32> -> vector<8x16x16xf32>
    "tpu.trace_stop"() : () -> ()
    %c0_15 = arith.constant 0 : index
    %c0_16 = arith.constant 0 : index
    %c0_17 = arith.constant 0 : index
    %19 = vector.load %arg5[%c0_15, %c0_16, %c0_17] : memref<8x16x16xf32, #tpu.memory_space<vmem>>, vector<8x16x16xf32>
    tpu.vector_store %arg5[%c0_15, %c0_16, %c0_17], %18 {strides = array<i32>} : memref<8x16x16xf32, #tpu.memory_space<vmem>>, vector<8x16x16xf32>,
    %c0_18 = arith.constant 0 : index
    %c0_19 = arith.constant 0 : index
    %c0_20 = arith.constant 0 : index
    %20 = vector.load %arg6[%c0_18, %c0_19, %c0_20] : memref<8x16x16xf32, #tpu.memory_space<vmem>>, vector<8x16x16xf32>
    tpu.vector_store %arg6[%c0_18, %c0_19, %c0_20], %17 {strides = array<i32>} : memref<8x16x16xf32, #tpu.memory_space<vmem>>, vector<8x16x16xf32>,
    return
  }
  func.func @transform_0(%arg0: i32) -> (i32, i32, i32) {
    %c0_i32 = arith.constant 0 : i32
    %c0_i32_0 = arith.constant 0 : i32
    %c0_i32_1 = arith.constant 0 : i32
    return %arg0, %c0_i32, %c0_i32_0 : i32, i32, i32
  }
  func.func @transform_1(%arg0: i32) -> (i32, i32, i32) {
    %c0_i32 = arith.constant 0 : i32
    %c0_i32_0 = arith.constant 0 : i32
    %c0_i32_1 = arith.constant 0 : i32
    return %arg0, %c0_i32, %c0_i32_0 : i32, i32, i32
  }
  func.func @transform_2(%arg0: i32) -> (i32, i32, i32) {
    %c0_i32 = arith.constant 0 : i32
    %c0_i32_0 = arith.constant 0 : i32
    %c0_i32_1 = arith.constant 0 : i32
    return %arg0, %c0_i32, %c0_i32_0 : i32, i32, i32
  }
  func.func @transform_3(%arg0: i32) -> (i32, i32, i32) {
    %c0_i32 = arith.constant 0 : i32
    %c0_i32_0 = arith.constant 0 : i32
    %c0_i32_1 = arith.constant 0 : i32
    return %arg0, %c0_i32, %c0_i32_0 : i32, i32, i32
  }
  func.func @transform_4(%arg0: i32) -> (i32, i32, i32) {
    %c0_i32 = arith.constant 0 : i32
    %c0_i32_0 = arith.constant 0 : i32
    %c0_i32_1 = arith.constant 0 : i32
    return %arg0, %c0_i32, %c0_i32_0 : i32, i32, i32
  }
  func.func @transform_5(%arg0: i32) -> (i32, i32, i32) {
    %c0_i32 = arith.constant 0 : i32
    %c0_i32_0 = arith.constant 0 : i32
    %c0_i32_1 = arith.constant 0 : i32
    return %arg0, %c0_i32, %c0_i32_0 : i32, i32, i32
  }
}

module attributes {stable_mosaic.version = 11 : i64} {
  func.func @_head_kernel(%arg0: i32, %arg1: memref<2x2048xf32, #tpu.memory_space<vmem>>, %arg2: memref<2048x1xf32, #tpu.memory_space<vmem>>, %arg3: memref<1x1xf32, #tpu.memory_space<vmem>>, %arg4: memref<2x1xf32, #tpu.memory_space<vmem>>) attributes {dimension_semantics = [#tpu.dimension_semantics<parallel>], iteration_bounds = array<i64: 1>, scalar_prefetch = 0 : i64, scratch_operands = 0 : i64, tpu.core_type = #tpu.core_type<tc>, window_params = [{transform_indices = @transform_0, window_bounds = array<i64: 2, 2048>}, {pipeline_mode = #tpu.pipeline_mode<synchronous>, transform_indices = @transform_1, window_bounds = array<i64: 2048, 1>}, {pipeline_mode = #tpu.pipeline_mode<synchronous>, transform_indices = @transform_2, window_bounds = array<i64: 1, 1>}, {transform_indices = @transform_3, window_bounds = array<i64: 2, 1>}]} {
    %c0 = arith.constant 0 : index
    %c0_0 = arith.constant 0 : index
    %0 = vector.load %arg1[%c0, %c0_0] : memref<2x2048xf32, #tpu.memory_space<vmem>>, vector<2x2048xf32>
    %c0_1 = arith.constant 0 : index
    %c0_2 = arith.constant 0 : index
    %1 = vector.load %arg2[%c0_1, %c0_2] : memref<2048x1xf32, #tpu.memory_space<vmem>>, vector<2048x1xf32>
    %cst = arith.constant dense<0.000000e+00> : vector<2x1xf32>
    %2 = tpu.matmul %0, %1, %cst {dimension_numbers = #tpu.dot_dimension_numbers<[1], [0], [0], [1], [0, 0, 1, 1], [], []>} : vector<2x2048xf32>, vector<2048x1xf32>, vector<2x1xf32> -> vector<2x1xf32>
    %c0_3 = arith.constant 0 : index
    %c0_4 = arith.constant 0 : index
    %3 = vector.load %arg3[%c0_3, %c0_4] : memref<1x1xf32, #tpu.memory_space<vmem>>, vector<1x1xf32>
    %4 = vector.broadcast %3 : vector<1x1xf32> to vector<2x1xf32>
    %5 = arith.addf %2, %4 : vector<2x1xf32>
    %cst_5 = arith.constant 0.000000e+00 : f32
    %6 = vector.broadcast %cst_5 : f32 to vector<2x1xf32>
    %7 = arith.subf %6, %5 : vector<2x1xf32>
    %8 = math.exp %7 : vector<2x1xf32>
    %cst_6 = arith.constant 1.000000e+00 : f32
    %9 = vector.broadcast %cst_6 : f32 to vector<2x1xf32>
    %10 = arith.addf %9, %8 : vector<2x1xf32>
    %cst_7 = arith.constant 1.000000e+00 : f32
    %11 = vector.broadcast %cst_7 : f32 to vector<2x1xf32>
    %12 = arith.divf %11, %10 : vector<2x1xf32>
    %c0_8 = arith.constant 0 : index
    %c0_9 = arith.constant 0 : index
    %13 = vector.load %arg4[%c0_8, %c0_9] : memref<2x1xf32, #tpu.memory_space<vmem>>, vector<2x1xf32>
    tpu.vector_store %arg4[%c0_8, %c0_9], %12 {strides = array<i32>} : memref<2x1xf32, #tpu.memory_space<vmem>>, vector<2x1xf32>,
    return
  }
  func.func @transform_0(%arg0: i32) -> (i32, i32) {
    %c0_i32 = arith.constant 0 : i32
    %c0_i32_0 = arith.constant 0 : i32
    return %arg0, %c0_i32 : i32, i32
  }
  func.func @transform_1(%arg0: i32) -> (i32, i32) {
    %c0_i32 = arith.constant 0 : i32
    %c0_i32_0 = arith.constant 0 : i32
    %c0_i32_1 = arith.constant 0 : i32
    return %c0_i32, %c0_i32_0 : i32, i32
  }
  func.func @transform_2(%arg0: i32) -> (i32, i32) {
    %c0_i32 = arith.constant 0 : i32
    %c0_i32_0 = arith.constant 0 : i32
    %c0_i32_1 = arith.constant 0 : i32
    return %c0_i32, %c0_i32_0 : i32, i32
  }
  func.func @transform_3(%arg0: i32) -> (i32, i32) {
    %c0_i32 = arith.constant 0 : i32
    %c0_i32_0 = arith.constant 0 : i32
    return %arg0, %c0_i32 : i32, i32
  }
}

</mosaic_0001>

<llo_original>
// kernel: encoder_forward.7
$region0: #{encoder_forward.7}
  #allocation0 [shape = 'u32[]', space=smem, size = 0x4, offset = 0x4, fixed_abs, tag = 'smem constant byte address 0x4 - core index']
  #allocation1 [shape = 'u32[144,128]{1,0:T(1,128)}', space=vmem, size = 0x12000, scoped, tag = 'internal scratch']
  %s0 = inlined_call_operand.vmem [shape: f32[32,128], index: 0, kind: input, shape index: {}]
  %s1 = inlined_call_operand.vmem [shape: f32[128,384], index: 1, kind: input, shape index: {}]
  %s2 = inlined_call_operand.vmem [shape: f32[1,384], index: 2, kind: input, shape index: {}]
  %s3 = inlined_call_operand.vmem [shape: f32[32,128], index: 3, kind: output, shape index: {0}]
  %s4 = inlined_call_operand.vmem [shape: f32[32,128], index: 4, kind: output, shape index: {1}]
  %s5 = inlined_call_operand.vmem [shape: f32[32,128], index: 5, kind: output, shape index: {2}]
  %6 = xla_tuple %s3, %s4, %s5
  %s7 = sld [smem:[#allocation0]]
  $region38: #{encoder_forward.7} parent=0
    _
  %s9 = ssub.s32 1, %s7
  %s10 = scalar_select 0, %s9, %s7
  // Predicated region
  $region2: #{encoder_forward.7} parent=0 // pred_check
    _
  $region3: #{encoder_forward.7} parent=0 // pred_check_branch
    %12 = sbr.rel (0) target = $region5
  $region4: #{encoder_forward.7} parent=0 // pred_region
    _
  $region5: #{encoder_forward.7} parent=0 // pred_fallthru
    _
  // Predicated region
  $region6: #{encoder_forward.7} parent=0 // pred_check
    _
  $region7: #{encoder_forward.7} parent=0 // pred_check_branch
    %14 = sbr.rel (0) target = $region9
  $region8: #{encoder_forward.7} parent=0 // pred_region
    _
  $region9: #{encoder_forward.7} parent=0 // pred_fallthru
    _
  // Predicated region
  $region10: #{encoder_forward.7} parent=0 // pred_check
    _
  $region11: #{encoder_forward.7} parent=0 // pred_check_branch
    %16 = sbr.rel (0) target = $region13
  $region12: #{encoder_forward.7} parent=0 // pred_region
    _
  $region13: #{encoder_forward.7} parent=0 // pred_fallthru
    _
  %v17 = vld [vmem:[%s0] sm:$0xff]
  %v18 = vld [vmem:[%s0 + $0x8] sm:$0xff]
  %v19 = vld [vmem:[%s0 + $0x10] sm:$0xff]
  %v20 = vld [vmem:[%s0 + $0x18] sm:$0xff]
  %v21 = vld [vmem:[%s1] sm:$0xff]
  %v22 = vld [vmem:[%s1 + $0x8] sm:$0xff]
  %v23 = vld [vmem:[%s1 + $0x10] sm:$0xff]
  %v24 = vld [vmem:[%s1 + $0x18] sm:$0xff]
  %v25 = vld [vmem:[%s1 + $0x20] sm:$0xff]
  %v26 = vld [vmem:[%s1 + $0x28] sm:$0xff]
  %v27 = vld [vmem:[%s1 + $0x30] sm:$0xff]
  %v28 = vld [vmem:[%s1 + $0x38] sm:$0xff]
  %v29 = vld [vmem:[%s1 + $0x40] sm:$0xff]
  %v30 = vld [vmem:[%s1 + $0x48] sm:$0xff]
  %v31 = vld [vmem:[%s1 + $0x50] sm:$0xff]
  %v32 = vld [vmem:[%s1 + $0x58] sm:$0xff]
  %v33 = vld [vmem:[%s1 + $0x60] sm:$0xff]
  %v34 = vld [vmem:[%s1 + $0x68] sm:$0xff]
  %v35 = vld [vmem:[%s1 + $0x70] sm:$0xff]
  %v36 = vld [vmem:[%s1 + $0x78] sm:$0xff]
  %v37 = vld [vmem:[%s1 + $0x80] sm:$0xff]
  %v38 = vld [vmem:[%s1 + $0x88] sm:$0xff]
  %v39 = vld [vmem:[%s1 + $0x90] sm:$0xff]
  %v40 = vld [vmem:[%s1 + $0x98] sm:$0xff]
  %v41 = vld [vmem:[%s1 + $0xa0] sm:$0xff]
  %v42 = vld [vmem:[%s1 + $0xa8] sm:$0xff]
  %v43 = vld [vmem:[%s1 + $0xb0] sm:$0xff]
  %v44 = vld [vmem:[%s1 + $0xb8] sm:$0xff]
  %v45 = vld [vmem:[%s1 + $0xc0] sm:$0xff]
  %v46 = vld [vmem:[%s1 + $0xc8] sm:$0xff]
  %v47 = vld [vmem:[%s1 + $0xd0] sm:$0xff]
  %v48 = vld [vmem:[%s1 + $0xd8] sm:$0xff]
  %v49 = vld [vmem:[%s1 + $0xe0] sm:$0xff]
  %v50 = vld [vmem:[%s1 + $0xe8] sm:$0xff]
  %v51 = vld [vmem:[%s1 + $0xf0] sm:$0xff]
  %v52 = vld [vmem:[%s1 + $0xf8] sm:$0xff]
  %v53 = vld [vmem:[%s1 + $0x100] sm:$0xff]
  %v54 = vld [vmem:[%s1 + $0x108] sm:$0xff]
  %v55 = vld [vmem:[%s1 + $0x110] sm:$0xff]
  %v56 = vld [vmem:[%s1 + $0x118] sm:$0xff]
  %v57 = vld [vmem:[%s1 + $0x120] sm:$0xff]
  %v58 = vld [vmem:[%s1 + $0x128] sm:$0xff]
  %v59 = vld [vmem:[%s1 + $0x130] sm:$0xff]
  %v60 = vld [vmem:[%s1 + $0x138] sm:$0xff]
  %v61 = vld [vmem:[%s1 + $0x140] sm:$0xff]
  %v62 = vld [vmem:[%s1 + $0x148] sm:$0xff]
  %v63 = vld [vmem:[%s1 + $0x150] sm:$0xff]
  %v64 = vld [vmem:[%s1 + $0x158] sm:$0xff]
  %v65 = vld [vmem:[%s1 + $0x160] sm:$0xff]
  %v66 = vld [vmem:[%s1 + $0x168] sm:$0xff]
  %v67 = vld [vmem:[%s1 + $0x170] sm:$0xff]
  %v68 = vld [vmem:[%s1 + $0x178] sm:$0xff]
  %v69 = vld [vmem:[%s2] sm:$0x7]
  %v71 = vlaneseq
  %v72 = vshrl.u32 %v71, 7
  %v73 = vsub.s32 0, %v72
  %v74 = vrot.slane %v69, %v73
  %v75 = vlaneseq
  %v76 = vshrl.u32 %v75, 7
  %v77 = vsub.s32 1, %v76
  %v78 = vrot.slane %v69, %v77
  %v79 = vlaneseq
  %v80 = vshrl.u32 %v79, 7
  %v81 = vsub.s32 2, %v80
  %v82 = vrot.slane %v69, %v81
  %86 = vmatprep.subr.mxu0 %v67
  %87 = vmatpush1.msra.mxu0 %v66
  %88 = vmatprep.subr.mxu0 %v64
  %89 = vmatpush1.msra.mxu0 %v63
  %90 = vmatprep.subr.mxu0 %v61
  %91 = vmatpush1.msra.mxu0 %v60
  %92 = vmatprep.subr.mxu0 %v58
  %93 = vmatpush1.msra.mxu0 %v57
  %94 = vmatprep.subr.mxu0 %v55
  %95 = vmatpush1.msra.mxu0 %v54
  %96 = vmatprep.subr.mxu0 %v52
  %97 = vmatpush1.msra.mxu0 %v51
  %98 = vmatprep.subr.mxu0 %v49
  %99 = vmatpush1.msra.mxu0 %v48
  %100 = vmatprep.subr.mxu0 %v46
  %101 = vmatpush1.msra.mxu0 %v45
  %102 = vmatprep.subr.mxu0 %v43
  %103 = vmatpush1.msra.mxu0 %v42
  %104 = vmatprep.subr.mxu0 %v40
  %105 = vmatpush1.msra.mxu0 %v39
  %106 = vmatprep.subr.mxu0 %v37
  %107 = vmatpush1.msra.mxu0 %v36
  %108 = vmatprep.subr.mxu0 %v34
  %109 = vmatpush1.msra.mxu0 %v33
  %110 = vmatprep.subr.mxu0 %v31
  %111 = vmatpush1.msra.mxu0 %v30
  %112 = vmatprep.subr.mxu0 %v28
  %113 = vmatpush1.msra.mxu0 %v27
  %114 = vmatprep.subr.mxu0 %v25
  %115 = vmatpush1.msra.mxu0 %v24
  %116 = vmatprep.subr.mxu0 %v22
  %117 = vmatpush1.msra.mxu0 %v21
  %118 = vmatprep.subr.mxu0 0.0
  %119 = vmatpush2.msra.mxu0 0.0
  %120 = vmatprep.subr.mxu0 0.0
  %121 = vmatpush2.msra.mxu0 0.0
  %122 = vmatprep.subr.mxu0 0.0
  %123 = vmatpush2.msra.mxu0 0.0
  %124 = vmatprep.subr.mxu0 0.0
  %125 = vmatpush2.msra.mxu0 0.0
  %126 = vmatprep.subr.mxu0 0.0
  %127 = vmatpush2.msra.mxu0 0.0
  %128 = vmatprep.subr.mxu0 0.0
  %129 = vmatpush2.msra.mxu0 0.0
  %130 = vmatprep.subr.mxu0 0.0
  %131 = vmatpush2.msra.mxu0 0.0
  %132 = vmatprep.subr.mxu0 0.0
  %133 = vmatpush2.msra.mxu0 0.0
  %134 = vmatprep.subr.mxu0 0.0
  %135 = vmatpush2.msra.mxu0 0.0
  %136 = vmatprep.subr.mxu0 0.0
  %137 = vmatpush2.msra.mxu0 0.0
  %138 = vmatprep.subr.mxu0 0.0
  %139 = vmatpush2.msra.mxu0 0.0
  %140 = vmatprep.subr.mxu0 0.0
  %141 = vmatpush2.msra.mxu0 0.0
  %142 = vmatprep.subr.mxu0 0.0
  %143 = vmatpush2.msra.mxu0 0.0
  %144 = vmatprep.subr.mxu0 0.0
  %145 = vmatpush2.msra.mxu0 0.0
  %146 = vmatprep.subr.mxu0 0.0
  %147 = vmatpush2.msra.mxu0 0.0
  %148 = vmatprep.subr.mxu0 0.0
  %149 = vmatpush2.msra.mxu0 0.0
  %150 = vmatprep.mubr.f32.mxu0 0.0
  %151 = vmatmul.mubr.f32.gmra.mxu0 %v17
  %v152 = vpop.f32.mrf.mxu0
  %v153 = vadd.f32 %v74, %v152
  %v154 = vpop.f32.mrf.mxu0
  %v155 = vadd.f32 %v78, %v154
  %156 = vmatprep.mubr.f32.mxu0 0.0
  %157 = vmatmul.mubr.f32.gmra.mxu0 %v18
  %v158 = vpop.f32.mrf.mxu0
  %v159 = vadd.f32 %v74, %v158
  %v160 = vpop.f32.mrf.mxu0
  %v161 = vadd.f32 %v78, %v160
  %162 = vmatprep.mubr.f32.mxu0 0.0
  %163 = vmatmul.mubr.f32.gmra.mxu0 %v19
  %v164 = vpop.f32.mrf.mxu0
  %v165 = vadd.f32 %v74, %v164
  %v166 = vpop.f32.mrf.mxu0
  %v167 = vadd.f32 %v78, %v166
  %168 = vmatprep.mubr.f32.mxu0 0.0
  %169 = vmatmul.mubr.f32.gmra.mxu0 %v20
  %v170 = vpop.f32.mrf.mxu0
  %v171 = vadd.f32 %v74, %v170
  %v172 = vpop.f32.mrf.mxu0
  %v173 = vadd.f32 %v78, %v172
  %174 = vdwg.mxu0
  %175 = vmatprep.subr.mxu0 0.0
  %176 = vmatpush1.msra.mxu0 %v68
  %177 = vmatprep.subr.mxu0 0.0
  %178 = vmatpush1.msra.mxu0 %v65
  %179 = vmatprep.subr.mxu0 0.0
  %180 = vmatpush1.msra.mxu0 %v62
  %181 = vmatprep.subr.mxu0 0.0
  %182 = vmatpush1.msra.mxu0 %v59
  %183 = vmatprep.subr.mxu0 0.0
  %184 = vmatpush1.msra.mxu0 %v56
  %185 = vmatprep.subr.mxu0 0.0
  %186 = vmatpush1.msra.mxu0 %v53
  %187 = vmatprep.subr.mxu0 0.0
  %188 = vmatpush1.msra.mxu0 %v50
  %189 = vmatprep.subr.mxu0 0.0
  %190 = vmatpush1.msra.mxu0 %v47
  %191 = vmatprep.subr.mxu0 0.0
  %192 = vmatpush1.msra.mxu0 %v44
  %193 = vmatprep.subr.mxu0 0.0
  %194 = vmatpush1.msra.mxu0 %v41
  %195 = vmatprep.subr.mxu0 0.0
  %196 = vmatpush1.msra.mxu0 %v38
  %197 = vmatprep.subr.mxu0 0.0
  %198 = vmatpush1.msra.mxu0 %v35
  %199 = vmatprep.subr.mxu0 0.0
  %200 = vmatpush1.msra.mxu0 %v32
  %201 = vmatprep.subr.mxu0 0.0
  %202 = vmatpush1.msra.mxu0 %v29
  %203 = vmatprep.subr.mxu0 0.0
  %204 = vmatpush1.msra.mxu0 %v26
  %205 = vmatprep.subr.mxu0 0.0
  %206 = vmatpush1.msra.mxu0 %v23
  %207 = vmatprep.subr.mxu0 0.0
  %208 = vmatpush2.msra.mxu0 0.0
  %209 = vmatprep.subr.mxu0 0.0
  %210 = vmatpush2.msra.mxu0 0.0
  %211 = vmatprep.subr.mxu0 0.0
  %212 = vmatpush2.msra.mxu0 0.0
  %213 = vmatprep.subr.mxu0 0.0
  %214 = vmatpush2.msra.mxu0 0.0
  %215 = vmatprep.subr.mxu0 0.0
  %216 = vmatpush2.msra.mxu0 0.0
  %217 = vmatprep.subr.mxu0 0.0
  %218 = vmatpush2.msra.mxu0 0.0
  %219 = vmatprep.subr.mxu0 0.0
  %220 = vmatpush2.msra.mxu0 0.0
  %221 = vmatprep.subr.mxu0 0.0
  %222 = vmatpush2.msra.mxu0 0.0
  %223 = vmatprep.subr.mxu0 0.0
  %224 = vmatpush2.msra.mxu0 0.0
  %225 = vmatprep.subr.mxu0 0.0
  %226 = vmatpush2.msra.mxu0 0.0
  %227 = vmatprep.subr.mxu0 0.0
  %228 = vmatpush2.msra.mxu0 0.0
  %229 = vmatprep.subr.mxu0 0.0
  %230 = vmatpush2.msra.mxu0 0.0
  %231 = vmatprep.subr.mxu0 0.0
  %232 = vmatpush2.msra.mxu0 0.0
  %233 = vmatprep.subr.mxu0 0.0
  %234 = vmatpush2.msra.mxu0 0.0
  %235 = vmatprep.subr.mxu0 0.0
  %236 = vmatpush2.msra.mxu0 0.0
  %237 = vmatprep.subr.mxu0 0.0
  %238 = vmatpush2.msra.mxu0 0.0
  %239 = vmatprep.mubr.f32.mxu0 0.0
  %240 = vmatmul.mubr.f32.gmra.mxu0 %v17
  %v241 = vpop.f32.mrf.mxu0
  %v242 = vadd.f32 %v82, %v241
  %v243 = vpop.f32.mrf.mxu0
  %244 = vmatprep.mubr.f32.mxu0 0.0
  %245 = vmatmul.mubr.f32.gmra.mxu0 %v18
  %v246 = vpop.f32.mrf.mxu0
  %v247 = vadd.f32 %v82, %v246
  %v248 = vpop.f32.mrf.mxu0
  %249 = vmatprep.mubr.f32.mxu0 0.0
  %250 = vmatmul.mubr.f32.gmra.mxu0 %v19
  %v251 = vpop.f32.mrf.mxu0
  %v252 = vadd.f32 %v82, %v251
  %v253 = vpop.f32.mrf.mxu0
  %254 = vmatprep.mubr.f32.mxu0 0.0
  %255 = vmatmul.mubr.f32.gmra.mxu0 %v20
  %v256 = vpop.f32.mrf.mxu0
  %v257 = vadd.f32 %v82, %v256
  %v258 = vpop.f32.mrf.mxu0
  %259 = vdwg.mxu0
  %260 = vst [vmem:[%s3] sm:$0xff] %v153
  %261 = vst [vmem:[%s3 + $0x8] sm:$0xff] %v159
  %262 = vst [vmem:[%s3 + $0x10] sm:$0xff] %v165
  %263 = vst [vmem:[%s3 + $0x18] sm:$0xff] %v171
  %264 = vst [vmem:[%s4] sm:$0xff] %v155
  %265 = vst [vmem:[%s4 + $0x8] sm:$0xff] %v161
  %266 = vst [vmem:[%s4 + $0x10] sm:$0xff] %v167
  %267 = vst [vmem:[%s4 + $0x18] sm:$0xff] %v173
  %268 = vst [vmem:[%s5] sm:$0xff] %v242
  %269 = vst [vmem:[%s5 + $0x8] sm:$0xff] %v247
  %270 = vst [vmem:[%s5 + $0x10] sm:$0xff] %v252
  %271 = vst [vmem:[%s5 + $0x18] sm:$0xff] %v257
  // Predicated region
  $region14: #{encoder_forward.7} parent=0 // pred_check
    _
  $region15: #{encoder_forward.7} parent=0 // pred_check_branch
    %273 = sbr.rel (0) target = $region17
  $region16: #{encoder_forward.7} parent=0 // pred_region
    _
  $region17: #{encoder_forward.7} parent=0 // pred_fallthru
    _
  // Predicated region
  $region18: #{encoder_forward.7} parent=0 // pred_check
    _
  $region19: #{encoder_forward.7} parent=0 // pred_check_branch
    %275 = sbr.rel (0) target = $region21
  $region20: #{encoder_forward.7} parent=0 // pred_region
    _
  $region21: #{encoder_forward.7} parent=0 // pred_fallthru
    _
  // Predicated region
  $region22: #{encoder_forward.7} parent=0 // pred_check
    _
  $region23: #{encoder_forward.7} parent=0 // pred_check_branch
    %277 = sbr.rel (0) target = $region25
  $region24: #{encoder_forward.7} parent=0 // pred_region
    _
  $region25: #{encoder_forward.7} parent=0 // pred_fallthru
    _
  // Predicated region
  $region26: #{encoder_forward.7} parent=0 // pred_check
    _
  $region27: #{encoder_forward.7} parent=0 // pred_check_branch
    %279 = sbr.rel (0) target = $region29
  $region28: #{encoder_forward.7} parent=0 // pred_region
    _
  $region29: #{encoder_forward.7} parent=0 // pred_fallthru
    _
  // Predicated region
  $region30: #{encoder_forward.7} parent=0 // pred_check
    _
  $region31: #{encoder_forward.7} parent=0 // pred_check_branch
    %281 = sbr.rel (0) target = $region33
  $region32: #{encoder_forward.7} parent=0 // pred_region
    _
  $region33: #{encoder_forward.7} parent=0 // pred_fallthru
    _
  // Predicated region
  $region34: #{encoder_forward.7} parent=0 // pred_check
    _
  $region35: #{encoder_forward.7} parent=0 // pred_check_branch
    %283 = sbr.rel (0) target = $region37
  $region36: #{encoder_forward.7} parent=0 // pred_region
    _
  $region37: #{encoder_forward.7} parent=0 // pred_fallthru
    _

// kernel: encoder_forward.9
$region0: #{encoder_forward.9}
  #allocation0 [shape = 'u32[]', space=smem, size = 0x4, offset = 0x4, fixed_abs, tag = 'smem constant byte address 0x4 - core index']
  #allocation1 [shape = 'u32[144,128]{1,0:T(1,128)}', space=vmem, size = 0x12000, scoped, tag = 'internal scratch']
  %s0 = inlined_call_operand.vmem [shape: f32[32,128], index: 0, kind: input, shape index: {}]
  %s1 = inlined_call_operand.vmem [shape: f32[32,128], index: 1, kind: input, shape index: {}]
  %s2 = inlined_call_operand.vmem [shape: f32[128,128], index: 2, kind: input, shape index: {}]
  %s3 = inlined_call_operand.vmem [shape: f32[1,128], index: 3, kind: input, shape index: {}]
  %s4 = inlined_call_operand.vmem [shape: f32[1,128], index: 4, kind: input, shape index: {}]
  %s5 = inlined_call_operand.vmem [shape: f32[1,128], index: 5, kind: input, shape index: {}]
  %s6 = inlined_call_operand.vmem [shape: f32[128,256], index: 6, kind: input, shape index: {}]
  %s7 = inlined_call_operand.vmem [shape: f32[1,256], index: 7, kind: input, shape index: {}]
  %s8 = inlined_call_operand.vmem [shape: f32[256,128], index: 8, kind: input, shape index: {}]
  %s9 = inlined_call_operand.vmem [shape: f32[1,128], index: 9, kind: input, shape index: {}]
  %s10 = inlined_call_operand.vmem [shape: f32[1,128], index: 10, kind: input, shape index: {}]
  %s11 = inlined_call_operand.vmem [shape: f32[1,128], index: 11, kind: input, shape index: {}]
  %s12 = inlined_call_operand.vmem [shape: f32[32,128], index: 12, kind: output, shape index: {}]
  %s13 = sld [smem:[#allocation0]]
  $region58: #{encoder_forward.9} parent=0
    _
  %s15 = ssub.s32 1, %s13
  %s16 = scalar_select 0, %s15, %s13
  // Predicated region
  $region2: #{encoder_forward.9} parent=0 // pred_check
    _
  $region3: #{encoder_forward.9} parent=0 // pred_check_branch
    %18 = sbr.rel (0) target = $region5
  $region4: #{encoder_forward.9} parent=0 // pred_region
    _
  $region5: #{encoder_forward.9} parent=0 // pred_fallthru
    _
  // Predicated region
  $region6: #{encoder_forward.9} parent=0 // pred_check
    _
  $region7: #{encoder_forward.9} parent=0 // pred_check_branch
    %20 = sbr.rel (0) target = $region9
  $region8: #{encoder_forward.9} parent=0 // pred_region
    _
  $region9: #{encoder_forward.9} parent=0 // pred_fallthru
    _
  // Predicated region
  $region10: #{encoder_forward.9} parent=0 // pred_check
    _
  $region11: #{encoder_forward.9} parent=0 // pred_check_branch
    %22 = sbr.rel (0) target = $region13
  $region12: #{encoder_forward.9} parent=0 // pred_region
    _
  $region13: #{encoder_forward.9} parent=0 // pred_fallthru
    _
  // Predicated region
  $region14: #{encoder_forward.9} parent=0 // pred_check
    _
  $region15: #{encoder_forward.9} parent=0 // pred_check_branch
    %24 = sbr.rel (0) target = $region17
  $region16: #{encoder_forward.9} parent=0 // pred_region
    _
  $region17: #{encoder_forward.9} parent=0 // pred_fallthru
    _
  // Predicated region
  $region18: #{encoder_forward.9} parent=0 // pred_check
    _
  $region19: #{encoder_forward.9} parent=0 // pred_check_branch
    %26 = sbr.rel (0) target = $region21
  $region20: #{encoder_forward.9} parent=0 // pred_region
    _
  $region21: #{encoder_forward.9} parent=0 // pred_fallthru
    _
  // Predicated region
  $region22: #{encoder_forward.9} parent=0 // pred_check
    _
  $region23: #{encoder_forward.9} parent=0 // pred_check_branch
    %28 = sbr.rel (0) target = $region25
  $region24: #{encoder_forward.9} parent=0 // pred_region
    _
  $region25: #{encoder_forward.9} parent=0 // pred_fallthru
    _
  // Predicated region
  $region26: #{encoder_forward.9} parent=0 // pred_check
    _
  $region27: #{encoder_forward.9} parent=0 // pred_check_branch
    %30 = sbr.rel (0) target = $region29
  $region28: #{encoder_forward.9} parent=0 // pred_region
    _
  $region29: #{encoder_forward.9} parent=0 // pred_fallthru
    _
  // Predicated region
  $region30: #{encoder_forward.9} parent=0 // pred_check
    _
  $region31: #{encoder_forward.9} parent=0 // pred_check_branch
    %32 = sbr.rel (0) target = $region33
  $region32: #{encoder_forward.9} parent=0 // pred_region
    _
  $region33: #{encoder_forward.9} parent=0 // pred_fallthru
    _
  // Predicated region
  $region34: #{encoder_forward.9} parent=0 // pred_check
    _
  $region35: #{encoder_forward.9} parent=0 // pred_check_branch
    %34 = sbr.rel (0) target = $region37
  $region36: #{encoder_forward.9} parent=0 // pred_region
    _
  $region37: #{encoder_forward.9} parent=0 // pred_fallthru
    _
  // Predicated region
  $region38: #{encoder_forward.9} parent=0 // pred_check
    _
  $region39: #{encoder_forward.9} parent=0 // pred_check_branch
    %36 = sbr.rel (0) target = $region41
  $region40: #{encoder_forward.9} parent=0 // pred_region
    _
  $region41: #{encoder_forward.9} parent=0 // pred_fallthru
    _
  // Predicated region
  $region42: #{encoder_forward.9} parent=0 // pred_check
    _
  $region43: #{encoder_forward.9} parent=0 // pred_check_branch
    %38 = sbr.rel (0) target = $region45
  $region44: #{encoder_forward.9} parent=0 // pred_region
    _
  $region45: #{encoder_forward.9} parent=0 // pred_fallthru
    _
  // Predicated region
  $region46: #{encoder_forward.9} parent=0 // pred_check
    _
  $region47: #{encoder_forward.9} parent=0 // pred_check_branch
    %40 = sbr.rel (0) target = $region49
  $region48: #{encoder_forward.9} parent=0 // pred_region
    _
  $region49: #{encoder_forward.9} parent=0 // pred_fallthru
    _
  %v41 = vld [vmem:[%s0] sm:$0xff]
  %v42 = vld [vmem:[%s0 + $0x8] sm:$0xff]
  %v43 = vld [vmem:[%s0 + $0x10] sm:$0xff]
  %v44 = vld [vmem:[%s0 + $0x18] sm:$0xff]
  %v45 = vld [vmem:[%s2] sm:$0xff]
  %v46 = vld [vmem:[%s2 + $0x8] sm:$0xff]
  %v47 = vld [vmem:[%s2 + $0x10] sm:$0xff]
  %v48 = vld [vmem:[%s2 + $0x18] sm:$0xff]
  %v49 = vld [vmem:[%s2 + $0x20] sm:$0xff]
  %v50 = vld [vmem:[%s2 + $0x28] sm:$0xff]
  %v51 = vld [vmem:[%s2 + $0x30] sm:$0xff]
  %v52 = vld [vmem:[%s2 + $0x38] sm:$0xff]
  %v53 = vld [vmem:[%s2 + $0x40] sm:$0xff]
  %v54 = vld [vmem:[%s2 + $0x48] sm:$0xff]
  %v55 = vld [vmem:[%s2 + $0x50] sm:$0xff]
  %v56 = vld [vmem:[%s2 + $0x58] sm:$0xff]
  %v57 = vld [vmem:[%s2 + $0x60] sm:$0xff]
  %v58 = vld [vmem:[%s2 + $0x68] sm:$0xff]
  %v59 = vld [vmem:[%s2 + $0x70] sm:$0xff]
  %v60 = vld [vmem:[%s2 + $0x78] sm:$0xff]
  %v61 = vld [vmem:[%s3] sm:$0x1]
  %v63 = vlaneseq
  %v64 = vshrl.u32 %v63, 7
  %v65 = vsub.s32 0, %v64
  %v66 = vrot.slane %v61, %v65
  %68 = vmatprep.subr.mxu0 0.0
  %69 = vmatpush1.msra.mxu0 %v60
  %70 = vmatprep.subr.mxu0 0.0
  %71 = vmatpush1.msra.mxu0 %v59
  %72 = vmatprep.subr.mxu0 0.0
  %73 = vmatpush1.msra.mxu0 %v58
  %74 = vmatprep.subr.mxu0 0.0
  %75 = vmatpush1.msra.mxu0 %v57
  %76 = vmatprep.subr.mxu0 0.0
  %77 = vmatpush1.msra.mxu0 %v56
  %78 = vmatprep.subr.mxu0 0.0
  %79 = vmatpush1.msra.mxu0 %v55
  %80 = vmatprep.subr.mxu0 0.0
  %81 = vmatpush1.msra.mxu0 %v54
  %82 = vmatprep.subr.mxu0 0.0
  %83 = vmatpush1.msra.mxu0 %v53
  %84 = vmatprep.subr.mxu0 0.0
  %85 = vmatpush1.msra.mxu0 %v52
  %86 = vmatprep.subr.mxu0 0.0
  %87 = vmatpush1.msra.mxu0 %v51
  %88 = vmatprep.subr.mxu0 0.0
  %89 = vmatpush1.msra.mxu0 %v50
  %90 = vmatprep.subr.mxu0 0.0
  %91 = vmatpush1.msra.mxu0 %v49
  %92 = vmatprep.subr.mxu0 0.0
  %93 = vmatpush1.msra.mxu0 %v48
  %94 = vmatprep.subr.mxu0 0.0
  %95 = vmatpush1.msra.mxu0 %v47
  %96 = vmatprep.subr.mxu0 0.0
  %97 = vmatpush1.msra.mxu0 %v46
  %98 = vmatprep.subr.mxu0 0.0
  %99 = vmatpush1.msra.mxu0 %v45
  %100 = vmatprep.subr.mxu0 0.0
  %101 = vmatpush2.msra.mxu0 0.0
  %102 = vmatprep.subr.mxu0 0.0
  %103 = vmatpush2.msra.mxu0 0.0
  %104 = vmatprep.subr.mxu0 0.0
  %105 = vmatpush2.msra.mxu0 0.0
  %106 = vmatprep.subr.mxu0 0.0
  %107 = vmatpush2.msra.mxu0 0.0
  %108 = vmatprep.subr.mxu0 0.0
  %109 = vmatpush2.msra.mxu0 0.0
  %110 = vmatprep.subr.mxu0 0.0
  %111 = vmatpush2.msra.mxu0 0.0
  %112 = vmatprep.subr.mxu0 0.0
  %113 = vmatpush2.msra.mxu0 0.0
  %114 = vmatprep.subr.mxu0 0.0
  %115 = vmatpush2.msra.mxu0 0.0
  %116 = vmatprep.subr.mxu0 0.0
  %117 = vmatpush2.msra.mxu0 0.0
  %118 = vmatprep.subr.mxu0 0.0
  %119 = vmatpush2.msra.mxu0 0.0
  %120 = vmatprep.subr.mxu0 0.0
  %121 = vmatpush2.msra.mxu0 0.0
  %122 = vmatprep.subr.mxu0 0.0
  %123 = vmatpush2.msra.mxu0 0.0
  %124 = vmatprep.subr.mxu0 0.0
  %125 = vmatpush2.msra.mxu0 0.0
  %126 = vmatprep.subr.mxu0 0.0
  %127 = vmatpush2.msra.mxu0 0.0
  %128 = vmatprep.subr.mxu0 0.0
  %129 = vmatpush2.msra.mxu0 0.0
  %130 = vmatprep.subr.mxu0 0.0
  %131 = vmatpush2.msra.mxu0 0.0
  %132 = vmatprep.mubr.f32.mxu0 0.0
  %133 = vmatmul.mubr.f32.gmra.mxu0 %v41
  %v134 = vpop.f32.mrf.mxu0
  %v135 = vadd.f32 %v66, %v134
  %v136 = vpop.f32.mrf.mxu0
  %137 = vmatprep.mubr.f32.mxu0 0.0
  %138 = vmatmul.mubr.f32.gmra.mxu0 %v42
  %v139 = vpop.f32.mrf.mxu0
  %v140 = vadd.f32 %v66, %v139
  %v141 = vpop.f32.mrf.mxu0
  %142 = vmatprep.mubr.f32.mxu0 0.0
  %143 = vmatmul.mubr.f32.gmra.mxu0 %v43
  %v144 = vpop.f32.mrf.mxu0
  %v145 = vadd.f32 %v66, %v144
  %v146 = vpop.f32.mrf.mxu0
  %147 = vmatprep.mubr.f32.mxu0 0.0
  %148 = vmatmul.mubr.f32.gmra.mxu0 %v44
  %v149 = vpop.f32.mrf.mxu0
  %v150 = vadd.f32 %v66, %v149
  %v151 = vpop.f32.mrf.mxu0
  %152 = vdwg.mxu0
  %v153 = vld [vmem:[%s1] sm:$0xff]
  %v154 = vld [vmem:[%s1 + $0x8] sm:$0xff]
  %v155 = vld [vmem:[%s1 + $0x10] sm:$0xff]
  %v156 = vld [vmem:[%s1 + $0x18] sm:$0xff]
  %v157 = vadd.f32 %v135, %v153
  %v158 = vadd.f32 %v140, %v154
  %v159 = vadd.f32 %v145, %v155
  %v160 = vadd.f32 %v150, %v156
  %161 = vadd.xlane.f32.xlu0 %v157
  %v162 = vpop.xlane.xlu0 %161
  %163 = vadd.xlane.f32.xlu0 %v158
  %v164 = vpop.xlane.xlu0 %163
  %165 = vadd.xlane.f32.xlu0 %v159
  %v166 = vpop.xlane.xlu0 %165
  %167 = vadd.xlane.f32.xlu0 %v160
  %v168 = vpop.xlane.xlu0 %167
  %v169 = vrcp.pop 128.0
  %v170 = vmul.f32 %v162, %v169
  %v171 = vmul.f32 %v164, %v169
  %v172 = vmul.f32 %v166, %v169
  %v173 = vmul.f32 %v168, %v169
  %v174 = vsub.f32 %v157, %v170
  %v175 = vsub.f32 %v158, %v171
  %v176 = vsub.f32 %v159, %v172
  %v177 = vsub.f32 %v160, %v173
  %v178 = vmul.f32 %v174, %v174
  %v179 = vmul.f32 %v175, %v175
  %v180 = vmul.f32 %v176, %v176
  %v181 = vmul.f32 %v177, %v177
  %182 = vadd.xlane.f32.xlu0 %v178
  %v183 = vpop.xlane.xlu0 %182
  %184 = vadd.xlane.f32.xlu0 %v179
  %v185 = vpop.xlane.xlu0 %184
  %186 = vadd.xlane.f32.xlu0 %v180
  %v187 = vpop.xlane.xlu0 %186
  %188 = vadd.xlane.f32.xlu0 %v181
  %v189 = vpop.xlane.xlu0 %188
  %v190 = vmul.f32 %v183, %v169
  %v191 = vmul.f32 %v185, %v169
  %v192 = vmul.f32 %v187, %v169
  %v193 = vmul.f32 %v189, %v169
  %v194 = vadd.f32 %v190, 1e-05
  %v195 = vadd.f32 %v191, 1e-05
  %v196 = vadd.f32 %v192, 1e-05
  %v197 = vadd.f32 %v193, 1e-05
  %v198 = vrsqrt.pop %v194
  %v199 = vrsqrt.pop %v195
  %v200 = vrsqrt.pop %v196
  %v201 = vrsqrt.pop %v197
  %v202 = vmul.f32 %v174, %v198
  %v203 = vmul.f32 %v175, %v199
  %v204 = vmul.f32 %v176, %v200
  %v205 = vmul.f32 %v177, %v201
  %v206 = vld [vmem:[%s4] sm:$0x1]
  %v208 = vlaneseq
  %v209 = vshrl.u32 %v208, 7
  %v210 = vsub.s32 0, %v209
  %v211 = vrot.slane %v206, %v210
  %v213 = vmul.f32 %v202, %v211
  %v214 = vmul.f32 %v203, %v211
  %v215 = vmul.f32 %v204, %v211
  %v216 = vmul.f32 %v205, %v211
  %v217 = vld [vmem:[%s5] sm:$0x1]
  %v219 = vlaneseq
  %v220 = vshrl.u32 %v219, 7
  %v221 = vsub.s32 0, %v220
  %v222 = vrot.slane %v217, %v221
  %v224 = vadd.f32 %v213, %v222
  %v225 = vadd.f32 %v214, %v222
  %v226 = vadd.f32 %v215, %v222
  %v227 = vadd.f32 %v216, %v222
  %v228 = vld [vmem:[%s6] sm:$0xff]
  %v229 = vld [vmem:[%s6 + $0x8] sm:$0xff]
  %v230 = vld [vmem:[%s6 + $0x10] sm:$0xff]
  %v231 = vld [vmem:[%s6 + $0x18] sm:$0xff]
  %v232 = vld [vmem:[%s6 + $0x20] sm:$0xff]
  %v233 = vld [vmem:[%s6 + $0x28] sm:$0xff]
  %v234 = vld [vmem:[%s6 + $0x30] sm:$0xff]
  %v235 = vld [vmem:[%s6 + $0x38] sm:$0xff]
  %v236 = vld [vmem:[%s6 + $0x40] sm:$0xff]
  %v237 = vld [vmem:[%s6 + $0x48] sm:$0xff]
  %v238 = vld [vmem:[%s6 + $0x50] sm:$0xff]
  %v239 = vld [vmem:[%s6 + $0x58] sm:$0xff]
  %v240 = vld [vmem:[%s6 + $0x60] sm:$0xff]
  %v241 = vld [vmem:[%s6 + $0x68] sm:$0xff]
  %v242 = vld [vmem:[%s6 + $0x70] sm:$0xff]
  %v243 = vld [vmem:[%s6 + $0x78] sm:$0xff]
  %v244 = vld [vmem:[%s6 + $0x80] sm:$0xff]
  %v245 = vld [vmem:[%s6 + $0x88] sm:$0xff]
  %v246 = vld [vmem:[%s6 + $0x90] sm:$0xff]
  %v247 = vld [vmem:[%s6 + $0x98] sm:$0xff]
  %v248 = vld [vmem:[%s6 + $0xa0] sm:$0xff]
  %v249 = vld [vmem:[%s6 + $0xa8] sm:$0xff]
  %v250 = vld [vmem:[%s6 + $0xb0] sm:$0xff]
  %v251 = vld [vmem:[%s6 + $0xb8] sm:$0xff]
  %v252 = vld [vmem:[%s6 + $0xc0] sm:$0xff]
  %v253 = vld [vmem:[%s6 + $0xc8] sm:$0xff]
  %v254 = vld [vmem:[%s6 + $0xd0] sm:$0xff]
  %v255 = vld [vmem:[%s6 + $0xd8] sm:$0xff]
  %v256 = vld [vmem:[%s6 + $0xe0] sm:$0xff]
  %v257 = vld [vmem:[%s6 + $0xe8] sm:$0xff]
  %v258 = vld [vmem:[%s6 + $0xf0] sm:$0xff]
  %v259 = vld [vmem:[%s6 + $0xf8] sm:$0xff]
  %v260 = vld [vmem:[%s7] sm:$0x3]
  %v262 = vlaneseq
  %v263 = vshrl.u32 %v262, 7
  %v264 = vsub.s32 0, %v263
  %v265 = vrot.slane %v260, %v264
  %v266 = vlaneseq
  %v267 = vshrl.u32 %v266, 7
  %v268 = vsub.s32 1, %v267
  %v269 = vrot.slane %v260, %v268
  %272 = vmatprep.subr.mxu0 %v259
  %273 = vmatpush1.msra.mxu0 %v258
  %274 = vmatprep.subr.mxu0 %v257
  %275 = vmatpush1.msra.mxu0 %v256
  %276 = vmatprep.subr.mxu0 %v255
  %277 = vmatpush1.msra.mxu0 %v254
  %278 = vmatprep.subr.mxu0 %v253
  %279 = vmatpush1.msra.mxu0 %v252
  %280 = vmatprep.subr.mxu0 %v251
  %281 = vmatpush1.msra.mxu0 %v250
  %282 = vmatprep.subr.mxu0 %v249
  %283 = vmatpush1.msra.mxu0 %v248
  %284 = vmatprep.subr.mxu0 %v247
  %285 = vmatpush1.msra.mxu0 %v246
  %286 = vmatprep.subr.mxu0 %v245
  %287 = vmatpush1.msra.mxu0 %v244
  %288 = vmatprep.subr.mxu0 %v243
  %289 = vmatpush1.msra.mxu0 %v242
  %290 = vmatprep.subr.mxu0 %v241
  %291 = vmatpush1.msra.mxu0 %v240
  %292 = vmatprep.subr.mxu0 %v239
  %293 = vmatpush1.msra.mxu0 %v238
  %294 = vmatprep.subr.mxu0 %v237
  %295 = vmatpush1.msra.mxu0 %v236
  %296 = vmatprep.subr.mxu0 %v235
  %297 = vmatpush1.msra.mxu0 %v234
  %298 = vmatprep.subr.mxu0 %v233
  %299 = vmatpush1.msra.mxu0 %v232
  %300 = vmatprep.subr.mxu0 %v231
  %301 = vmatpush1.msra.mxu0 %v230
  %302 = vmatprep.subr.mxu0 %v229
  %303 = vmatpush1.msra.mxu0 %v228
  %304 = vmatprep.subr.mxu0 0.0
  %305 = vmatpush2.msra.mxu0 0.0
  %306 = vmatprep.subr.mxu0 0.0
  %307 = vmatpush2.msra.mxu0 0.0
  %308 = vmatprep.subr.mxu0 0.0
  %309 = vmatpush2.msra.mxu0 0.0
  %310 = vmatprep.subr.mxu0 0.0
  %311 = vmatpush2.msra.mxu0 0.0
  %312 = vmatprep.subr.mxu0 0.0
  %313 = vmatpush2.msra.mxu0 0.0
  %314 = vmatprep.subr.mxu0 0.0
  %315 = vmatpush2.msra.mxu0 0.0
  %316 = vmatprep.subr.mxu0 0.0
  %317 = vmatpush2.msra.mxu0 0.0
  %318 = vmatprep.subr.mxu0 0.0
  %319 = vmatpush2.msra.mxu0 0.0
  %320 = vmatprep.subr.mxu0 0.0
  %321 = vmatpush2.msra.mxu0 0.0
  %322 = vmatprep.subr.mxu0 0.0
  %323 = vmatpush2.msra.mxu0 0.0
  %324 = vmatprep.subr.mxu0 0.0
  %325 = vmatpush2.msra.mxu0 0.0
  %326 = vmatprep.subr.mxu0 0.0
  %327 = vmatpush2.msra.mxu0 0.0
  %328 = vmatprep.subr.mxu0 0.0
  %329 = vmatpush2.msra.mxu0 0.0
  %330 = vmatprep.subr.mxu0 0.0
  %331 = vmatpush2.msra.mxu0 0.0
  %332 = vmatprep.subr.mxu0 0.0
  %333 = vmatpush2.msra.mxu0 0.0
  %334 = vmatprep.subr.mxu0 0.0
  %335 = vmatpush2.msra.mxu0 0.0
  %336 = vmatprep.mubr.f32.mxu0 0.0
  %337 = vmatmul.mubr.f32.gmra.mxu0 %v224
  %v338 = vpop.f32.mrf.mxu0
  %v339 = vadd.f32 %v265, %v338
  %v340 = vpop.f32.mrf.mxu0
  %v341 = vadd.f32 %v269, %v340
  %342 = vmatprep.mubr.f32.mxu0 0.0
  %343 = vmatmul.mubr.f32.gmra.mxu0 %v225
  %v344 = vpop.f32.mrf.mxu0
  %v345 = vadd.f32 %v265, %v344
  %v346 = vpop.f32.mrf.mxu0
  %v347 = vadd.f32 %v269, %v346
  %348 = vmatprep.mubr.f32.mxu0 0.0
  %349 = vmatmul.mubr.f32.gmra.mxu0 %v226
  %v350 = vpop.f32.mrf.mxu0
  %v351 = vadd.f32 %v265, %v350
  %v352 = vpop.f32.mrf.mxu0
  %v353 = vadd.f32 %v269, %v352
  %354 = vmatprep.mubr.f32.mxu0 0.0
  %355 = vmatmul.mubr.f32.gmra.mxu0 %v227
  %v356 = vpop.f32.mrf.mxu0
  %v357 = vadd.f32 %v265, %v356
  %v358 = vpop.f32.mrf.mxu0
  %v359 = vadd.f32 %v269, %v358
  %360 = vdwg.mxu0
  %v361 = vmax.f32 %v339, 0.0
  %v362 = vmax.f32 %v341, 0.0
  %v363 = vmax.f32 %v345, 0.0
  %v364 = vmax.f32 %v347, 0.0
  %v365 = vmax.f32 %v351, 0.0
  %v366 = vmax.f32 %v353, 0.0
  %v367 = vmax.f32 %v357, 0.0
  %v368 = vmax.f32 %v359, 0.0
  %v369 = vld [vmem:[%s8] sm:$0xff]
  %v370 = vld [vmem:[%s8 + $0x8] sm:$0xff]
  %v371 = vld [vmem:[%s8 + $0x10] sm:$0xff]
  %v372 = vld [vmem:[%s8 + $0x18] sm:$0xff]
  %v373 = vld [vmem:[%s8 + $0x20] sm:$0xff]
  %v374 = vld [vmem:[%s8 + $0x28] sm:$0xff]
  %v375 = vld [vmem:[%s8 + $0x30] sm:$0xff]
  %v376 = vld [vmem:[%s8 + $0x38] sm:$0xff]
  %v377 = vld [vmem:[%s8 + $0x40] sm:$0xff]
  %v378 = vld [vmem:[%s8 + $0x48] sm:$0xff]
  %v379 = vld [vmem:[%s8 + $0x50] sm:$0xff]
  %v380 = vld [vmem:[%s8 + $0x58] sm:$0xff]
  %v381 = vld [vmem:[%s8 + $0x60] sm:$0xff]
  %v382 = vld [vmem:[%s8 + $0x68] sm:$0xff]
  %v383 = vld [vmem:[%s8 + $0x70] sm:$0xff]
  %v384 = vld [vmem:[%s8 + $0x78] sm:$0xff]
  %v385 = vld [vmem:[%s8 + $0x80] sm:$0xff]
  %v386 = vld [vmem:[%s8 + $0x88] sm:$0xff]
  %v387 = vld [vmem:[%s8 + $0x90] sm:$0xff]
  %v388 = vld [vmem:[%s8 + $0x98] sm:$0xff]
  %v389 = vld [vmem:[%s8 + $0xa0] sm:$0xff]
  %v390 = vld [vmem:[%s8 + $0xa8] sm:$0xff]
  %v391 = vld [vmem:[%s8 + $0xb0] sm:$0xff]
  %v392 = vld [vmem:[%s8 + $0xb8] sm:$0xff]
  %v393 = vld [vmem:[%s8 + $0xc0] sm:$0xff]
  %v394 = vld [vmem:[%s8 + $0xc8] sm:$0xff]
  %v395 = vld [vmem:[%s8 + $0xd0] sm:$0xff]
  %v396 = vld [vmem:[%s8 + $0xd8] sm:$0xff]
  %v397 = vld [vmem:[%s8 + $0xe0] sm:$0xff]
  %v398 = vld [vmem:[%s8 + $0xe8] sm:$0xff]
  %v399 = vld [vmem:[%s8 + $0xf0] sm:$0xff]
  %v400 = vld [vmem:[%s8 + $0xf8] sm:$0xff]
  %v401 = vld [vmem:[%s9] sm:$0x1]
  %v403 = vlaneseq
  %v404 = vshrl.u32 %v403, 7
  %v405 = vsub.s32 0, %v404
  %v406 = vrot.slane %v401, %v405
  %408 = vmatprep.subr.mxu0 0.0
  %409 = vmatpush1.msra.mxu0 %v384
  %410 = vmatprep.subr.mxu0 0.0
  %411 = vmatpush1.msra.mxu0 %v383
  %412 = vmatprep.subr.mxu0 0.0
  %413 = vmatpush1.msra.mxu0 %v382
  %414 = vmatprep.subr.mxu0 0.0
  %415 = vmatpush1.msra.mxu0 %v381
  %416 = vmatprep.subr.mxu0 0.0
  %417 = vmatpush1.msra.mxu0 %v380
  %418 = vmatprep.subr.mxu0 0.0
  %419 = vmatpush1.msra.mxu0 %v379
  %420 = vmatprep.subr.mxu0 0.0
  %421 = vmatpush1.msra.mxu0 %v378
  %422 = vmatprep.subr.mxu0 0.0
  %423 = vmatpush1.msra.mxu0 %v377
  %424 = vmatprep.subr.mxu0 0.0
  %425 = vmatpush1.msra.mxu0 %v376
  %426 = vmatprep.subr.mxu0 0.0
  %427 = vmatpush1.msra.mxu0 %v375
  %428 = vmatprep.subr.mxu0 0.0
  %429 = vmatpush1.msra.mxu0 %v374
  %430 = vmatprep.subr.mxu0 0.0
  %431 = vmatpush1.msra.mxu0 %v373
  %432 = vmatprep.subr.mxu0 0.0
  %433 = vmatpush1.msra.mxu0 %v372
  %434 = vmatprep.subr.mxu0 0.0
  %435 = vmatpush1.msra.mxu0 %v371
  %436 = vmatprep.subr.mxu0 0.0
  %437 = vmatpush1.msra.mxu0 %v370
  %438 = vmatprep.subr.mxu0 0.0
  %439 = vmatpush1.msra.mxu0 %v369
  %440 = vmatprep.subr.mxu0 0.0
  %441 = vmatpush2.msra.mxu0 %v400
  %442 = vmatprep.subr.mxu0 0.0
  %443 = vmatpush2.msra.mxu0 %v399
  %444 = vmatprep.subr.mxu0 0.0
  %445 = vmatpush2.msra.mxu0 %v398
  %446 = vmatprep.subr.mxu0 0.0
  %447 = vmatpush2.msra.mxu0 %v397
  %448 = vmatprep.subr.mxu0 0.0
  %449 = vmatpush2.msra.mxu0 %v396
  %450 = vmatprep.subr.mxu0 0.0
  %451 = vmatpush2.msra.mxu0 %v395
  %452 = vmatprep.subr.mxu0 0.0
  %453 = vmatpush2.msra.mxu0 %v394
  %454 = vmatprep.subr.mxu0 0.0
  %455 = vmatpush2.msra.mxu0 %v393
  %456 = vmatprep.subr.mxu0 0.0
  %457 = vmatpush2.msra.mxu0 %v392
  %458 = vmatprep.subr.mxu0 0.0
  %459 = vmatpush2.msra.mxu0 %v391
  %460 = vmatprep.subr.mxu0 0.0
  %461 = vmatpush2.msra.mxu0 %v390
  %462 = vmatprep.subr.mxu0 0.0
  %463 = vmatpush2.msra.mxu0 %v389
  %464 = vmatprep.subr.mxu0 0.0
  %465 = vmatpush2.msra.mxu0 %v388
  %466 = vmatprep.subr.mxu0 0.0
  %467 = vmatpush2.msra.mxu0 %v387
  %468 = vmatprep.subr.mxu0 0.0
  %469 = vmatpush2.msra.mxu0 %v386
  %470 = vmatprep.subr.mxu0 0.0
  %471 = vmatpush2.msra.mxu0 %v385
  %472 = vmatprep.mubr.f32.mxu0 %v362
  %473 = vmatmul.mubr.f32.gmra.mxu0 %v361
  %v474 = vpop.f32.mrf.mxu0
  %v475 = vadd.f32 %v406, %v474
  %v476 = vpop.f32.mrf.mxu0
  %477 = vmatprep.mubr.f32.mxu0 %v364
  %478 = vmatmul.mubr.f32.gmra.mxu0 %v363
  %v479 = vpop.f32.mrf.mxu0
  %v480 = vadd.f32 %v406, %v479
  %v481 = vpop.f32.mrf.mxu0
  %482 = vmatprep.mubr.f32.mxu0 %v366
  %483 = vmatmul.mubr.f32.gmra.mxu0 %v365
  %v484 = vpop.f32.mrf.mxu0
  %v485 = vadd.f32 %v406, %v484
  %v486 = vpop.f32.mrf.mxu0
  %487 = vmatprep.mubr.f32.mxu0 %v368
  %488 = vmatmul.mubr.f32.gmra.mxu0 %v367
  %v489 = vpop.f32.mrf.mxu0
  %v490 = vadd.f32 %v406, %v489
  %v491 = vpop.f32.mrf.mxu0
  %492 = vdwg.mxu0
  %v493 = vadd.f32 %v475, %v224
  %v494 = vadd.f32 %v480, %v225
  %v495 = vadd.f32 %v485, %v226
  %v496 = vadd.f32 %v490, %v227
  %497 = vadd.xlane.f32.xlu0 %v493
  %v498 = vpop.xlane.xlu0 %497
  %499 = vadd.xlane.f32.xlu0 %v494
  %v500 = vpop.xlane.xlu0 %499
  %501 = vadd.xlane.f32.xlu0 %v495
  %v502 = vpop.xlane.xlu0 %501
  %503 = vadd.xlane.f32.xlu0 %v496
  %v504 = vpop.xlane.xlu0 %503
  %v505 = vmul.f32 %v498, %v169
  %v506 = vmul.f32 %v500, %v169
  %v507 = vmul.f32 %v502, %v169
  %v508 = vmul.f32 %v504, %v169
  %v509 = vsub.f32 %v493, %v505
  %v510 = vsub.f32 %v494, %v506
  %v511 = vsub.f32 %v495, %v507
  %v512 = vsub.f32 %v496, %v508
  %v513 = vmul.f32 %v509, %v509
  %v514 = vmul.f32 %v510, %v510
  %v515 = vmul.f32 %v511, %v511
  %v516 = vmul.f32 %v512, %v512
  %517 = vadd.xlane.f32.xlu0 %v513
  %v518 = vpop.xlane.xlu0 %517
  %519 = vadd.xlane.f32.xlu0 %v514
  %v520 = vpop.xlane.xlu0 %519
  %521 = vadd.xlane.f32.xlu0 %v515
  %v522 = vpop.xlane.xlu0 %521
  %523 = vadd.xlane.f32.xlu0 %v516
  %v524 = vpop.xlane.xlu0 %523
  %v525 = vmul.f32 %v518, %v169
  %v526 = vmul.f32 %v520, %v169
  %v527 = vmul.f32 %v522, %v169
  %v528 = vmul.f32 %v524, %v169
  %v529 = vadd.f32 %v525, 1e-05
  %v530 = vadd.f32 %v526, 1e-05
  %v531 = vadd.f32 %v527, 1e-05
  %v532 = vadd.f32 %v528, 1e-05
  %v533 = vrsqrt.pop %v529
  %v534 = vrsqrt.pop %v530
  %v535 = vrsqrt.pop %v531
  %v536 = vrsqrt.pop %v532
  %v537 = vmul.f32 %v509, %v533
  %v538 = vmul.f32 %v510, %v534
  %v539 = vmul.f32 %v511, %v535
  %v540 = vmul.f32 %v512, %v536
  %v541 = vld [vmem:[%s10] sm:$0x1]
  %v543 = vlaneseq
  %v544 = vshrl.u32 %v543, 7
  %v545 = vsub.s32 0, %v544
  %v546 = vrot.slane %v541, %v545
  %v548 = vmul.f32 %v537, %v546
  %v549 = vmul.f32 %v538, %v546
  %v550 = vmul.f32 %v539, %v546
  %v551 = vmul.f32 %v540, %v546
  %v552 = vld [vmem:[%s11] sm:$0x1]
  %v554 = vlaneseq
  %v555 = vshrl.u32 %v554, 7
  %v556 = vsub.s32 0, %v555
  %v557 = vrot.slane %v552, %v556
  %v559 = vadd.f32 %v548, %v557
  %v560 = vadd.f32 %v549, %v557
  %v561 = vadd.f32 %v550, %v557
  %v562 = vadd.f32 %v551, %v557
  %563 = vst [vmem:[%s12] sm:$0xff] %v559
  %564 = vst [vmem:[%s12 + $0x8] sm:$0xff] %v560
  %565 = vst [vmem:[%s12 + $0x10] sm:$0xff] %v561
  %566 = vst [vmem:[%s12 + $0x18] sm:$0xff] %v562
  // Predicated region
  $region50: #{encoder_forward.9} parent=0 // pred_check
    _
  $region51: #{encoder_forward.9} parent=0 // pred_check_branch
    %568 = sbr.rel (0) target = $region53
  $region52: #{encoder_forward.9} parent=0 // pred_region
    _
  $region53: #{encoder_forward.9} parent=0 // pred_fallthru
    _
  // Predicated region
  $region54: #{encoder_forward.9} parent=0 // pred_check
    _
  $region55: #{encoder_forward.9} parent=0 // pred_check_branch
    %570 = sbr.rel (0) target = $region57
  $region56: #{encoder_forward.9} parent=0 // pred_region
    _
  $region57: #{encoder_forward.9} parent=0 // pred_fallthru
    _

// kernel: encoder_forward.8
$region0: #{encoder_forward.8}
  #allocation0 [shape = 'u32[]', space=smem, size = 0x4, offset = 0x4, fixed_abs, tag = 'smem constant byte address 0x4 - core index']
  #allocation1 [shape = 'u32[144,128]{1,0:T(1,128)}', space=vmem, size = 0x12000, scoped, tag = 'internal scratch']
  %s0 = inlined_call_operand.vmem [shape: f32[16,1,16], index: 0, kind: input, shape index: {}]
  %s1 = inlined_call_operand.vmem [shape: f32[16,16,16], index: 1, kind: input, shape index: {}]
  %s2 = inlined_call_operand.vmem [shape: f32[16,16,16], index: 2, kind: input, shape index: {}]
  %s3 = inlined_call_operand.vmem [shape: f32[16,16,16], index: 3, kind: input, shape index: {}]
  %s4 = inlined_call_operand.vmem [shape: f32[16,16,16], index: 4, kind: output, shape index: {0}]
  %s5 = inlined_call_operand.hbm [shape: f32[16,16,16], index: 5, kind: output, shape index: {1}]
  %6 = xla_tuple %s4, %s5
  %s7 = sld [smem:[#allocation0]]
  $region57: #{encoder_forward.8} parent=0
    _
  %s9 = ssub.s32 1, %s7
  %s10 = scalar_select 0, %s9, %s7
  $region1: #{encoder_forward.8} parent=0
    #allocation2 [shape = 'u8[131072]{0}', space=vmem, size = 0x20000, scoped, tag = 'output window, operand 1']
    #allocation3 [shape = 's32[2]{0}', space=sflag, size = 0x8, scoped, tag = 'scoped memory for encoder_forward.8']
    %11 = vsyncpa [#allocation3], 0
    %s12 = scalar_lea.sflag [#allocation3], 1
    %13 = vsyncpa %s12, 0
    loop: start=0, step=1, limit=4
    $region2: #{encoder_forward.8} parent=1 // loop_pre_header
      _
    $region3: #{encoder_forward.8} parent=1 // loop_header
      %s15 = sphi 0, %s19
      %p16 = scmp.ge.s32.totalorder %s15, 4
      %s25 = sphi 0, %s27
      %s28 = sphi 0, %s25
      %s29 = sphi 0, %s28
      %s45 = sphi 0, %s29
      %s51 = sphi 0, %s53
      %s54 = sphi 0, %s51
      %s55 = sphi 0, %s54
      %s71 = sphi 0, %s55
      %s77 = sphi 0, %s79
      %s80 = sphi 0, %s77
      %s81 = sphi 0, %s80
      %s97 = sphi 0, %s81
      %s103 = sphi 0, %s105
      %s106 = sphi 0, %s103
      %s107 = sphi 0, %s106
      %s123 = sphi 0, %s107
      %s129 = sphi 0, %s131
      %s132 = sphi 0, %s129
      %s133 = sphi 0, %s132
      %s149 = sphi 0, %s133
      %s155 = sphi 0, %s157
      %s158 = sphi 0, %s155
      %s159 = sphi 0, %s158
      %s175 = sphi 0, %s159
    $region4: #{encoder_forward.8} parent=1 // loop_header_branch
      %18 = sbr.rel (%p16) target = $region8
    $region5: #{encoder_forward.8} parent=1 // loop_body
      %s20 = ssub.s32 %s15, 1
      %s21 = ssub.s32 %s15, 2
      %s22 = sadd.s32 %s15, 1
      %s23 = ssub.s32 %s15, %s22
      %p24 = scmp.eq.s32.totalorder %s23, 0
      %s26 = sadd.s32 %s25, 1
      %s27 = scalar_select %p24, %s25, %s26
      %p30 = pneg %p24
      %p31 = scmp.eq.s32.totalorder %s15, 1
      %p32 = por %p30, %p31
      %p33 = scmp.ne.s32.totalorder %s25, %s28
      %p34 = scmp.eq.s32.totalorder %s15, 0
      %p35 = por %p33, %p34
      %p36 = scmp.ne.s32.totalorder %s25, %s28
      %p37 = scmp.eq.s32.totalorder %s20, 1
      %p38 = por %p36, %p37
      %p39 = scmp.ne.s32.totalorder %s28, %s29
      %p40 = scmp.eq.s32.totalorder %s20, 0
      %p41 = por %p39, %p40
      %p42 = scmp.ne.s32.totalorder %s28, %s29
      %p43 = scmp.eq.s32.totalorder %s21, 1
      %p44 = por %p42, %p43
      %p46 = scmp.ne.s32.totalorder %s29, %s45
      %p47 = scmp.eq.s32.totalorder %s21, 0
      %p48 = por %p46, %p47
      %s49 = ssub.s32 %s15, %s22
      %p50 = scmp.eq.s32.totalorder %s49, 0
      %s52 = sadd.s32 %s51, 1
      %s53 = scalar_select %p50, %s51, %s52
      %p56 = pneg %p50
      %p57 = scmp.eq.s32.totalorder %s15, 1
      %p58 = por %p56, %p57
      %p59 = scmp.ne.s32.totalorder %s51, %s54
      %p60 = scmp.eq.s32.totalorder %s15, 0
      %p61 = por %p59, %p60
      %p62 = scmp.ne.s32.totalorder %s51, %s54
      %p63 = scmp.eq.s32.totalorder %s20, 1
      %p64 = por %p62, %p63
      %p65 = scmp.ne.s32.totalorder %s54, %s55
      %p66 = scmp.eq.s32.totalorder %s20, 0
      %p67 = por %p65, %p66
      %p68 = scmp.ne.s32.totalorder %s54, %s55
      %p69 = scmp.eq.s32.totalorder %s21, 1
      %p70 = por %p68, %p69
      %p72 = scmp.ne.s32.totalorder %s55, %s71
      %p73 = scmp.eq.s32.totalorder %s21, 0
      %p74 = por %p72, %p73
      %s75 = ssub.s32 %s15, %s22
      %p76 = scmp.eq.s32.totalorder %s75, 0
      %s78 = sadd.s32 %s77, 1
      %s79 = scalar_select %p76, %s77, %s78
      %p82 = pneg %p76
      %p83 = scmp.eq.s32.totalorder %s15, 1
      %p84 = por %p82, %p83
      %p85 = scmp.ne.s32.totalorder %s77, %s80
      %p86 = scmp.eq.s32.totalorder %s15, 0
      %p87 = por %p85, %p86
      %p88 = scmp.ne.s32.totalorder %s77, %s80
      %p89 = scmp.eq.s32.totalorder %s20, 1
      %p90 = por %p88, %p89
      %p91 = scmp.ne.s32.totalorder %s80, %s81
      %p92 = scmp.eq.s32.totalorder %s20, 0
      %p93 = por %p91, %p92
      %p94 = scmp.ne.s32.totalorder %s80, %s81
      %p95 = scmp.eq.s32.totalorder %s21, 1
      %p96 = por %p94, %p95
      %p98 = scmp.ne.s32.totalorder %s81, %s97
      %p99 = scmp.eq.s32.totalorder %s21, 0
      %p100 = por %p98, %p99
      %s101 = ssub.s32 %s15, %s22
      %p102 = scmp.eq.s32.totalorder %s101, 0
      %s104 = sadd.s32 %s103, 1
      %s105 = scalar_select %p102, %s103, %s104
      %p108 = pneg %p102
      %p109 = scmp.eq.s32.totalorder %s15, 1
      %p110 = por %p108, %p109
      %p111 = scmp.ne.s32.totalorder %s103, %s106
      %p112 = scmp.eq.s32.totalorder %s15, 0
      %p113 = por %p111, %p112
      %p114 = scmp.ne.s32.totalorder %s103, %s106
      %p115 = scmp.eq.s32.totalorder %s20, 1
      %p116 = por %p114, %p115
      %p117 = scmp.ne.s32.totalorder %s106, %s107
      %p118 = scmp.eq.s32.totalorder %s20, 0
      %p119 = por %p117, %p118
      %p120 = scmp.ne.s32.totalorder %s106, %s107
      %p121 = scmp.eq.s32.totalorder %s21, 1
      %p122 = por %p120, %p121
      %p124 = scmp.ne.s32.totalorder %s107, %s123
      %p125 = scmp.eq.s32.totalorder %s21, 0
      %p126 = por %p124, %p125
      %s127 = ssub.s32 %s15, %s22
      %p128 = scmp.eq.s32.totalorder %s127, 0
      %s130 = sadd.s32 %s129, 1
      %s131 = scalar_select %p128, %s129, %s130
      %p134 = pneg %p128
      %p135 = scmp.eq.s32.totalorder %s15, 1
      %p136 = por %p134, %p135
      %p137 = scmp.ne.s32.totalorder %s129, %s132
      %p138 = scmp.eq.s32.totalorder %s15, 0
      %p139 = por %p137, %p138
      %p140 = scmp.ne.s32.totalorder %s129, %s132
      %p141 = scmp.eq.s32.totalorder %s20, 1
      %p142 = por %p140, %p141
      %p143 = scmp.ne.s32.totalorder %s132, %s133
      %p144 = scmp.eq.s32.totalorder %s20, 0
      %p145 = por %p143, %p144
      %p146 = scmp.ne.s32.totalorder %s132, %s133
      %p147 = scmp.eq.s32.totalorder %s21, 1
      %p148 = por %p146, %p147
      %p150 = scmp.ne.s32.totalorder %s133, %s149
      %p151 = scmp.eq.s32.totalorder %s21, 0
      %p152 = por %p150, %p151
      %s153 = ssub.s32 %s15, %s22
      %p154 = scmp.eq.s32.totalorder %s153, 0
      %s156 = sadd.s32 %s155, 1
      %s157 = scalar_select %p154, %s155, %s156
      %p160 = pneg %p154
      %p161 = scmp.eq.s32.totalorder %s15, 1
      %p162 = por %p160, %p161
      %p163 = scmp.ne.s32.totalorder %s155, %s158
      %p164 = scmp.eq.s32.totalorder %s15, 0
      %p165 = por %p163, %p164
      %p166 = scmp.ne.s32.totalorder %s155, %s158
      %p167 = scmp.eq.s32.totalorder %s20, 1
      %p168 = por %p166, %p167
      %p169 = scmp.ne.s32.totalorder %s158, %s159
      %p170 = scmp.eq.s32.totalorder %s20, 0
      %p171 = por %p169, %p170
      %p172 = scmp.ne.s32.totalorder %s158, %s159
      %p173 = scmp.eq.s32.totalorder %s21, 1
      %p174 = por %p172, %p173
      %p176 = scmp.ne.s32.totalorder %s159, %s175
      %p177 = scmp.eq.s32.totalorder %s21, 0
      %p178 = por %p176, %p177
      %p179 = scmp.le.s32.totalorder 1, %s15
      %p180 = scmp.lt.s32.totalorder %s15, 3
      %p181 = pnand %p179, %p180
      %p182 = pneg %p181
      // Predicated region
      $region9: #{encoder_forward.8} parent=5 // pred_check
        _
      $region10: #{encoder_forward.8} parent=5 // pred_check_branch
        %184 = sbr.rel (%p181) target = $region12
      $region11: #{encoder_forward.8} parent=5 // pred_region
        %s185 = ssub.s32 %s15, 1
      $region12: #{encoder_forward.8} parent=5 // pred_fallthru
        _
      %p186 = scmp.lt.s32.totalorder %s15, 2
      // Predicated region
      $region13: #{encoder_forward.8} parent=5 // pred_check
        %p187 = pneg %p186
      $region14: #{encoder_forward.8} parent=5 // pred_check_branch
        %189 = sbr.rel (%p187) target = $region16
      $region15: #{encoder_forward.8} parent=5 // pred_region
        // Predicated region
        $region17: #{encoder_forward.8} parent=15 // pred_check
          %p190 = pneg %p35
        $region18: #{encoder_forward.8} parent=15 // pred_check_branch
          %192 = sbr.rel (%p190) target = $region20
        $region19: #{encoder_forward.8} parent=15 // pred_region
          %s193 = smul.u32 8, %s15
          %p194 = scmp.lt.s32.totalorder %s193, 15
          %s195 = scalar_select %p194, %s193, 15
          %s196 = scalar_lea.vmem %s0, %s195
          %s197 = smul.u32 8, %s15
        $region20: #{encoder_forward.8} parent=15 // pred_fallthru
          _
        // Predicated region
        $region21: #{encoder_forward.8} parent=15 // pred_check
          %p198 = pneg %p61
        $region22: #{encoder_forward.8} parent=15 // pred_check_branch
          %200 = sbr.rel (%p198) target = $region24
        $region23: #{encoder_forward.8} parent=15 // pred_region
          %s201 = smul.u32 8, %s15
          %p202 = scmp.lt.s32.totalorder %s201, 15
          %s203 = scalar_select %p202, %s201, 15
          %s204 = smul.addr %s203, 2
          %s205 = smul.addr %s204, 8
          %s206 = scalar_lea.vmem %s1, %s205
          %s207 = smul.u32 8, %s15
        $region24: #{encoder_forward.8} parent=15 // pred_fallthru
          _
        // Predicated region
        $region25: #{encoder_forward.8} parent=15 // pred_check
          %p208 = pneg %p87
        $region26: #{encoder_forward.8} parent=15 // pred_check_branch
          %210 = sbr.rel (%p208) target = $region28
        $region27: #{encoder_forward.8} parent=15 // pred_region
          %s211 = smul.u32 8, %s15
          %p212 = scmp.lt.s32.totalorder %s211, 15
          %s213 = scalar_select %p212, %s211, 15
          %s214 = smul.addr %s213, 2
          %s215 = smul.addr %s214, 8
          %s216 = scalar_lea.vmem %s2, %s215
          %s217 = smul.u32 8, %s15
        $region28: #{encoder_forward.8} parent=15 // pred_fallthru
          _
        // Predicated region
        $region29: #{encoder_forward.8} parent=15 // pred_check
          %p218 = pneg %p113
        $region30: #{encoder_forward.8} parent=15 // pred_check_branch
          %220 = sbr.rel (%p218) target = $region32
        $region31: #{encoder_forward.8} parent=15 // pred_region
          %s221 = smul.u32 8, %s15
          %p222 = scmp.lt.s32.totalorder %s221, 15
          %s223 = scalar_select %p222, %s221, 15
          %s224 = smul.addr %s223, 2
          %s225 = smul.addr %s224, 8
          %s226 = scalar_lea.vmem %s3, %s225
          %s227 = smul.u32 8, %s15
        $region32: #{encoder_forward.8} parent=15 // pred_fallthru
          _
      $region16: #{encoder_forward.8} parent=5 // pred_fallthru
        _
      %p228 = scmp.le.s32.totalorder 1, %s15
      %p229 = scmp.lt.s32.totalorder %s15, 3
      %p230 = pnand %p228, %p229
      %p231 = pneg %p230
      // Predicated region
      $region33: #{encoder_forward.8} parent=5 // pred_check
        _
      $region34: #{encoder_forward.8} parent=5 // pred_check_branch
        %233 = sbr.rel (%p230) target = $region36
      $region35: #{encoder_forward.8} parent=5 // pred_region
        %s234 = ssub.s32 %s15, 1
        %s235 = smul.u32 8, %s20
        %p236 = scmp.lt.s32.totalorder %s235, 15
        %s237 = scalar_select %p236, %s235, 15
        %s238 = scalar_lea.vmem %s0, %s237
        %p239 = pneg %p41
        %p240 = pneg %p38
        %s241 = smul.u32 8, %s20
        %p242 = scmp.lt.s32.totalorder %s241, 15
        %s243 = scalar_select %p242, %s241, 15
        %s244 = smul.addr %s243, 2
        %s245 = smul.addr %s244, 8
        %s246 = scalar_lea.vmem %s1, %s245
        %p247 = pneg %p67
        %p248 = pneg %p64
        %s249 = smul.u32 8, %s20
        %p250 = scmp.lt.s32.totalorder %s249, 15
        %s251 = scalar_select %p250, %s249, 15
        %s252 = smul.addr %s251, 2
        %s253 = smul.addr %s252, 8
        %s254 = scalar_lea.vmem %s2, %s253
        %p255 = pneg %p93
        %p256 = pneg %p90
        %s257 = smul.u32 8, %s20
        %p258 = scmp.lt.s32.totalorder %s257, 15
        %s259 = scalar_select %p258, %s257, 15
        %s260 = smul.addr %s259, 2
        %s261 = smul.addr %s260, 8
        %s262 = scalar_lea.vmem %s3, %s261
        %p263 = pneg %p119
        %p264 = pneg %p116
        %p265 = pneg %p145
        %p266 = pneg %p142
        %s267 = smul.u32 8, %s20
        %p268 = scmp.lt.s32.totalorder %s267, 15
        %s269 = scalar_select %p268, %s267, 15
        %s270 = smul.addr %s269, 2
        %s271 = smul.addr %s270, 8
        %s272 = scalar_lea.vmem %s4, %s271
        %p273 = pneg %p171
        %p274 = pneg %p168
        %s275 = sand.u32 %s158, 1
        %s276 = scalar_lea.sflag [#allocation3], %s275
        %s277 = sand.u32 %s158, 1
        %s278 = smul.addr %s277, 128
        %s279 = scalar_lea.vmem [#allocation2], %s278
        %s280 = smul.u32 8, %s20
        %p281 = scmp.lt.s32.totalorder %s280, 15
        %s282 = scalar_select %p281, %s280, 15
        %s283 = scalar_lea.vmem %s0, %s282
        %s284 = smul.u32 8, %s20
        %s285 = smul.u32 8, %s20
        %p286 = scmp.lt.s32.totalorder %s285, 15
        %s287 = scalar_select %p286, %s285, 15
        %s288 = smul.addr %s287, 2
        %s289 = smul.addr %s288, 8
        %s290 = scalar_lea.vmem %s1, %s289
        %s291 = smul.u32 8, %s20
        %s292 = smul.u32 8, %s20
        %p293 = scmp.lt.s32.totalorder %s292, 15
        %s294 = scalar_select %p293, %s292, 15
        %s295 = smul.addr %s294, 2
        %s296 = smul.addr %s295, 8
        %s297 = scalar_lea.vmem %s2, %s296
        %s298 = smul.u32 8, %s20
        %s299 = smul.u32 8, %s20
        %p300 = scmp.lt.s32.totalorder %s299, 15
        %s301 = scalar_select %p300, %s299, 15
        %s302 = smul.addr %s301, 2
        %s303 = smul.addr %s302, 8
        %s304 = scalar_lea.vmem %s3, %s303
        %s305 = smul.u32 8, %s20
        %s306 = smul.u32 8, %s20
        %p307 = scmp.lt.s32.totalorder %s306, 15
        %s308 = scalar_select %p307, %s306, 15
        %s309 = smul.addr %s308, 2
        %s310 = smul.addr %s309, 8
        %s311 = scalar_lea.vmem %s4, %s310
        %s312 = smul.u32 8, %s20
        %s313 = smul.u32 8, %s20
        %v314 = vld [vmem:[%s290] sm:$0xff]
        %v315 = vld [vmem:[%s290 + $0x8] sm:$0xff]
        %v316 = vld [vmem:[%s290 + $0x10] sm:$0xff]
        %v317 = vld [vmem:[%s290 + $0x18] sm:$0xff]
        %v318 = vld [vmem:[%s290 + $0x20] sm:$0xff]
        %v319 = vld [vmem:[%s290 + $0x28] sm:$0xff]
        %v320 = vld [vmem:[%s290 + $0x30] sm:$0xff]
        %v321 = vld [vmem:[%s290 + $0x38] sm:$0xff]
        %v322 = vld [vmem:[%s290 + $0x40] sm:$0xff]
        %v323 = vld [vmem:[%s290 + $0x48] sm:$0xff]
        %v324 = vld [vmem:[%s290 + $0x50] sm:$0xff]
        %v325 = vld [vmem:[%s290 + $0x58] sm:$0xff]
        %v326 = vld [vmem:[%s290 + $0x60] sm:$0xff]
        %v327 = vld [vmem:[%s290 + $0x68] sm:$0xff]
        %v328 = vld [vmem:[%s290 + $0x70] sm:$0xff]
        %v329 = vld [vmem:[%s290 + $0x78] sm:$0xff]
        %v330 = vld [vmem:[%s297] sm:$0xff]
        %v331 = vld [vmem:[%s297 + $0x8] sm:$0xff]
        %v332 = vld [vmem:[%s297 + $0x10] sm:$0xff]
        %v333 = vld [vmem:[%s297 + $0x18] sm:$0xff]
        %v334 = vld [vmem:[%s297 + $0x20] sm:$0xff]
        %v335 = vld [vmem:[%s297 + $0x28] sm:$0xff]
        %v336 = vld [vmem:[%s297 + $0x30] sm:$0xff]
        %v337 = vld [vmem:[%s297 + $0x38] sm:$0xff]
        %v338 = vld [vmem:[%s297 + $0x40] sm:$0xff]
        %v339 = vld [vmem:[%s297 + $0x48] sm:$0xff]
        %v340 = vld [vmem:[%s297 + $0x50] sm:$0xff]
        %v341 = vld [vmem:[%s297 + $0x58] sm:$0xff]
        %v342 = vld [vmem:[%s297 + $0x60] sm:$0xff]
        %v343 = vld [vmem:[%s297 + $0x68] sm:$0xff]
        %v344 = vld [vmem:[%s297 + $0x70] sm:$0xff]
        %v345 = vld [vmem:[%s297 + $0x78] sm:$0xff]
        %v346 = vld [vmem:[%s304] sm:$0xff]
        %v347 = vld [vmem:[%s304 + $0x8] sm:$0xff]
        %v348 = vld [vmem:[%s304 + $0x10] sm:$0xff]
        %v349 = vld [vmem:[%s304 + $0x18] sm:$0xff]
        %v350 = vld [vmem:[%s304 + $0x20] sm:$0xff]
        %v351 = vld [vmem:[%s304 + $0x28] sm:$0xff]
        %v352 = vld [vmem:[%s304 + $0x30] sm:$0xff]
        %v353 = vld [vmem:[%s304 + $0x38] sm:$0xff]
        %v354 = vld [vmem:[%s304 + $0x40] sm:$0xff]
        %v355 = vld [vmem:[%s304 + $0x48] sm:$0xff]
        %v356 = vld [vmem:[%s304 + $0x50] sm:$0xff]
        %v357 = vld [vmem:[%s304 + $0x58] sm:$0xff]
        %v358 = vld [vmem:[%s304 + $0x60] sm:$0xff]
        %v359 = vld [vmem:[%s304 + $0x68] sm:$0xff]
        %v360 = vld [vmem:[%s304 + $0x70] sm:$0xff]
        %v361 = vld [vmem:[%s304 + $0x78] sm:$0xff]
        %vm362 = vcmask 130048
        %v364 = vsel %vm362, %v314, 0
        %v367 = vsel %vm362, %v315, 0
        %v370 = vsel %vm362, %v330, 0
        %v373 = vsel %vm362, %v331, 0
        %375 = vmatprep.subr.mxu0 0.0
        %376 = vmatpush1.xpose.msra.mxu0 0.0
        %377 = vmatprep.subr.mxu0 0.0
        %378 = vmatpush1.xpose.msra.mxu0 0.0
        %379 = vmatprep.subr.mxu0 0.0
        %380 = vmatpush1.xpose.msra.mxu0 0.0
        %381 = vmatprep.subr.mxu0 0.0
        %382 = vmatpush1.xpose.msra.mxu0 0.0
        %383 = vmatprep.subr.mxu0 0.0
        %384 = vmatpush1.xpose.msra.mxu0 0.0
        %385 = vmatprep.subr.mxu0 0.0
        %386 = vmatpush1.xpose.msra.mxu0 0.0
        %387 = vmatprep.subr.mxu0 0.0
        %388 = vmatpush1.xpose.msra.mxu0 0.0
        %389 = vmatprep.subr.mxu0 0.0
        %390 = vmatpush1.xpose.msra.mxu0 0.0
        %391 = vmatprep.subr.mxu0 0.0
        %392 = vmatpush1.xpose.msra.mxu0 0.0
        %393 = vmatprep.subr.mxu0 0.0
        %394 = vmatpush1.xpose.msra.mxu0 0.0
        %395 = vmatprep.subr.mxu0 0.0
        %396 = vmatpush1.xpose.msra.mxu0 0.0
        %397 = vmatprep.subr.mxu0 0.0
        %398 = vmatpush1.xpose.msra.mxu0 0.0
        %399 = vmatprep.subr.mxu0 0.0
        %400 = vmatpush1.xpose.msra.mxu0 0.0
        %401 = vmatprep.subr.mxu0 0.0
        %402 = vmatpush1.xpose.msra.mxu0 0.0
        %403 = vmatprep.subr.mxu0 0.0
        %404 = vmatpush1.xpose.msra.mxu0 %v373
        %405 = vmatprep.subr.mxu0 0.0
        %406 = vmatpush1.xpose.msra.mxu0 %v370
        %407 = vmatprep.subr.mxu0 0.0
        %408 = vmatpush2.xpose.msra.mxu0 0.0
        %409 = vmatprep.subr.mxu0 0.0
        %410 = vmatpush2.xpose.msra.mxu0 0.0
        %411 = vmatprep.subr.mxu0 0.0
        %412 = vmatpush2.xpose.msra.mxu0 0.0
        %413 = vmatprep.subr.mxu0 0.0
        %414 = vmatpush2.xpose.msra.mxu0 0.0
        %415 = vmatprep.subr.mxu0 0.0
        %416 = vmatpush2.xpose.msra.mxu0 0.0
        %417 = vmatprep.subr.mxu0 0.0
        %418 = vmatpush2.xpose.msra.mxu0 0.0
        %419 = vmatprep.subr.mxu0 0.0
        %420 = vmatpush2.xpose.msra.mxu0 0.0
        %421 = vmatprep.subr.mxu0 0.0
        %422 = vmatpush2.xpose.msra.mxu0 0.0
        %423 = vmatprep.subr.mxu0 0.0
        %424 = vmatpush2.xpose.msra.mxu0 0.0
        %425 = vmatprep.subr.mxu0 0.0
        %426 = vmatpush2.xpose.msra.mxu0 0.0
        %427 = vmatprep.subr.mxu0 0.0
        %428 = vmatpush2.xpose.msra.mxu0 0.0
        %429 = vmatprep.subr.mxu0 0.0
        %430 = vmatpush2.xpose.msra.mxu0 0.0
        %431 = vmatprep.subr.mxu0 0.0
        %432 = vmatpush2.xpose.msra.mxu0 0.0
        %433 = vmatprep.subr.mxu0 0.0
        %434 = vmatpush2.xpose.msra.mxu0 0.0
        %435 = vmatprep.subr.mxu0 0.0
        %436 = vmatpush2.xpose.msra.mxu0 0.0
        %437 = vmatprep.subr.mxu0 0.0
        %438 = vmatpush2.xpose.msra.mxu0 0.0
        %439 = vmatprep.mubr.f32.mxu0 0.0
        %440 = vmatmul.mubr.f32.gmra.mxu0 %v364
        %v441 = vpop.f32.mrf.mxu0
        %v442 = vadd.f32 0.0, %v441
        %v443 = vpop.f32.mrf.mxu0
        %444 = vmatprep.mubr.f32.mxu0 0.0
        %445 = vmatmul.mubr.f32.gmra.mxu0 %v367
        %v446 = vpop.f32.mrf.mxu0
        %v447 = vadd.f32 0.0, %v446
        %v448 = vpop.f32.mrf.mxu0
        %449 = vdwg.mxu0
        %v451 = vsel %vm362, %v316, 0
        %v454 = vsel %vm362, %v317, 0
        %v457 = vsel %vm362, %v332, 0
        %v460 = vsel %vm362, %v333, 0
        %462 = vmatprep.subr.mxu0 0.0
        %463 = vmatpush1.xpose.msra.mxu0 0.0
        %464 = vmatprep.subr.mxu0 0.0
        %465 = vmatpush1.xpose.msra.mxu0 0.0
        %466 = vmatprep.subr.mxu0 0.0
        %467 = vmatpush1.xpose.msra.mxu0 0.0
        %468 = vmatprep.subr.mxu0 0.0
        %469 = vmatpush1.xpose.msra.mxu0 0.0
        %470 = vmatprep.subr.mxu0 0.0
        %471 = vmatpush1.xpose.msra.mxu0 0.0
        %472 = vmatprep.subr.mxu0 0.0
        %473 = vmatpush1.xpose.msra.mxu0 0.0
        %474 = vmatprep.subr.mxu0 0.0
        %475 = vmatpush1.xpose.msra.mxu0 0.0
        %476 = vmatprep.subr.mxu0 0.0
        %477 = vmatpush1.xpose.msra.mxu0 0.0
        %478 = vmatprep.subr.mxu0 0.0
        %479 = vmatpush1.xpose.msra.mxu0 0.0
        %480 = vmatprep.subr.mxu0 0.0
        %481 = vmatpush1.xpose.msra.mxu0 0.0
        %482 = vmatprep.subr.mxu0 0.0
        %483 = vmatpush1.xpose.msra.mxu0 0.0
        %484 = vmatprep.subr.mxu0 0.0
        %485 = vmatpush1.xpose.msra.mxu0 0.0
        %486 = vmatprep.subr.mxu0 0.0
        %487 = vmatpush1.xpose.msra.mxu0 0.0
        %488 = vmatprep.subr.mxu0 0.0
        %489 = vmatpush1.xpose.msra.mxu0 0.0
        %490 = vmatprep.subr.mxu0 0.0
        %491 = vmatpush1.xpose.msra.mxu0 %v460
        %492 = vmatprep.subr.mxu0 0.0
        %493 = vmatpush1.xpose.msra.mxu0 %v457
        %494 = vmatprep.subr.mxu0 0.0
        %495 = vmatpush2.xpose.msra.mxu0 0.0
        %496 = vmatprep.subr.mxu0 0.0
        %497 = vmatpush2.xpose.msra.mxu0 0.0
        %498 = vmatprep.subr.mxu0 0.0
        %499 = vmatpush2.xpose.msra.mxu0 0.0
        %500 = vmatprep.subr.mxu0 0.0
        %501 = vmatpush2.xpose.msra.mxu0 0.0
        %502 = vmatprep.subr.mxu0 0.0
        %503 = vmatpush2.xpose.msra.mxu0 0.0
        %504 = vmatprep.subr.mxu0 0.0
        %505 = vmatpush2.xpose.msra.mxu0 0.0
        %506 = vmatprep.subr.mxu0 0.0
        %507 = vmatpush2.xpose.msra.mxu0 0.0
        %508 = vmatprep.subr.mxu0 0.0
        %509 = vmatpush2.xpose.msra.mxu0 0.0
        %510 = vmatprep.subr.mxu0 0.0
        %511 = vmatpush2.xpose.msra.mxu0 0.0
        %512 = vmatprep.subr.mxu0 0.0
        %513 = vmatpush2.xpose.msra.mxu0 0.0
        %514 = vmatprep.subr.mxu0 0.0
        %515 = vmatpush2.xpose.msra.mxu0 0.0
        %516 = vmatprep.subr.mxu0 0.0
        %517 = vmatpush2.xpose.msra.mxu0 0.0
        %518 = vmatprep.subr.mxu0 0.0
        %519 = vmatpush2.xpose.msra.mxu0 0.0
        %520 = vmatprep.subr.mxu0 0.0
        %521 = vmatpush2.xpose.msra.mxu0 0.0
        %522 = vmatprep.subr.mxu0 0.0
        %523 = vmatpush2.xpose.msra.mxu0 0.0
        %524 = vmatprep.subr.mxu0 0.0
        %525 = vmatpush2.xpose.msra.mxu0 0.0
        %526 = vmatprep.mubr.f32.mxu0 0.0
        %527 = vmatmul.mubr.f32.gmra.mxu0 %v451
        %v528 = vpop.f32.mrf.mxu0
        %v529 = vadd.f32 0.0, %v528
        %v530 = vpop.f32.mrf.mxu0
        %531 = vmatprep.mubr.f32.mxu0 0.0
        %532 = vmatmul.mubr.f32.gmra.mxu0 %v454
        %v533 = vpop.f32.mrf.mxu0
        %v534 = vadd.f32 0.0, %v533
        %v535 = vpop.f32.mrf.mxu0
        %536 = vdwg.mxu0
        %v538 = vsel %vm362, %v318, 0
        %v541 = vsel %vm362, %v319, 0
        %v544 = vsel %vm362, %v334, 0
        %v547 = vsel %vm362, %v335, 0
        %549 = vmatprep.subr.mxu0 0.0
        %550 = vmatpush1.xpose.msra.mxu0 0.0
        %551 = vmatprep.subr.mxu0 0.0
        %552 = vmatpush1.xpose.msra.mxu0 0.0
        %553 = vmatprep.subr.mxu0 0.0
        %554 = vmatpush1.xpose.msra.mxu0 0.0
        %555 = vmatprep.subr.mxu0 0.0
        %556 = vmatpush1.xpose.msra.mxu0 0.0
        %557 = vmatprep.subr.mxu0 0.0
        %558 = vmatpush1.xpose.msra.mxu0 0.0
        %559 = vmatprep.subr.mxu0 0.0
        %560 = vmatpush1.xpose.msra.mxu0 0.0
        %561 = vmatprep.subr.mxu0 0.0
        %562 = vmatpush1.xpose.msra.mxu0 0.0
        %563 = vmatprep.subr.mxu0 0.0
        %564 = vmatpush1.xpose.msra.mxu0 0.0
        %565 = vmatprep.subr.mxu0 0.0
        %566 = vmatpush1.xpose.msra.mxu0 0.0
        %567 = vmatprep.subr.mxu0 0.0
        %568 = vmatpush1.xpose.msra.mxu0 0.0
        %569 = vmatprep.subr.mxu0 0.0
        %570 = vmatpush1.xpose.msra.mxu0 0.0
        %571 = vmatprep.subr.mxu0 0.0
        %572 = vmatpush1.xpose.msra.mxu0 0.0
        %573 = vmatprep.subr.mxu0 0.0
        %574 = vmatpush1.xpose.msra.mxu0 0.0
        %575 = vmatprep.subr.mxu0 0.0
        %576 = vmatpush1.xpose.msra.mxu0 0.0
        %577 = vmatprep.subr.mxu0 0.0
        %578 = vmatpush1.xpose.msra.mxu0 %v547
        %579 = vmatprep.subr.mxu0 0.0
        %580 = vmatpush1.xpose.msra.mxu0 %v544
        %581 = vmatprep.subr.mxu0 0.0
        %582 = vmatpush2.xpose.msra.mxu0 0.0
        %583 = vmatprep.subr.mxu0 0.0
        %584 = vmatpush2.xpose.msra.mxu0 0.0
        %585 = vmatprep.subr.mxu0 0.0
        %586 = vmatpush2.xpose.msra.mxu0 0.0
        %587 = vmatprep.subr.mxu0 0.0
        %588 = vmatpush2.xpose.msra.mxu0 0.0
        %589 = vmatprep.subr.mxu0 0.0
        %590 = vmatpush2.xpose.msra.mxu0 0.0
        %591 = vmatprep.subr.mxu0 0.0
        %592 = vmatpush2.xpose.msra.mxu0 0.0
        %593 = vmatprep.subr.mxu0 0.0
        %594 = vmatpush2.xpose.msra.mxu0 0.0
        %595 = vmatprep.subr.mxu0 0.0
        %596 = vmatpush2.xpose.msra.mxu0 0.0
        %597 = vmatprep.subr.mxu0 0.0
        %598 = vmatpush2.xpose.msra.mxu0 0.0
        %599 = vmatprep.subr.mxu0 0.0
        %600 = vmatpush2.xpose.msra.mxu0 0.0
        %601 = vmatprep.subr.mxu0 0.0
        %602 = vmatpush2.xpose.msra.mxu0 0.0
        %603 = vmatprep.subr.mxu0 0.0
        %604 = vmatpush2.xpose.msra.mxu0 0.0
        %605 = vmatprep.subr.mxu0 0.0
        %606 = vmatpush2.xpose.msra.mxu0 0.0
        %607 = vmatprep.subr.mxu0 0.0
        %608 = vmatpush2.xpose.msra.mxu0 0.0
        %609 = vmatprep.subr.mxu0 0.0
        %610 = vmatpush2.xpose.msra.mxu0 0.0
        %611 = vmatprep.subr.mxu0 0.0
        %612 = vmatpush2.xpose.msra.mxu0 0.0
        %613 = vmatprep.mubr.f32.mxu0 0.0
        %614 = vmatmul.mubr.f32.gmra.mxu0 %v538
        %v615 = vpop.f32.mrf.mxu0
        %v616 = vadd.f32 0.0, %v615
        %v617 = vpop.f32.mrf.mxu0
        %618 = vmatprep.mubr.f32.mxu0 0.0
        %619 = vmatmul.mubr.f32.gmra.mxu0 %v541
        %v620 = vpop.f32.mrf.mxu0
        %v621 = vadd.f32 0.0, %v620
        %v622 = vpop.f32.mrf.mxu0
        %623 = vdwg.mxu0
        %v625 = vsel %vm362, %v320, 0
        %v628 = vsel %vm362, %v321, 0
        %v631 = vsel %vm362, %v336, 0
        %v634 = vsel %vm362, %v337, 0
        %636 = vmatprep.subr.mxu0 0.0
        %637 = vmatpush1.xpose.msra.mxu0 0.0
        %638 = vmatprep.subr.mxu0 0.0
        %639 = vmatpush1.xpose.msra.mxu0 0.0
        %640 = vmatprep.subr.mxu0 0.0
        %641 = vmatpush1.xpose.msra.mxu0 0.0
        %642 = vmatprep.subr.mxu0 0.0
        %643 = vmatpush1.xpose.msra.mxu0 0.0
        %644 = vmatprep.subr.mxu0 0.0
        %645 = vmatpush1.xpose.msra.mxu0 0.0
        %646 = vmatprep.subr.mxu0 0.0
        %647 = vmatpush1.xpose.msra.mxu0 0.0
        %648 = vmatprep.subr.mxu0 0.0
        %649 = vmatpush1.xpose.msra.mxu0 0.0
        %650 = vmatprep.subr.mxu0 0.0
        %651 = vmatpush1.xpose.msra.mxu0 0.0
        %652 = vmatprep.subr.mxu0 0.0
        %653 = vmatpush1.xpose.msra.mxu0 0.0
        %654 = vmatprep.subr.mxu0 0.0
        %655 = vmatpush1.xpose.msra.mxu0 0.0
        %656 = vmatprep.subr.mxu0 0.0
        %657 = vmatpush1.xpose.msra.mxu0 0.0
        %658 = vmatprep.subr.mxu0 0.0
        %659 = vmatpush1.xpose.msra.mxu0 0.0
        %660 = vmatprep.subr.mxu0 0.0
        %661 = vmatpush1.xpose.msra.mxu0 0.0
        %662 = vmatprep.subr.mxu0 0.0
        %663 = vmatpush1.xpose.msra.mxu0 0.0
        %664 = vmatprep.subr.mxu0 0.0
        %665 = vmatpush1.xpose.msra.mxu0 %v634
        %666 = vmatprep.subr.mxu0 0.0
        %667 = vmatpush1.xpose.msra.mxu0 %v631
        %668 = vmatprep.subr.mxu0 0.0
        %669 = vmatpush2.xpose.msra.mxu0 0.0
        %670 = vmatprep.subr.mxu0 0.0
        %671 = vmatpush2.xpose.msra.mxu0 0.0
        %672 = vmatprep.subr.mxu0 0.0
        %673 = vmatpush2.xpose.msra.mxu0 0.0
        %674 = vmatprep.subr.mxu0 0.0
        %675 = vmatpush2.xpose.msra.mxu0 0.0
        %676 = vmatprep.subr.mxu0 0.0
        %677 = vmatpush2.xpose.msra.mxu0 0.0
        %678 = vmatprep.subr.mxu0 0.0
        %679 = vmatpush2.xpose.msra.mxu0 0.0
        %680 = vmatprep.subr.mxu0 0.0
        %681 = vmatpush2.xpose.msra.mxu0 0.0
        %682 = vmatprep.subr.mxu0 0.0
        %683 = vmatpush2.xpose.msra.mxu0 0.0
        %684 = vmatprep.subr.mxu0 0.0
        %685 = vmatpush2.xpose.msra.mxu0 0.0
        %686 = vmatprep.subr.mxu0 0.0
        %687 = vmatpush2.xpose.msra.mxu0 0.0
        %688 = vmatprep.subr.mxu0 0.0
        %689 = vmatpush2.xpose.msra.mxu0 0.0
        %690 = vmatprep.subr.mxu0 0.0
        %691 = vmatpush2.xpose.msra.mxu0 0.0
        %692 = vmatprep.subr.mxu0 0.0
        %693 = vmatpush2.xpose.msra.mxu0 0.0
        %694 = vmatprep.subr.mxu0 0.0
        %695 = vmatpush2.xpose.msra.mxu0 0.0
        %696 = vmatprep.subr.mxu0 0.0
        %697 = vmatpush2.xpose.msra.mxu0 0.0
        %698 = vmatprep.subr.mxu0 0.0
        %699 = vmatpush2.xpose.msra.mxu0 0.0
        %700 = vmatprep.mubr.f32.mxu0 0.0
        %701 = vmatmul.mubr.f32.gmra.mxu0 %v625
        %v702 = vpop.f32.mrf.mxu0
        %v703 = vadd.f32 0.0, %v702
        %v704 = vpop.f32.mrf.mxu0
        %705 = vmatprep.mubr.f32.mxu0 0.0
        %706 = vmatmul.mubr.f32.gmra.mxu0 %v628
        %v707 = vpop.f32.mrf.mxu0
        %v708 = vadd.f32 0.0, %v707
        %v709 = vpop.f32.mrf.mxu0
        %710 = vdwg.mxu0
        %v712 = vsel %vm362, %v322, 0
        %v715 = vsel %vm362, %v323, 0
        %v718 = vsel %vm362, %v338, 0
        %v721 = vsel %vm362, %v339, 0
        %723 = vmatprep.subr.mxu0 0.0
        %724 = vmatpush1.xpose.msra.mxu0 0.0
        %725 = vmatprep.subr.mxu0 0.0
        %726 = vmatpush1.xpose.msra.mxu0 0.0
        %727 = vmatprep.subr.mxu0 0.0
        %728 = vmatpush1.xpose.msra.mxu0 0.0
        %729 = vmatprep.subr.mxu0 0.0
        %730 = vmatpush1.xpose.msra.mxu0 0.0
        %731 = vmatprep.subr.mxu0 0.0
        %732 = vmatpush1.xpose.msra.mxu0 0.0
        %733 = vmatprep.subr.mxu0 0.0
        %734 = vmatpush1.xpose.msra.mxu0 0.0
        %735 = vmatprep.subr.mxu0 0.0
        %736 = vmatpush1.xpose.msra.mxu0 0.0
        %737 = vmatprep.subr.mxu0 0.0
        %738 = vmatpush1.xpose.msra.mxu0 0.0
        %739 = vmatprep.subr.mxu0 0.0
        %740 = vmatpush1.xpose.msra.mxu0 0.0
        %741 = vmatprep.subr.mxu0 0.0
        %742 = vmatpush1.xpose.msra.mxu0 0.0
        %743 = vmatprep.subr.mxu0 0.0
        %744 = vmatpush1.xpose.msra.mxu0 0.0
        %745 = vmatprep.subr.mxu0 0.0
        %746 = vmatpush1.xpose.msra.mxu0 0.0
        %747 = vmatprep.subr.mxu0 0.0
        %748 = vmatpush1.xpose.msra.mxu0 0.0
        %749 = vmatprep.subr.mxu0 0.0
        %750 = vmatpush1.xpose.msra.mxu0 0.0
        %751 = vmatprep.subr.mxu0 0.0
        %752 = vmatpush1.xpose.msra.mxu0 %v721
        %753 = vmatprep.subr.mxu0 0.0
        %754 = vmatpush1.xpose.msra.mxu0 %v718
        %755 = vmatprep.subr.mxu0 0.0
        %756 = vmatpush2.xpose.msra.mxu0 0.0
        %757 = vmatprep.subr.mxu0 0.0
        %758 = vmatpush2.xpose.msra.mxu0 0.0
        %759 = vmatprep.subr.mxu0 0.0
        %760 = vmatpush2.xpose.msra.mxu0 0.0
        %761 = vmatprep.subr.mxu0 0.0
        %762 = vmatpush2.xpose.msra.mxu0 0.0
        %763 = vmatprep.subr.mxu0 0.0
        %764 = vmatpush2.xpose.msra.mxu0 0.0
        %765 = vmatprep.subr.mxu0 0.0
        %766 = vmatpush2.xpose.msra.mxu0 0.0
        %767 = vmatprep.subr.mxu0 0.0
        %768 = vmatpush2.xpose.msra.mxu0 0.0
        %769 = vmatprep.subr.mxu0 0.0
        %770 = vmatpush2.xpose.msra.mxu0 0.0
        %771 = vmatprep.subr.mxu0 0.0
        %772 = vmatpush2.xpose.msra.mxu0 0.0
        %773 = vmatprep.subr.mxu0 0.0
        %774 = vmatpush2.xpose.msra.mxu0 0.0
        %775 = vmatprep.subr.mxu0 0.0
        %776 = vmatpush2.xpose.msra.mxu0 0.0
        %777 = vmatprep.subr.mxu0 0.0
        %778 = vmatpush2.xpose.msra.mxu0 0.0
        %779 = vmatprep.subr.mxu0 0.0
        %780 = vmatpush2.xpose.msra.mxu0 0.0
        %781 = vmatprep.subr.mxu0 0.0
        %782 = vmatpush2.xpose.msra.mxu0 0.0
        %783 = vmatprep.subr.mxu0 0.0
        %784 = vmatpush2.xpose.msra.mxu0 0.0
        %785 = vmatprep.subr.mxu0 0.0
        %786 = vmatpush2.xpose.msra.mxu0 0.0
        %787 = vmatprep.mubr.f32.mxu0 0.0
        %788 = vmatmul.mubr.f32.gmra.mxu0 %v712
        %v789 = vpop.f32.mrf.mxu0
        %v790 = vadd.f32 0.0, %v789
        %v791 = vpop.f32.mrf.mxu0
        %792 = vmatprep.mubr.f32.mxu0 0.0
        %793 = vmatmul.mubr.f32.gmra.mxu0 %v715
        %v794 = vpop.f32.mrf.mxu0
        %v795 = vadd.f32 0.0, %v794
        %v796 = vpop.f32.mrf.mxu0
        %797 = vdwg.mxu0
        %v799 = vsel %vm362, %v324, 0
        %v802 = vsel %vm362, %v325, 0
        %v805 = vsel %vm362, %v340, 0
        %v808 = vsel %vm362, %v341, 0
        %810 = vmatprep.subr.mxu0 0.0
        %811 = vmatpush1.xpose.msra.mxu0 0.0
        %812 = vmatprep.subr.mxu0 0.0
        %813 = vmatpush1.xpose.msra.mxu0 0.0
        %814 = vmatprep.subr.mxu0 0.0
        %815 = vmatpush1.xpose.msra.mxu0 0.0
        %816 = vmatprep.subr.mxu0 0.0
        %817 = vmatpush1.xpose.msra.mxu0 0.0
        %818 = vmatprep.subr.mxu0 0.0
        %819 = vmatpush1.xpose.msra.mxu0 0.0
        %820 = vmatprep.subr.mxu0 0.0
        %821 = vmatpush1.xpose.msra.mxu0 0.0
        %822 = vmatprep.subr.mxu0 0.0
        %823 = vmatpush1.xpose.msra.mxu0 0.0
        %824 = vmatprep.subr.mxu0 0.0
        %825 = vmatpush1.xpose.msra.mxu0 0.0
        %826 = vmatprep.subr.mxu0 0.0
        %827 = vmatpush1.xpose.msra.mxu0 0.0
        %828 = vmatprep.subr.mxu0 0.0
        %829 = vmatpush1.xpose.msra.mxu0 0.0
        %830 = vmatprep.subr.mxu0 0.0
        %831 = vmatpush1.xpose.msra.mxu0 0.0
        %832 = vmatprep.subr.mxu0 0.0
        %833 = vmatpush1.xpose.msra.mxu0 0.0
        %834 = vmatprep.subr.mxu0 0.0
        %835 = vmatpush1.xpose.msra.mxu0 0.0
        %836 = vmatprep.subr.mxu0 0.0
        %837 = vmatpush1.xpose.msra.mxu0 0.0
        %838 = vmatprep.subr.mxu0 0.0
        %839 = vmatpush1.xpose.msra.mxu0 %v808
        %840 = vmatprep.subr.mxu0 0.0
        %841 = vmatpush1.xpose.msra.mxu0 %v805
        %842 = vmatprep.subr.mxu0 0.0
        %843 = vmatpush2.xpose.msra.mxu0 0.0
        %844 = vmatprep.subr.mxu0 0.0
        %845 = vmatpush2.xpose.msra.mxu0 0.0
        %846 = vmatprep.subr.mxu0 0.0
        %847 = vmatpush2.xpose.msra.mxu0 0.0
        %848 = vmatprep.subr.mxu0 0.0
        %849 = vmatpush2.xpose.msra.mxu0 0.0
        %850 = vmatprep.subr.mxu0 0.0
        %851 = vmatpush2.xpose.msra.mxu0 0.0
        %852 = vmatprep.subr.mxu0 0.0
        %853 = vmatpush2.xpose.msra.mxu0 0.0
        %854 = vmatprep.subr.mxu0 0.0
        %855 = vmatpush2.xpose.msra.mxu0 0.0
        %856 = vmatprep.subr.mxu0 0.0
        %857 = vmatpush2.xpose.msra.mxu0 0.0
        %858 = vmatprep.subr.mxu0 0.0
        %859 = vmatpush2.xpose.msra.mxu0 0.0
        %860 = vmatprep.subr.mxu0 0.0
        %861 = vmatpush2.xpose.msra.mxu0 0.0
        %862 = vmatprep.subr.mxu0 0.0
        %863 = vmatpush2.xpose.msra.mxu0 0.0
        %864 = vmatprep.subr.mxu0 0.0
        %865 = vmatpush2.xpose.msra.mxu0 0.0
        %866 = vmatprep.subr.mxu0 0.0
        %867 = vmatpush2.xpose.msra.mxu0 0.0
        %868 = vmatprep.subr.mxu0 0.0
        %869 = vmatpush2.xpose.msra.mxu0 0.0
        %870 = vmatprep.subr.mxu0 0.0
        %871 = vmatpush2.xpose.msra.mxu0 0.0
        %872 = vmatprep.subr.mxu0 0.0
        %873 = vmatpush2.xpose.msra.mxu0 0.0
        %874 = vmatprep.mubr.f32.mxu0 0.0
        %875 = vmatmul.mubr.f32.gmra.mxu0 %v799
        %v876 = vpop.f32.mrf.mxu0
        %v877 = vadd.f32 0.0, %v876
        %v878 = vpop.f32.mrf.mxu0
        %879 = vmatprep.mubr.f32.mxu0 0.0
        %880 = vmatmul.mubr.f32.gmra.mxu0 %v802
        %v881 = vpop.f32.mrf.mxu0
        %v882 = vadd.f32 0.0, %v881
        %v883 = vpop.f32.mrf.mxu0
        %884 = vdwg.mxu0
        %v886 = vsel %vm362, %v326, 0
        %v889 = vsel %vm362, %v327, 0
        %v892 = vsel %vm362, %v342, 0
        %v895 = vsel %vm362, %v343, 0
        %897 = vmatprep.subr.mxu0 0.0
        %898 = vmatpush1.xpose.msra.mxu0 0.0
        %899 = vmatprep.subr.mxu0 0.0
        %900 = vmatpush1.xpose.msra.mxu0 0.0
        %901 = vmatprep.subr.mxu0 0.0
        %902 = vmatpush1.xpose.msra.mxu0 0.0
        %903 = vmatprep.subr.mxu0 0.0
        %904 = vmatpush1.xpose.msra.mxu0 0.0
        %905 = vmatprep.subr.mxu0 0.0
        %906 = vmatpush1.xpose.msra.mxu0 0.0
        %907 = vmatprep.subr.mxu0 0.0
        %908 = vmatpush1.xpose.msra.mxu0 0.0
        %909 = vmatprep.subr.mxu0 0.0
        %910 = vmatpush1.xpose.msra.mxu0 0.0
        %911 = vmatprep.subr.mxu0 0.0
        %912 = vmatpush1.xpose.msra.mxu0 0.0
        %913 = vmatprep.subr.mxu0 0.0
        %914 = vmatpush1.xpose.msra.mxu0 0.0
        %915 = vmatprep.subr.mxu0 0.0
        %916 = vmatpush1.xpose.msra.mxu0 0.0
        %917 = vmatprep.subr.mxu0 0.0
        %918 = vmatpush1.xpose.msra.mxu0 0.0
        %919 = vmatprep.subr.mxu0 0.0
        %920 = vmatpush1.xpose.msra.mxu0 0.0
        %921 = vmatprep.subr.mxu0 0.0
        %922 = vmatpush1.xpose.msra.mxu0 0.0
        %923 = vmatprep.subr.mxu0 0.0
        %924 = vmatpush1.xpose.msra.mxu0 0.0
        %925 = vmatprep.subr.mxu0 0.0
        %926 = vmatpush1.xpose.msra.mxu0 %v895
        %927 = vmatprep.subr.mxu0 0.0
        %928 = vmatpush1.xpose.msra.mxu0 %v892
        %929 = vmatprep.subr.mxu0 0.0
        %930 = vmatpush2.xpose.msra.mxu0 0.0
        %931 = vmatprep.subr.mxu0 0.0
        %932 = vmatpush2.xpose.msra.mxu0 0.0
        %933 = vmatprep.subr.mxu0 0.0
        %934 = vmatpush2.xpose.msra.mxu0 0.0
        %935 = vmatprep.subr.mxu0 0.0
        %936 = vmatpush2.xpose.msra.mxu0 0.0
        %937 = vmatprep.subr.mxu0 0.0
        %938 = vmatpush2.xpose.msra.mxu0 0.0
        %939 = vmatprep.subr.mxu0 0.0
        %940 = vmatpush2.xpose.msra.mxu0 0.0
        %941 = vmatprep.subr.mxu0 0.0
        %942 = vmatpush2.xpose.msra.mxu0 0.0
        %943 = vmatprep.subr.mxu0 0.0
        %944 = vmatpush2.xpose.msra.mxu0 0.0
        %945 = vmatprep.subr.mxu0 0.0
        %946 = vmatpush2.xpose.msra.mxu0 0.0
        %947 = vmatprep.subr.mxu0 0.0
        %948 = vmatpush2.xpose.msra.mxu0 0.0
        %949 = vmatprep.subr.mxu0 0.0
        %950 = vmatpush2.xpose.msra.mxu0 0.0
        %951 = vmatprep.subr.mxu0 0.0
        %952 = vmatpush2.xpose.msra.mxu0 0.0
        %953 = vmatprep.subr.mxu0 0.0
        %954 = vmatpush2.xpose.msra.mxu0 0.0
        %955 = vmatprep.subr.mxu0 0.0
        %956 = vmatpush2.xpose.msra.mxu0 0.0
        %957 = vmatprep.subr.mxu0 0.0
        %958 = vmatpush2.xpose.msra.mxu0 0.0
        %959 = vmatprep.subr.mxu0 0.0
        %960 = vmatpush2.xpose.msra.mxu0 0.0
        %961 = vmatprep.mubr.f32.mxu0 0.0
        %962 = vmatmul.mubr.f32.gmra.mxu0 %v886
        %v963 = vpop.f32.mrf.mxu0
        %v964 = vadd.f32 0.0, %v963
        %v965 = vpop.f32.mrf.mxu0
        %966 = vmatprep.mubr.f32.mxu0 0.0
        %967 = vmatmul.mubr.f32.gmra.mxu0 %v889
        %v968 = vpop.f32.mrf.mxu0
        %v969 = vadd.f32 0.0, %v968
        %v970 = vpop.f32.mrf.mxu0
        %971 = vdwg.mxu0
        %v973 = vsel %vm362, %v328, 0
        %v976 = vsel %vm362, %v329, 0
        %v979 = vsel %vm362, %v344, 0
        %v982 = vsel %vm362, %v345, 0
        %984 = vmatprep.subr.mxu0 0.0
        %985 = vmatpush1.xpose.msra.mxu0 0.0
        %986 = vmatprep.subr.mxu0 0.0
        %987 = vmatpush1.xpose.msra.mxu0 0.0
        %988 = vmatprep.subr.mxu0 0.0
        %989 = vmatpush1.xpose.msra.mxu0 0.0
        %990 = vmatprep.subr.mxu0 0.0
        %991 = vmatpush1.xpose.msra.mxu0 0.0
        %992 = vmatprep.subr.mxu0 0.0
        %993 = vmatpush1.xpose.msra.mxu0 0.0
        %994 = vmatprep.subr.mxu0 0.0
        %995 = vmatpush1.xpose.msra.mxu0 0.0
        %996 = vmatprep.subr.mxu0 0.0
        %997 = vmatpush1.xpose.msra.mxu0 0.0
        %998 = vmatprep.subr.mxu0 0.0
        %999 = vmatpush1.xpose.msra.mxu0 0.0
        %1000 = vmatprep.subr.mxu0 0.0
        %1001 = vmatpush1.xpose.msra.mxu0 0.0
        %1002 = vmatprep.subr.mxu0 0.0
        %1003 = vmatpush1.xpose.msra.mxu0 0.0
        %1004 = vmatprep.subr.mxu0 0.0
        %1005 = vmatpush1.xpose.msra.mxu0 0.0
        %1006 = vmatprep.subr.mxu0 0.0
        %1007 = vmatpush1.xpose.msra.mxu0 0.0
        %1008 = vmatprep.subr.mxu0 0.0
        %1009 = vmatpush1.xpose.msra.mxu0 0.0
        %1010 = vmatprep.subr.mxu0 0.0
        %1011 = vmatpush1.xpose.msra.mxu0 0.0
        %1012 = vmatprep.subr.mxu0 0.0
        %1013 = vmatpush1.xpose.msra.mxu0 %v982
        %1014 = vmatprep.subr.mxu0 0.0
        %1015 = vmatpush1.xpose.msra.mxu0 %v979
        %1016 = vmatprep.subr.mxu0 0.0
        %1017 = vmatpush2.xpose.msra.mxu0 0.0
        %1018 = vmatprep.subr.mxu0 0.0
        %1019 = vmatpush2.xpose.msra.mxu0 0.0
        %1020 = vmatprep.subr.mxu0 0.0
        %1021 = vmatpush2.xpose.msra.mxu0 0.0
        %1022 = vmatprep.subr.mxu0 0.0
        %1023 = vmatpush2.xpose.msra.mxu0 0.0
        %1024 = vmatprep.subr.mxu0 0.0
        %1025 = vmatpush2.xpose.msra.mxu0 0.0
        %1026 = vmatprep.subr.mxu0 0.0
        %1027 = vmatpush2.xpose.msra.mxu0 0.0
        %1028 = vmatprep.subr.mxu0 0.0
        %1029 = vmatpush2.xpose.msra.mxu0 0.0
        %1030 = vmatprep.subr.mxu0 0.0
        %1031 = vmatpush2.xpose.msra.mxu0 0.0
        %1032 = vmatprep.subr.mxu0 0.0
        %1033 = vmatpush2.xpose.msra.mxu0 0.0
        %1034 = vmatprep.subr.mxu0 0.0
        %1035 = vmatpush2.xpose.msra.mxu0 0.0
        %1036 = vmatprep.subr.mxu0 0.0
        %1037 = vmatpush2.xpose.msra.mxu0 0.0
        %1038 = vmatprep.subr.mxu0 0.0
        %1039 = vmatpush2.xpose.msra.mxu0 0.0
        %1040 = vmatprep.subr.mxu0 0.0
        %1041 = vmatpush2.xpose.msra.mxu0 0.0
        %1042 = vmatprep.subr.mxu0 0.0
        %1043 = vmatpush2.xpose.msra.mxu0 0.0
        %1044 = vmatprep.subr.mxu0 0.0
        %1045 = vmatpush2.xpose.msra.mxu0 0.0
        %1046 = vmatprep.subr.mxu0 0.0
        %1047 = vmatpush2.xpose.msra.mxu0 0.0
        %1048 = vmatprep.mubr.f32.mxu0 0.0
        %1049 = vmatmul.mubr.f32.gmra.mxu0 %v973
        %v1050 = vpop.f32.mrf.mxu0
        %v1051 = vadd.f32 0.0, %v1050
        %v1052 = vpop.f32.mrf.mxu0
        %1053 = vmatprep.mubr.f32.mxu0 0.0
        %1054 = vmatmul.mubr.f32.gmra.mxu0 %v976
        %v1055 = vpop.f32.mrf.mxu0
        %v1056 = vadd.f32 0.0, %v1055
        %v1057 = vpop.f32.mrf.mxu0
        %1058 = vdwg.mxu0
        %v1059 = vmul.f32 %v442, 0.70710677
        %v1060 = vmul.f32 %v447, 0.70710677
        %v1061 = vmul.f32 %v529, 0.70710677
        %v1062 = vmul.f32 %v534, 0.70710677
        %v1063 = vmul.f32 %v616, 0.70710677
        %v1064 = vmul.f32 %v621, 0.70710677
        %v1065 = vmul.f32 %v703, 0.70710677
        %v1066 = vmul.f32 %v708, 0.70710677
        %v1067 = vmul.f32 %v790, 0.70710677
        %v1068 = vmul.f32 %v795, 0.70710677
        %v1069 = vmul.f32 %v877, 0.70710677
        %v1070 = vmul.f32 %v882, 0.70710677
        %v1071 = vmul.f32 %v964, 0.70710677
        %v1072 = vmul.f32 %v969, 0.70710677
        %v1073 = vmul.f32 %v1051, 0.70710677
        %v1074 = vmul.f32 %v1056, 0.70710677
        %v1075 = vld [vmem:[%s283] sm:$0x1]
        %v1076 = vld [vmem:[%s283 + $0x1] sm:$0x1]
        %v1077 = vld [vmem:[%s283 + $0x2] sm:$0x1]
        %v1078 = vld [vmem:[%s283 + $0x3] sm:$0x1]
        %v1079 = vld [vmem:[%s283 + $0x4] sm:$0x1]
        %v1080 = vld [vmem:[%s283 + $0x5] sm:$0x1]
        %v1081 = vld [vmem:[%s283 + $0x6] sm:$0x1]
        %v1082 = vld [vmem:[%s283 + $0x7] sm:$0x1]
        %v1091 = vlaneseq
        %v1092 = vshrl.u32 %v1091, 7
        %v1093 = vsub.s32 0, %v1092
        %v1094 = vrot.slane %v1075, %v1093
        %v1095 = vlaneseq
        %v1096 = vshrl.u32 %v1095, 7
        %v1097 = vsub.s32 0, %v1096
        %v1098 = vrot.slane %v1076, %v1097
        %v1099 = vlaneseq
        %v1100 = vshrl.u32 %v1099, 7
        %v1101 = vsub.s32 0, %v1100
        %v1102 = vrot.slane %v1077, %v1101
        %v1103 = vlaneseq
        %v1104 = vshrl.u32 %v1103, 7
        %v1105 = vsub.s32 0, %v1104
        %v1106 = vrot.slane %v1078, %v1105
        %v1107 = vlaneseq
        %v1108 = vshrl.u32 %v1107, 7
        %v1109 = vsub.s32 0, %v1108
        %v1110 = vrot.slane %v1079, %v1109
        %v1111 = vlaneseq
        %v1112 = vshrl.u32 %v1111, 7
        %v1113 = vsub.s32 0, %v1112
        %v1114 = vrot.slane %v1080, %v1113
        %v1115 = vlaneseq
        %v1116 = vshrl.u32 %v1115, 7
        %v1117 = vsub.s32 0, %v1116
        %v1118 = vrot.slane %v1081, %v1117
        %v1119 = vlaneseq
        %v1120 = vshrl.u32 %v1119, 7
        %v1121 = vsub.s32 0, %v1120
        %v1122 = vrot.slane %v1082, %v1121
        %v1131 = vadd.f32 %v1059, %v1094
        %v1132 = vadd.f32 %v1060, %v1094
        %v1133 = vadd.f32 %v1061, %v1098
        %v1134 = vadd.f32 %v1062, %v1098
        %v1135 = vadd.f32 %v1063, %v1102
        %v1136 = vadd.f32 %v1064, %v1102
        %v1137 = vadd.f32 %v1065, %v1106
        %v1138 = vadd.f32 %v1066, %v1106
        %v1139 = vadd.f32 %v1067, %v1110
        %v1140 = vadd.f32 %v1068, %v1110
        %v1141 = vadd.f32 %v1069, %v1114
        %v1142 = vadd.f32 %v1070, %v1114
        %v1143 = vadd.f32 %v1071, %v1118
        %v1144 = vadd.f32 %v1072, %v1118
        %v1145 = vadd.f32 %v1073, %v1122
        %v1146 = vadd.f32 %v1074, %v1122
        %v1147 = vsel %vm362, %v1131, -inf
        %1148 = vmax.xlane.f32.xlu0 %v1147
        %v1149 = vpop.xlane.xlu0 %1148
        %v1150 = vsel %vm362, %v1132, -inf
        %1151 = vmax.xlane.f32.xlu0 %v1150
        %v1152 = vpop.xlane.xlu0 %1151
        %v1153 = vsel %vm362, %v1133, -inf
        %1154 = vmax.xlane.f32.xlu0 %v1153
        %v1155 = vpop.xlane.xlu0 %1154
        %v1156 = vsel %vm362, %v1134, -inf
        %1157 = vmax.xlane.f32.xlu0 %v1156
        %v1158 = vpop.xlane.xlu0 %1157
        %v1159 = vsel %vm362, %v1135, -inf
        %1160 = vmax.xlane.f32.xlu0 %v1159
        %v1161 = vpop.xlane.xlu0 %1160
        %v1162 = vsel %vm362, %v1136, -inf
        %1163 = vmax.xlane.f32.xlu0 %v1162
        %v1164 = vpop.xlane.xlu0 %1163
        %v1165 = vsel %vm362, %v1137, -inf
        %1166 = vmax.xlane.f32.xlu0 %v1165
        %v1167 = vpop.xlane.xlu0 %1166
        %v1168 = vsel %vm362, %v1138, -inf
        %1169 = vmax.xlane.f32.xlu0 %v1168
        %v1170 = vpop.xlane.xlu0 %1169
        %v1171 = vsel %vm362, %v1139, -inf
        %1172 = vmax.xlane.f32.xlu0 %v1171
        %v1173 = vpop.xlane.xlu0 %1172
        %v1174 = vsel %vm362, %v1140, -inf
        %1175 = vmax.xlane.f32.xlu0 %v1174
        %v1176 = vpop.xlane.xlu0 %1175
        %v1177 = vsel %vm362, %v1141, -inf
        %1178 = vmax.xlane.f32.xlu0 %v1177
        %v1179 = vpop.xlane.xlu0 %1178
        %v1180 = vsel %vm362, %v1142, -inf
        %1181 = vmax.xlane.f32.xlu0 %v1180
        %v1182 = vpop.xlane.xlu0 %1181
        %v1183 = vsel %vm362, %v1143, -inf
        %1184 = vmax.xlane.f32.xlu0 %v1183
        %v1185 = vpop.xlane.xlu0 %1184
        %v1186 = vsel %vm362, %v1144, -inf
        %1187 = vmax.xlane.f32.xlu0 %v1186
        %v1188 = vpop.xlane.xlu0 %1187
        %v1189 = vsel %vm362, %v1145, -inf
        %1190 = vmax.xlane.f32.xlu0 %v1189
        %v1191 = vpop.xlane.xlu0 %1190
        %v1192 = vsel %vm362, %v1146, -inf
        %1193 = vmax.xlane.f32.xlu0 %v1192
        %v1194 = vpop.xlane.xlu0 %1193
        %v1195 = vsub.f32 %v1131, %v1149
        %v1196 = vsub.f32 %v1132, %v1152
        %v1197 = vsub.f32 %v1133, %v1155
        %v1198 = vsub.f32 %v1134, %v1158
        %v1199 = vsub.f32 %v1135, %v1161
        %v1200 = vsub.f32 %v1136, %v1164
        %v1201 = vsub.f32 %v1137, %v1167
        %v1202 = vsub.f32 %v1138, %v1170
        %v1203 = vsub.f32 %v1139, %v1173
        %v1204 = vsub.f32 %v1140, %v1176
        %v1205 = vsub.f32 %v1141, %v1179
        %v1206 = vsub.f32 %v1142, %v1182
        %v1207 = vsub.f32 %v1143, %v1185
        %v1208 = vsub.f32 %v1144, %v1188
        %v1209 = vsub.f32 %v1145, %v1191
        %v1210 = vsub.f32 %v1146, %v1194
        %v1211 = vmul.f32 %v1195, 1.442695
        %v1212 = vpow.pop %v1211
        %v1213 = vmul.f32 %v1196, 1.442695
        %v1214 = vpow.pop %v1213
        %v1215 = vmul.f32 %v1197, 1.442695
        %v1216 = vpow.pop %v1215
        %v1217 = vmul.f32 %v1198, 1.442695
        %v1218 = vpow.pop %v1217
        %v1219 = vmul.f32 %v1199, 1.442695
        %v1220 = vpow.pop %v1219
        %v1221 = vmul.f32 %v1200, 1.442695
        %v1222 = vpow.pop %v1221
        %v1223 = vmul.f32 %v1201, 1.442695
        %v1224 = vpow.pop %v1223
        %v1225 = vmul.f32 %v1202, 1.442695
        %v1226 = vpow.pop %v1225
        %v1227 = vmul.f32 %v1203, 1.442695
        %v1228 = vpow.pop %v1227
        %v1229 = vmul.f32 %v1204, 1.442695
        %v1230 = vpow.pop %v1229
        %v1231 = vmul.f32 %v1205, 1.442695
        %v1232 = vpow.pop %v1231
        %v1233 = vmul.f32 %v1206, 1.442695
        %v1234 = vpow.pop %v1233
        %v1235 = vmul.f32 %v1207, 1.442695
        %v1236 = vpow.pop %v1235
        %v1237 = vmul.f32 %v1208, 1.442695
        %v1238 = vpow.pop %v1237
        %v1239 = vmul.f32 %v1209, 1.442695
        %v1240 = vpow.pop %v1239
        %v1241 = vmul.f32 %v1210, 1.442695
        %v1242 = vpow.pop %v1241
        %v1243 = vsel %vm362, %v1212, 0.0
        %1244 = vadd.xlane.f32.xlu0 %v1243
        %v1245 = vpop.xlane.xlu0 %1244
        %v1246 = vsel %vm362, %v1214, 0.0
        %1247 = vadd.xlane.f32.xlu0 %v1246
        %v1248 = vpop.xlane.xlu0 %1247
        %v1249 = vsel %vm362, %v1216, 0.0
        %1250 = vadd.xlane.f32.xlu0 %v1249
        %v1251 = vpop.xlane.xlu0 %1250
        %v1252 = vsel %vm362, %v1218, 0.0
        %1253 = vadd.xlane.f32.xlu0 %v1252
        %v1254 = vpop.xlane.xlu0 %1253
        %v1255 = vsel %vm362, %v1220, 0.0
        %1256 = vadd.xlane.f32.xlu0 %v1255
        %v1257 = vpop.xlane.xlu0 %1256
        %v1258 = vsel %vm362, %v1222, 0.0
        %1259 = vadd.xlane.f32.xlu0 %v1258
        %v1260 = vpop.xlane.xlu0 %1259
        %v1261 = vsel %vm362, %v1224, 0.0
        %1262 = vadd.xlane.f32.xlu0 %v1261
        %v1263 = vpop.xlane.xlu0 %1262
        %v1264 = vsel %vm362, %v1226, 0.0
        %1265 = vadd.xlane.f32.xlu0 %v1264
        %v1266 = vpop.xlane.xlu0 %1265
        %v1267 = vsel %vm362, %v1228, 0.0
        %1268 = vadd.xlane.f32.xlu0 %v1267
        %v1269 = vpop.xlane.xlu0 %1268
        %v1270 = vsel %vm362, %v1230, 0.0
        %1271 = vadd.xlane.f32.xlu0 %v1270
        %v1272 = vpop.xlane.xlu0 %1271
        %v1273 = vsel %vm362, %v1232, 0.0
        %1274 = vadd.xlane.f32.xlu0 %v1273
        %v1275 = vpop.xlane.xlu0 %1274
        %v1276 = vsel %vm362, %v1234, 0.0
        %1277 = vadd.xlane.f32.xlu0 %v1276
        %v1278 = vpop.xlane.xlu0 %1277
        %v1279 = vsel %vm362, %v1236, 0.0
        %1280 = vadd.xlane.f32.xlu0 %v1279
        %v1281 = vpop.xlane.xlu0 %1280
        %v1282 = vsel %vm362, %v1238, 0.0
        %1283 = vadd.xlane.f32.xlu0 %v1282
        %v1284 = vpop.xlane.xlu0 %1283
        %v1285 = vsel %vm362, %v1240, 0.0
        %1286 = vadd.xlane.f32.xlu0 %v1285
        %v1287 = vpop.xlane.xlu0 %1286
        %v1288 = vsel %vm362, %v1242, 0.0
        %1289 = vadd.xlane.f32.xlu0 %v1288
        %v1290 = vpop.xlane.xlu0 %1289
        %v1291 = vrcp.pop %v1245
        %v1292 = vmul.f32 %v1212, %v1291
        %v1293 = vrcp.pop %v1248
        %v1294 = vmul.f32 %v1214, %v1293
        %v1295 = vrcp.pop %v1251
        %v1296 = vmul.f32 %v1216, %v1295
        %v1297 = vrcp.pop %v1254
        %v1298 = vmul.f32 %v1218, %v1297
        %v1299 = vrcp.pop %v1257
        %v1300 = vmul.f32 %v1220, %v1299
        %v1301 = vrcp.pop %v1260
        %v1302 = vmul.f32 %v1222, %v1301
        %v1303 = vrcp.pop %v1263
        %v1304 = vmul.f32 %v1224, %v1303
        %v1305 = vrcp.pop %v1266
        %v1306 = vmul.f32 %v1226, %v1305
        %v1307 = vrcp.pop %v1269
        %v1308 = vmul.f32 %v1228, %v1307
        %v1309 = vrcp.pop %v1272
        %v1310 = vmul.f32 %v1230, %v1309
        %v1311 = vrcp.pop %v1275
        %v1312 = vmul.f32 %v1232, %v1311
        %v1313 = vrcp.pop %v1278
        %v1314 = vmul.f32 %v1234, %v1313
        %v1315 = vrcp.pop %v1281
        %v1316 = vmul.f32 %v1236, %v1315
        %v1317 = vrcp.pop %v1284
        %v1318 = vmul.f32 %v1238, %v1317
        %v1319 = vrcp.pop %v1287
        %v1320 = vmul.f32 %v1240, %v1319
        %v1321 = vrcp.pop %v1290
        %v1322 = vmul.f32 %v1242, %v1321
        %v1324 = vsel %vm362, %v1292, 0
        %v1327 = vsel %vm362, %v1294, 0
        %1329 = vmatprep.subr.mxu0 0.0
        %1330 = vmatpush1.msra.mxu0 0.0
        %1331 = vmatprep.subr.mxu0 0.0
        %1332 = vmatpush1.msra.mxu0 0.0
        %1333 = vmatprep.subr.mxu0 0.0
        %1334 = vmatpush1.msra.mxu0 0.0
        %1335 = vmatprep.subr.mxu0 0.0
        %1336 = vmatpush1.msra.mxu0 0.0
        %1337 = vmatprep.subr.mxu0 0.0
        %1338 = vmatpush1.msra.mxu0 0.0
        %1339 = vmatprep.subr.mxu0 0.0
        %1340 = vmatpush1.msra.mxu0 0.0
        %1341 = vmatprep.subr.mxu0 0.0
        %1342 = vmatpush1.msra.mxu0 0.0
        %1343 = vmatprep.subr.mxu0 0.0
        %1344 = vmatpush1.msra.mxu0 0.0
        %1345 = vmatprep.subr.mxu0 0.0
        %1346 = vmatpush1.msra.mxu0 0.0
        %1347 = vmatprep.subr.mxu0 0.0
        %1348 = vmatpush1.msra.mxu0 0.0
        %1349 = vmatprep.subr.mxu0 0.0
        %1350 = vmatpush1.msra.mxu0 0.0
        %1351 = vmatprep.subr.mxu0 0.0
        %1352 = vmatpush1.msra.mxu0 0.0
        %1353 = vmatprep.subr.mxu0 0.0
        %1354 = vmatpush1.msra.mxu0 0.0
        %1355 = vmatprep.subr.mxu0 0.0
        %1356 = vmatpush1.msra.mxu0 0.0
        %1357 = vmatprep.subr.mxu0 0.0
        %1358 = vmatpush1.msra.mxu0 %v347
        %1359 = vmatprep.subr.mxu0 0.0
        %1360 = vmatpush1.msra.mxu0 %v346
        %1361 = vmatprep.subr.mxu0 0.0
        %1362 = vmatpush2.msra.mxu0 0.0
        %1363 = vmatprep.subr.mxu0 0.0
        %1364 = vmatpush2.msra.mxu0 0.0
        %1365 = vmatprep.subr.mxu0 0.0
        %1366 = vmatpush2.msra.mxu0 0.0
        %1367 = vmatprep.subr.mxu0 0.0
        %1368 = vmatpush2.msra.mxu0 0.0
        %1369 = vmatprep.subr.mxu0 0.0
        %1370 = vmatpush2.msra.mxu0 0.0
        %1371 = vmatprep.subr.mxu0 0.0
        %1372 = vmatpush2.msra.mxu0 0.0
        %1373 = vmatprep.subr.mxu0 0.0
        %1374 = vmatpush2.msra.mxu0 0.0
        %1375 = vmatprep.subr.mxu0 0.0
        %1376 = vmatpush2.msra.mxu0 0.0
        %1377 = vmatprep.subr.mxu0 0.0
        %1378 = vmatpush2.msra.mxu0 0.0
        %1379 = vmatprep.subr.mxu0 0.0
        %1380 = vmatpush2.msra.mxu0 0.0
        %1381 = vmatprep.subr.mxu0 0.0
        %1382 = vmatpush2.msra.mxu0 0.0
        %1383 = vmatprep.subr.mxu0 0.0
        %1384 = vmatpush2.msra.mxu0 0.0
        %1385 = vmatprep.subr.mxu0 0.0
        %1386 = vmatpush2.msra.mxu0 0.0
        %1387 = vmatprep.subr.mxu0 0.0
        %1388 = vmatpush2.msra.mxu0 0.0
        %1389 = vmatprep.subr.mxu0 0.0
        %1390 = vmatpush2.msra.mxu0 0.0
        %1391 = vmatprep.subr.mxu0 0.0
        %1392 = vmatpush2.msra.mxu0 0.0
        %1393 = vmatprep.mubr.f32.mxu0 0.0
        %1394 = vmatmul.mubr.f32.gmra.mxu0 %v1324
        %v1395 = vpop.f32.mrf.mxu0
        %v1396 = vadd.f32 0.0, %v1395
        %v1397 = vpop.f32.mrf.mxu0
        %1398 = vmatprep.mubr.f32.mxu0 0.0
        %1399 = vmatmul.mubr.f32.gmra.mxu0 %v1327
        %v1400 = vpop.f32.mrf.mxu0
        %v1401 = vadd.f32 0.0, %v1400
        %v1402 = vpop.f32.mrf.mxu0
        %1403 = vdwg.mxu0
        %v1405 = vsel %vm362, %v1296, 0
        %v1408 = vsel %vm362, %v1298, 0
        %1410 = vmatprep.subr.mxu0 0.0
        %1411 = vmatpush1.msra.mxu0 0.0
        %1412 = vmatprep.subr.mxu0 0.0
        %1413 = vmatpush1.msra.mxu0 0.0
        %1414 = vmatprep.subr.mxu0 0.0
        %1415 = vmatpush1.msra.mxu0 0.0
        %1416 = vmatprep.subr.mxu0 0.0
        %1417 = vmatpush1.msra.mxu0 0.0
        %1418 = vmatprep.subr.mxu0 0.0
        %1419 = vmatpush1.msra.mxu0 0.0
        %1420 = vmatprep.subr.mxu0 0.0
        %1421 = vmatpush1.msra.mxu0 0.0
        %1422 = vmatprep.subr.mxu0 0.0
        %1423 = vmatpush1.msra.mxu0 0.0
        %1424 = vmatprep.subr.mxu0 0.0
        %1425 = vmatpush1.msra.mxu0 0.0
        %1426 = vmatprep.subr.mxu0 0.0
        %1427 = vmatpush1.msra.mxu0 0.0
        %1428 = vmatprep.subr.mxu0 0.0
        %1429 = vmatpush1.msra.mxu0 0.0
        %1430 = vmatprep.subr.mxu0 0.0
        %1431 = vmatpush1.msra.mxu0 0.0
        %1432 = vmatprep.subr.mxu0 0.0
        %1433 = vmatpush1.msra.mxu0 0.0
        %1434 = vmatprep.subr.mxu0 0.0
        %1435 = vmatpush1.msra.mxu0 0.0
        %1436 = vmatprep.subr.mxu0 0.0
        %1437 = vmatpush1.msra.mxu0 0.0
        %1438 = vmatprep.subr.mxu0 0.0
        %1439 = vmatpush1.msra.mxu0 %v349
        %1440 = vmatprep.subr.mxu0 0.0
        %1441 = vmatpush1.msra.mxu0 %v348
        %1442 = vmatprep.subr.mxu0 0.0
        %1443 = vmatpush2.msra.mxu0 0.0
        %1444 = vmatprep.subr.mxu0 0.0
        %1445 = vmatpush2.msra.mxu0 0.0
        %1446 = vmatprep.subr.mxu0 0.0
        %1447 = vmatpush2.msra.mxu0 0.0
        %1448 = vmatprep.subr.mxu0 0.0
        %1449 = vmatpush2.msra.mxu0 0.0
        %1450 = vmatprep.subr.mxu0 0.0
        %1451 = vmatpush2.msra.mxu0 0.0
        %1452 = vmatprep.subr.mxu0 0.0
        %1453 = vmatpush2.msra.mxu0 0.0
        %1454 = vmatprep.subr.mxu0 0.0
        %1455 = vmatpush2.msra.mxu0 0.0
        %1456 = vmatprep.subr.mxu0 0.0
        %1457 = vmatpush2.msra.mxu0 0.0
        %1458 = vmatprep.subr.mxu0 0.0
        %1459 = vmatpush2.msra.mxu0 0.0
        %1460 = vmatprep.subr.mxu0 0.0
        %1461 = vmatpush2.msra.mxu0 0.0
        %1462 = vmatprep.subr.mxu0 0.0
        %1463 = vmatpush2.msra.mxu0 0.0
        %1464 = vmatprep.subr.mxu0 0.0
        %1465 = vmatpush2.msra.mxu0 0.0
        %1466 = vmatprep.subr.mxu0 0.0
        %1467 = vmatpush2.msra.mxu0 0.0
        %1468 = vmatprep.subr.mxu0 0.0
        %1469 = vmatpush2.msra.mxu0 0.0
        %1470 = vmatprep.subr.mxu0 0.0
        %1471 = vmatpush2.msra.mxu0 0.0
        %1472 = vmatprep.subr.mxu0 0.0
        %1473 = vmatpush2.msra.mxu0 0.0
        %1474 = vmatprep.mubr.f32.mxu0 0.0
        %1475 = vmatmul.mubr.f32.gmra.mxu0 %v1405
        %v1476 = vpop.f32.mrf.mxu0
        %v1477 = vadd.f32 0.0, %v1476
        %v1478 = vpop.f32.mrf.mxu0
        %1479 = vmatprep.mubr.f32.mxu0 0.0
        %1480 = vmatmul.mubr.f32.gmra.mxu0 %v1408
        %v1481 = vpop.f32.mrf.mxu0
        %v1482 = vadd.f32 0.0, %v1481
        %v1483 = vpop.f32.mrf.mxu0
        %1484 = vdwg.mxu0
        %v1486 = vsel %vm362, %v1300, 0
        %v1489 = vsel %vm362, %v1302, 0
        %1491 = vmatprep.subr.mxu0 0.0
        %1492 = vmatpush1.msra.mxu0 0.0
        %1493 = vmatprep.subr.mxu0 0.0
        %1494 = vmatpush1.msra.mxu0 0.0
        %1495 = vmatprep.subr.mxu0 0.0
        %1496 = vmatpush1.msra.mxu0 0.0
        %1497 = vmatprep.subr.mxu0 0.0
        %1498 = vmatpush1.msra.mxu0 0.0
        %1499 = vmatprep.subr.mxu0 0.0
        %1500 = vmatpush1.msra.mxu0 0.0
        %1501 = vmatprep.subr.mxu0 0.0
        %1502 = vmatpush1.msra.mxu0 0.0
        %1503 = vmatprep.subr.mxu0 0.0
        %1504 = vmatpush1.msra.mxu0 0.0
        %1505 = vmatprep.subr.mxu0 0.0
        %1506 = vmatpush1.msra.mxu0 0.0
        %1507 = vmatprep.subr.mxu0 0.0
        %1508 = vmatpush1.msra.mxu0 0.0
        %1509 = vmatprep.subr.mxu0 0.0
        %1510 = vmatpush1.msra.mxu0 0.0
        %1511 = vmatprep.subr.mxu0 0.0
        %1512 = vmatpush1.msra.mxu0 0.0
        %1513 = vmatprep.subr.mxu0 0.0
        %1514 = vmatpush1.msra.mxu0 0.0
        %1515 = vmatprep.subr.mxu0 0.0
        %1516 = vmatpush1.msra.mxu0 0.0
        %1517 = vmatprep.subr.mxu0 0.0
        %1518 = vmatpush1.msra.mxu0 0.0
        %1519 = vmatprep.subr.mxu0 0.0
        %1520 = vmatpush1.msra.mxu0 %v351
        %1521 = vmatprep.subr.mxu0 0.0
        %1522 = vmatpush1.msra.mxu0 %v350
        %1523 = vmatprep.subr.mxu0 0.0
        %1524 = vmatpush2.msra.mxu0 0.0
        %1525 = vmatprep.subr.mxu0 0.0
        %1526 = vmatpush2.msra.mxu0 0.0
        %1527 = vmatprep.subr.mxu0 0.0
        %1528 = vmatpush2.msra.mxu0 0.0
        %1529 = vmatprep.subr.mxu0 0.0
        %1530 = vmatpush2.msra.mxu0 0.0
        %1531 = vmatprep.subr.mxu0 0.0
        %1532 = vmatpush2.msra.mxu0 0.0
        %1533 = vmatprep.subr.mxu0 0.0
        %1534 = vmatpush2.msra.mxu0 0.0
        %1535 = vmatprep.subr.mxu0 0.0
        %1536 = vmatpush2.msra.mxu0 0.0
        %1537 = vmatprep.subr.mxu0 0.0
        %1538 = vmatpush2.msra.mxu0 0.0
        %1539 = vmatprep.subr.mxu0 0.0
        %1540 = vmatpush2.msra.mxu0 0.0
        %1541 = vmatprep.subr.mxu0 0.0
        %1542 = vmatpush2.msra.mxu0 0.0
        %1543 = vmatprep.subr.mxu0 0.0
        %1544 = vmatpush2.msra.mxu0 0.0
        %1545 = vmatprep.subr.mxu0 0.0
        %1546 = vmatpush2.msra.mxu0 0.0
        %1547 = vmatprep.subr.mxu0 0.0
        %1548 = vmatpush2.msra.mxu0 0.0
        %1549 = vmatprep.subr.mxu0 0.0
        %1550 = vmatpush2.msra.mxu0 0.0
        %1551 = vmatprep.subr.mxu0 0.0
        %1552 = vmatpush2.msra.mxu0 0.0
        %1553 = vmatprep.subr.mxu0 0.0
        %1554 = vmatpush2.msra.mxu0 0.0
        %1555 = vmatprep.mubr.f32.mxu0 0.0
        %1556 = vmatmul.mubr.f32.gmra.mxu0 %v1486
        %v1557 = vpop.f32.mrf.mxu0
        %v1558 = vadd.f32 0.0, %v1557
        %v1559 = vpop.f32.mrf.mxu0
        %1560 = vmatprep.mubr.f32.mxu0 0.0
        %1561 = vmatmul.mubr.f32.gmra.mxu0 %v1489
        %v1562 = vpop.f32.mrf.mxu0
        %v1563 = vadd.f32 0.0, %v1562
        %v1564 = vpop.f32.mrf.mxu0
        %1565 = vdwg.mxu0
        %v1567 = vsel %vm362, %v1304, 0
        %v1570 = vsel %vm362, %v1306, 0
        %1572 = vmatprep.subr.mxu0 0.0
        %1573 = vmatpush1.msra.mxu0 0.0
        %1574 = vmatprep.subr.mxu0 0.0
        %1575 = vmatpush1.msra.mxu0 0.0
        %1576 = vmatprep.subr.mxu0 0.0
        %1577 = vmatpush1.msra.mxu0 0.0
        %1578 = vmatprep.subr.mxu0 0.0
        %1579 = vmatpush1.msra.mxu0 0.0
        %1580 = vmatprep.subr.mxu0 0.0
        %1581 = vmatpush1.msra.mxu0 0.0
        %1582 = vmatprep.subr.mxu0 0.0
        %1583 = vmatpush1.msra.mxu0 0.0
        %1584 = vmatprep.subr.mxu0 0.0
        %1585 = vmatpush1.msra.mxu0 0.0
        %1586 = vmatprep.subr.mxu0 0.0
        %1587 = vmatpush1.msra.mxu0 0.0
        %1588 = vmatprep.subr.mxu0 0.0
        %1589 = vmatpush1.msra.mxu0 0.0
        %1590 = vmatprep.subr.mxu0 0.0
        %1591 = vmatpush1.msra.mxu0 0.0
        %1592 = vmatprep.subr.mxu0 0.0
        %1593 = vmatpush1.msra.mxu0 0.0
        %1594 = vmatprep.subr.mxu0 0.0
        %1595 = vmatpush1.msra.mxu0 0.0
        %1596 = vmatprep.subr.mxu0 0.0
        %1597 = vmatpush1.msra.mxu0 0.0
        %1598 = vmatprep.subr.mxu0 0.0
        %1599 = vmatpush1.msra.mxu0 0.0
        %1600 = vmatprep.subr.mxu0 0.0
        %1601 = vmatpush1.msra.mxu0 %v353
        %1602 = vmatprep.subr.mxu0 0.0
        %1603 = vmatpush1.msra.mxu0 %v352
        %1604 = vmatprep.subr.mxu0 0.0
        %1605 = vmatpush2.msra.mxu0 0.0
        %1606 = vmatprep.subr.mxu0 0.0
        %1607 = vmatpush2.msra.mxu0 0.0
        %1608 = vmatprep.subr.mxu0 0.0
        %1609 = vmatpush2.msra.mxu0 0.0
        %1610 = vmatprep.subr.mxu0 0.0
        %1611 = vmatpush2.msra.mxu0 0.0
        %1612 = vmatprep.subr.mxu0 0.0
        %1613 = vmatpush2.msra.mxu0 0.0
        %1614 = vmatprep.subr.mxu0 0.0
        %1615 = vmatpush2.msra.mxu0 0.0
        %1616 = vmatprep.subr.mxu0 0.0
        %1617 = vmatpush2.msra.mxu0 0.0
        %1618 = vmatprep.subr.mxu0 0.0
        %1619 = vmatpush2.msra.mxu0 0.0
        %1620 = vmatprep.subr.mxu0 0.0
        %1621 = vmatpush2.msra.mxu0 0.0
        %1622 = vmatprep.subr.mxu0 0.0
        %1623 = vmatpush2.msra.mxu0 0.0
        %1624 = vmatprep.subr.mxu0 0.0
        %1625 = vmatpush2.msra.mxu0 0.0
        %1626 = vmatprep.subr.mxu0 0.0
        %1627 = vmatpush2.msra.mxu0 0.0
        %1628 = vmatprep.subr.mxu0 0.0
        %1629 = vmatpush2.msra.mxu0 0.0
        %1630 = vmatprep.subr.mxu0 0.0
        %1631 = vmatpush2.msra.mxu0 0.0
        %1632 = vmatprep.subr.mxu0 0.0
        %1633 = vmatpush2.msra.mxu0 0.0
        %1634 = vmatprep.subr.mxu0 0.0
        %1635 = vmatpush2.msra.mxu0 0.0
        %1636 = vmatprep.mubr.f32.mxu0 0.0
        %1637 = vmatmul.mubr.f32.gmra.mxu0 %v1567
        %v1638 = vpop.f32.mrf.mxu0
        %v1639 = vadd.f32 0.0, %v1638
        %v1640 = vpop.f32.mrf.mxu0
        %1641 = vmatprep.mubr.f32.mxu0 0.0
        %1642 = vmatmul.mubr.f32.gmra.mxu0 %v1570
        %v1643 = vpop.f32.mrf.mxu0
        %v1644 = vadd.f32 0.0, %v1643
        %v1645 = vpop.f32.mrf.mxu0
        %1646 = vdwg.mxu0
        %v1648 = vsel %vm362, %v1308, 0
        %v1651 = vsel %vm362, %v1310, 0
        %1653 = vmatprep.subr.mxu0 0.0
        %1654 = vmatpush1.msra.mxu0 0.0
        %1655 = vmatprep.subr.mxu0 0.0
        %1656 = vmatpush1.msra.mxu0 0.0
        %1657 = vmatprep.subr.mxu0 0.0
        %1658 = vmatpush1.msra.mxu0 0.0
        %1659 = vmatprep.subr.mxu0 0.0
        %1660 = vmatpush1.msra.mxu0 0.0
        %1661 = vmatprep.subr.mxu0 0.0
        %1662 = vmatpush1.msra.mxu0 0.0
        %1663 = vmatprep.subr.mxu0 0.0
        %1664 = vmatpush1.msra.mxu0 0.0
        %1665 = vmatprep.subr.mxu0 0.0
        %1666 = vmatpush1.msra.mxu0 0.0
        %1667 = vmatprep.subr.mxu0 0.0
        %1668 = vmatpush1.msra.mxu0 0.0
        %1669 = vmatprep.subr.mxu0 0.0
        %1670 = vmatpush1.msra.mxu0 0.0
        %1671 = vmatprep.subr.mxu0 0.0
        %1672 = vmatpush1.msra.mxu0 0.0
        %1673 = vmatprep.subr.mxu0 0.0
        %1674 = vmatpush1.msra.mxu0 0.0
        %1675 = vmatprep.subr.mxu0 0.0
        %1676 = vmatpush1.msra.mxu0 0.0
        %1677 = vmatprep.subr.mxu0 0.0
        %1678 = vmatpush1.msra.mxu0 0.0
        %1679 = vmatprep.subr.mxu0 0.0
        %1680 = vmatpush1.msra.mxu0 0.0
        %1681 = vmatprep.subr.mxu0 0.0
        %1682 = vmatpush1.msra.mxu0 %v355
        %1683 = vmatprep.subr.mxu0 0.0
        %1684 = vmatpush1.msra.mxu0 %v354
        %1685 = vmatprep.subr.mxu0 0.0
        %1686 = vmatpush2.msra.mxu0 0.0
        %1687 = vmatprep.subr.mxu0 0.0
        %1688 = vmatpush2.msra.mxu0 0.0
        %1689 = vmatprep.subr.mxu0 0.0
        %1690 = vmatpush2.msra.mxu0 0.0
        %1691 = vmatprep.subr.mxu0 0.0
        %1692 = vmatpush2.msra.mxu0 0.0
        %1693 = vmatprep.subr.mxu0 0.0
        %1694 = vmatpush2.msra.mxu0 0.0
        %1695 = vmatprep.subr.mxu0 0.0
        %1696 = vmatpush2.msra.mxu0 0.0
        %1697 = vmatprep.subr.mxu0 0.0
        %1698 = vmatpush2.msra.mxu0 0.0
        %1699 = vmatprep.subr.mxu0 0.0
        %1700 = vmatpush2.msra.mxu0 0.0
        %1701 = vmatprep.subr.mxu0 0.0
        %1702 = vmatpush2.msra.mxu0 0.0
        %1703 = vmatprep.subr.mxu0 0.0
        %1704 = vmatpush2.msra.mxu0 0.0
        %1705 = vmatprep.subr.mxu0 0.0
        %1706 = vmatpush2.msra.mxu0 0.0
        %1707 = vmatprep.subr.mxu0 0.0
        %1708 = vmatpush2.msra.mxu0 0.0
        %1709 = vmatprep.subr.mxu0 0.0
        %1710 = vmatpush2.msra.mxu0 0.0
        %1711 = vmatprep.subr.mxu0 0.0
        %1712 = vmatpush2.msra.mxu0 0.0
        %1713 = vmatprep.subr.mxu0 0.0
        %1714 = vmatpush2.msra.mxu0 0.0
        %1715 = vmatprep.subr.mxu0 0.0
        %1716 = vmatpush2.msra.mxu0 0.0
        %1717 = vmatprep.mubr.f32.mxu0 0.0
        %1718 = vmatmul.mubr.f32.gmra.mxu0 %v1648
        %v1719 = vpop.f32.mrf.mxu0
        %v1720 = vadd.f32 0.0, %v1719
        %v1721 = vpop.f32.mrf.mxu0
        %1722 = vmatprep.mubr.f32.mxu0 0.0
        %1723 = vmatmul.mubr.f32.gmra.mxu0 %v1651
        %v1724 = vpop.f32.mrf.mxu0
        %v1725 = vadd.f32 0.0, %v1724
        %v1726 = vpop.f32.mrf.mxu0
        %1727 = vdwg.mxu0
        %v1729 = vsel %vm362, %v1312, 0
        %v1732 = vsel %vm362, %v1314, 0
        %1734 = vmatprep.subr.mxu0 0.0
        %1735 = vmatpush1.msra.mxu0 0.0
        %1736 = vmatprep.subr.mxu0 0.0
        %1737 = vmatpush1.msra.mxu0 0.0
        %1738 = vmatprep.subr.mxu0 0.0
        %1739 = vmatpush1.msra.mxu0 0.0
        %1740 = vmatprep.subr.mxu0 0.0
        %1741 = vmatpush1.msra.mxu0 0.0
        %1742 = vmatprep.subr.mxu0 0.0
        %1743 = vmatpush1.msra.mxu0 0.0
        %1744 = vmatprep.subr.mxu0 0.0
        %1745 = vmatpush1.msra.mxu0 0.0
        %1746 = vmatprep.subr.mxu0 0.0
        %1747 = vmatpush1.msra.mxu0 0.0
        %1748 = vmatprep.subr.mxu0 0.0
        %1749 = vmatpush1.msra.mxu0 0.0
        %1750 = vmatprep.subr.mxu0 0.0
        %1751 = vmatpush1.msra.mxu0 0.0
        %1752 = vmatprep.subr.mxu0 0.0
        %1753 = vmatpush1.msra.mxu0 0.0
        %1754 = vmatprep.subr.mxu0 0.0
        %1755 = vmatpush1.msra.mxu0 0.0
        %1756 = vmatprep.subr.mxu0 0.0
        %1757 = vmatpush1.msra.mxu0 0.0
        %1758 = vmatprep.subr.mxu0 0.0
        %1759 = vmatpush1.msra.mxu0 0.0
        %1760 = vmatprep.subr.mxu0 0.0
        %1761 = vmatpush1.msra.mxu0 0.0
        %1762 = vmatprep.subr.mxu0 0.0
        %1763 = vmatpush1.msra.mxu0 %v357
        %1764 = vmatprep.subr.mxu0 0.0
        %1765 = vmatpush1.msra.mxu0 %v356
        %1766 = vmatprep.subr.mxu0 0.0
        %1767 = vmatpush2.msra.mxu0 0.0
        %1768 = vmatprep.subr.mxu0 0.0
        %1769 = vmatpush2.msra.mxu0 0.0
        %1770 = vmatprep.subr.mxu0 0.0
        %1771 = vmatpush2.msra.mxu0 0.0
        %1772 = vmatprep.subr.mxu0 0.0
        %1773 = vmatpush2.msra.mxu0 0.0
        %1774 = vmatprep.subr.mxu0 0.0
        %1775 = vmatpush2.msra.mxu0 0.0
        %1776 = vmatprep.subr.mxu0 0.0
        %1777 = vmatpush2.msra.mxu0 0.0
        %1778 = vmatprep.subr.mxu0 0.0
        %1779 = vmatpush2.msra.mxu0 0.0
        %1780 = vmatprep.subr.mxu0 0.0
        %1781 = vmatpush2.msra.mxu0 0.0
        %1782 = vmatprep.subr.mxu0 0.0
        %1783 = vmatpush2.msra.mxu0 0.0
        %1784 = vmatprep.subr.mxu0 0.0
        %1785 = vmatpush2.msra.mxu0 0.0
        %1786 = vmatprep.subr.mxu0 0.0
        %1787 = vmatpush2.msra.mxu0 0.0
        %1788 = vmatprep.subr.mxu0 0.0
        %1789 = vmatpush2.msra.mxu0 0.0
        %1790 = vmatprep.subr.mxu0 0.0
        %1791 = vmatpush2.msra.mxu0 0.0
        %1792 = vmatprep.subr.mxu0 0.0
        %1793 = vmatpush2.msra.mxu0 0.0
        %1794 = vmatprep.subr.mxu0 0.0
        %1795 = vmatpush2.msra.mxu0 0.0
        %1796 = vmatprep.subr.mxu0 0.0
        %1797 = vmatpush2.msra.mxu0 0.0
        %1798 = vmatprep.mubr.f32.mxu0 0.0
        %1799 = vmatmul.mubr.f32.gmra.mxu0 %v1729
        %v1800 = vpop.f32.mrf.mxu0
        %v1801 = vadd.f32 0.0, %v1800
        %v1802 = vpop.f32.mrf.mxu0
        %1803 = vmatprep.mubr.f32.mxu0 0.0
        %1804 = vmatmul.mubr.f32.gmra.mxu0 %v1732
        %v1805 = vpop.f32.mrf.mxu0
        %v1806 = vadd.f32 0.0, %v1805
        %v1807 = vpop.f32.mrf.mxu0
        %1808 = vdwg.mxu0
        %v1810 = vsel %vm362, %v1316, 0
        %v1813 = vsel %vm362, %v1318, 0
        %1815 = vmatprep.subr.mxu0 0.0
        %1816 = vmatpush1.msra.mxu0 0.0
        %1817 = vmatprep.subr.mxu0 0.0
        %1818 = vmatpush1.msra.mxu0 0.0
        %1819 = vmatprep.subr.mxu0 0.0
        %1820 = vmatpush1.msra.mxu0 0.0
        %1821 = vmatprep.subr.mxu0 0.0
        %1822 = vmatpush1.msra.mxu0 0.0
        %1823 = vmatprep.subr.mxu0 0.0
        %1824 = vmatpush1.msra.mxu0 0.0
        %1825 = vmatprep.subr.mxu0 0.0
        %1826 = vmatpush1.msra.mxu0 0.0
        %1827 = vmatprep.subr.mxu0 0.0
        %1828 = vmatpush1.msra.mxu0 0.0
        %1829 = vmatprep.subr.mxu0 0.0
        %1830 = vmatpush1.msra.mxu0 0.0
        %1831 = vmatprep.subr.mxu0 0.0
        %1832 = vmatpush1.msra.mxu0 0.0
        %1833 = vmatprep.subr.mxu0 0.0
        %1834 = vmatpush1.msra.mxu0 0.0
        %1835 = vmatprep.subr.mxu0 0.0
        %1836 = vmatpush1.msra.mxu0 0.0
        %1837 = vmatprep.subr.mxu0 0.0
        %1838 = vmatpush1.msra.mxu0 0.0
        %1839 = vmatprep.subr.mxu0 0.0
        %1840 = vmatpush1.msra.mxu0 0.0
        %1841 = vmatprep.subr.mxu0 0.0
        %1842 = vmatpush1.msra.mxu0 0.0
        %1843 = vmatprep.subr.mxu0 0.0
        %1844 = vmatpush1.msra.mxu0 %v359
        %1845 = vmatprep.subr.mxu0 0.0
        %1846 = vmatpush1.msra.mxu0 %v358
        %1847 = vmatprep.subr.mxu0 0.0
        %1848 = vmatpush2.msra.mxu0 0.0
        %1849 = vmatprep.subr.mxu0 0.0
        %1850 = vmatpush2.msra.mxu0 0.0
        %1851 = vmatprep.subr.mxu0 0.0
        %1852 = vmatpush2.msra.mxu0 0.0
        %1853 = vmatprep.subr.mxu0 0.0
        %1854 = vmatpush2.msra.mxu0 0.0
        %1855 = vmatprep.subr.mxu0 0.0
        %1856 = vmatpush2.msra.mxu0 0.0
        %1857 = vmatprep.subr.mxu0 0.0
        %1858 = vmatpush2.msra.mxu0 0.0
        %1859 = vmatprep.subr.mxu0 0.0
        %1860 = vmatpush2.msra.mxu0 0.0
        %1861 = vmatprep.subr.mxu0 0.0
        %1862 = vmatpush2.msra.mxu0 0.0
        %1863 = vmatprep.subr.mxu0 0.0
        %1864 = vmatpush2.msra.mxu0 0.0
        %1865 = vmatprep.subr.mxu0 0.0
        %1866 = vmatpush2.msra.mxu0 0.0
        %1867 = vmatprep.subr.mxu0 0.0
        %1868 = vmatpush2.msra.mxu0 0.0
        %1869 = vmatprep.subr.mxu0 0.0
        %1870 = vmatpush2.msra.mxu0 0.0
        %1871 = vmatprep.subr.mxu0 0.0
        %1872 = vmatpush2.msra.mxu0 0.0
        %1873 = vmatprep.subr.mxu0 0.0
        %1874 = vmatpush2.msra.mxu0 0.0
        %1875 = vmatprep.subr.mxu0 0.0
        %1876 = vmatpush2.msra.mxu0 0.0
        %1877 = vmatprep.subr.mxu0 0.0
        %1878 = vmatpush2.msra.mxu0 0.0
        %1879 = vmatprep.mubr.f32.mxu0 0.0
        %1880 = vmatmul.mubr.f32.gmra.mxu0 %v1810
        %v1881 = vpop.f32.mrf.mxu0
        %v1882 = vadd.f32 0.0, %v1881
        %v1883 = vpop.f32.mrf.mxu0
        %1884 = vmatprep.mubr.f32.mxu0 0.0
        %1885 = vmatmul.mubr.f32.gmra.mxu0 %v1813
        %v1886 = vpop.f32.mrf.mxu0
        %v1887 = vadd.f32 0.0, %v1886
        %v1888 = vpop.f32.mrf.mxu0
        %1889 = vdwg.mxu0
        %v1891 = vsel %vm362, %v1320, 0
        %v1894 = vsel %vm362, %v1322, 0
        %1896 = vmatprep.subr.mxu0 0.0
        %1897 = vmatpush1.msra.mxu0 0.0
        %1898 = vmatprep.subr.mxu0 0.0
        %1899 = vmatpush1.msra.mxu0 0.0
        %1900 = vmatprep.subr.mxu0 0.0
        %1901 = vmatpush1.msra.mxu0 0.0
        %1902 = vmatprep.subr.mxu0 0.0
        %1903 = vmatpush1.msra.mxu0 0.0
        %1904 = vmatprep.subr.mxu0 0.0
        %1905 = vmatpush1.msra.mxu0 0.0
        %1906 = vmatprep.subr.mxu0 0.0
        %1907 = vmatpush1.msra.mxu0 0.0
        %1908 = vmatprep.subr.mxu0 0.0
        %1909 = vmatpush1.msra.mxu0 0.0
        %1910 = vmatprep.subr.mxu0 0.0
        %1911 = vmatpush1.msra.mxu0 0.0
        %1912 = vmatprep.subr.mxu0 0.0
        %1913 = vmatpush1.msra.mxu0 0.0
        %1914 = vmatprep.subr.mxu0 0.0
        %1915 = vmatpush1.msra.mxu0 0.0
        %1916 = vmatprep.subr.mxu0 0.0
        %1917 = vmatpush1.msra.mxu0 0.0
        %1918 = vmatprep.subr.mxu0 0.0
        %1919 = vmatpush1.msra.mxu0 0.0
        %1920 = vmatprep.subr.mxu0 0.0
        %1921 = vmatpush1.msra.mxu0 0.0
        %1922 = vmatprep.subr.mxu0 0.0
        %1923 = vmatpush1.msra.mxu0 0.0
        %1924 = vmatprep.subr.mxu0 0.0
        %1925 = vmatpush1.msra.mxu0 %v361
        %1926 = vmatprep.subr.mxu0 0.0
        %1927 = vmatpush1.msra.mxu0 %v360
        %1928 = vmatprep.subr.mxu0 0.0
        %1929 = vmatpush2.msra.mxu0 0.0
        %1930 = vmatprep.subr.mxu0 0.0
        %1931 = vmatpush2.msra.mxu0 0.0
        %1932 = vmatprep.subr.mxu0 0.0
        %1933 = vmatpush2.msra.mxu0 0.0
        %1934 = vmatprep.subr.mxu0 0.0
        %1935 = vmatpush2.msra.mxu0 0.0
        %1936 = vmatprep.subr.mxu0 0.0
        %1937 = vmatpush2.msra.mxu0 0.0
        %1938 = vmatprep.subr.mxu0 0.0
        %1939 = vmatpush2.msra.mxu0 0.0
        %1940 = vmatprep.subr.mxu0 0.0
        %1941 = vmatpush2.msra.mxu0 0.0
        %1942 = vmatprep.subr.mxu0 0.0
        %1943 = vmatpush2.msra.mxu0 0.0
        %1944 = vmatprep.subr.mxu0 0.0
        %1945 = vmatpush2.msra.mxu0 0.0
        %1946 = vmatprep.subr.mxu0 0.0
        %1947 = vmatpush2.msra.mxu0 0.0
        %1948 = vmatprep.subr.mxu0 0.0
        %1949 = vmatpush2.msra.mxu0 0.0
        %1950 = vmatprep.subr.mxu0 0.0
        %1951 = vmatpush2.msra.mxu0 0.0
        %1952 = vmatprep.subr.mxu0 0.0
        %1953 = vmatpush2.msra.mxu0 0.0
        %1954 = vmatprep.subr.mxu0 0.0
        %1955 = vmatpush2.msra.mxu0 0.0
        %1956 = vmatprep.subr.mxu0 0.0
        %1957 = vmatpush2.msra.mxu0 0.0
        %1958 = vmatprep.subr.mxu0 0.0
        %1959 = vmatpush2.msra.mxu0 0.0
        %1960 = vmatprep.mubr.f32.mxu0 0.0
        %1961 = vmatmul.mubr.f32.gmra.mxu0 %v1891
        %v1962 = vpop.f32.mrf.mxu0
        %v1963 = vadd.f32 0.0, %v1962
        %v1964 = vpop.f32.mrf.mxu0
        %1965 = vmatprep.mubr.f32.mxu0 0.0
        %1966 = vmatmul.mubr.f32.gmra.mxu0 %v1894
        %v1967 = vpop.f32.mrf.mxu0
        %v1968 = vadd.f32 0.0, %v1967
        %v1969 = vpop.f32.mrf.mxu0
        %1970 = vdwg.mxu0
        %1971 = vst.msk [vmem:[%s311] sm:$0xff] %vm362, %v1396
        %1972 = vst.msk [vmem:[%s311 + $0x8] sm:$0xff] %vm362, %v1401
        %1973 = vst.msk [vmem:[%s311 + $0x10] sm:$0xff] %vm362, %v1477
        %1974 = vst.msk [vmem:[%s311 + $0x18] sm:$0xff] %vm362, %v1482
        %1975 = vst.msk [vmem:[%s311 + $0x20] sm:$0xff] %vm362, %v1558
        %1976 = vst.msk [vmem:[%s311 + $0x28] sm:$0xff] %vm362, %v1563
        %1977 = vst.msk [vmem:[%s311 + $0x30] sm:$0xff] %vm362, %v1639
        %1978 = vst.msk [vmem:[%s311 + $0x38] sm:$0xff] %vm362, %v1644
        %1979 = vst.msk [vmem:[%s311 + $0x40] sm:$0xff] %vm362, %v1720
        %1980 = vst.msk [vmem:[%s311 + $0x48] sm:$0xff] %vm362, %v1725
        %1981 = vst.msk [vmem:[%s311 + $0x50] sm:$0xff] %vm362, %v1801
        %1982 = vst.msk [vmem:[%s311 + $0x58] sm:$0xff] %vm362, %v1806
        %1983 = vst.msk [vmem:[%s311 + $0x60] sm:$0xff] %vm362, %v1882
        %1984 = vst.msk [vmem:[%s311 + $0x68] sm:$0xff] %vm362, %v1887
        %1985 = vst.msk [vmem:[%s311 + $0x70] sm:$0xff] %vm362, %v1963
        %1986 = vst.msk [vmem:[%s311 + $0x78] sm:$0xff] %vm362, %v1968
        %1987 = vst.msk [vmem:[%s279] sm:$0xff] %vm362, %v1292
        %1988 = vst.msk [vmem:[%s279 + $0x8] sm:$0xff] %vm362, %v1294
        %1989 = vst.msk [vmem:[%s279 + $0x10] sm:$0xff] %vm362, %v1296
        %1990 = vst.msk [vmem:[%s279 + $0x18] sm:$0xff] %vm362, %v1298
        %1991 = vst.msk [vmem:[%s279 + $0x20] sm:$0xff] %vm362, %v1300
        %1992 = vst.msk [vmem:[%s279 + $0x28] sm:$0xff] %vm362, %v1302
        %1993 = vst.msk [vmem:[%s279 + $0x30] sm:$0xff] %vm362, %v1304
        %1994 = vst.msk [vmem:[%s279 + $0x38] sm:$0xff] %vm362, %v1306
        %1995 = vst.msk [vmem:[%s279 + $0x40] sm:$0xff] %vm362, %v1308
        %1996 = vst.msk [vmem:[%s279 + $0x48] sm:$0xff] %vm362, %v1310
        %1997 = vst.msk [vmem:[%s279 + $0x50] sm:$0xff] %vm362, %v1312
        %1998 = vst.msk [vmem:[%s279 + $0x58] sm:$0xff] %vm362, %v1314
        %1999 = vst.msk [vmem:[%s279 + $0x60] sm:$0xff] %vm362, %v1316
        %2000 = vst.msk [vmem:[%s279 + $0x68] sm:$0xff] %vm362, %v1318
        %2001 = vst.msk [vmem:[%s279 + $0x70] sm:$0xff] %vm362, %v1320
        %2002 = vst.msk [vmem:[%s279 + $0x78] sm:$0xff] %vm362, %v1322
        %s2003 = smul.u32 8, %s20
        %p2004 = scmp.lt.s32.totalorder %s2003, 15
        %s2005 = scalar_select %p2004, %s2003, 15
        %s2006 = smul.addr %s2005, 2
        %s2007 = smul.addr %s2006, 8
        %s2008 = scalar_lea.vmem %s4, %s2007
        %s2009 = sand.u32 %s158, 1
        %s2010 = scalar_lea.sflag [#allocation3], %s2009
        %s2011 = sand.u32 %s158, 1
        %s2012 = smul.addr %s2011, 128
        %s2013 = scalar_lea.vmem [#allocation2], %s2012
        // Predicated region
        $region37: #{encoder_forward.8} parent=35 // pred_check
          %p2014 = pneg %p142
        $region38: #{encoder_forward.8} parent=35 // pred_check_branch
          %2016 = sbr.rel (%p2014) target = $region40
        $region39: #{encoder_forward.8} parent=35 // pred_region
          %s2017 = smul.u32 8, %s20
        $region40: #{encoder_forward.8} parent=35 // pred_fallthru
          _
        // Predicated region
        $region41: #{encoder_forward.8} parent=35 // pred_check
          %p2018 = pneg %p168
        $region42: #{encoder_forward.8} parent=35 // pred_check_branch
          %2020 = sbr.rel (%p2018) target = $region44
        $region43: #{encoder_forward.8} parent=35 // pred_region
          %s2021 = smul.u32 8, %s20
          %s2023 = ssub.s32 2048, 2048
          %2024 = vsyncadd %s2010, %s2023
          %s2025 = smul.addr %s2021, 2
          %s2026 = smul.addr %s2025, 128
          %s2027 = scalar_lea.hbm %s5, %s2026
          %s2028 = sshll.u32 %s2013, 4
          %s2029 = int_to_ptr.vmem [resolvable:$true] %s2028
          %2034 = dma.vmem_to_hbm [thread:$0]  %s2029, 2048, %s2027, %s2010, 128, 128, 8
        $region44: #{encoder_forward.8} parent=35 // pred_fallthru
          _
      $region36: #{encoder_forward.8} parent=5 // pred_fallthru
        _
      %p2035 = scmp.le.s32.totalorder 2, %s15
      // Predicated region
      $region45: #{encoder_forward.8} parent=5 // pred_check
        %p2036 = pneg %p2035
      $region46: #{encoder_forward.8} parent=5 // pred_check_branch
        %2038 = sbr.rel (%p2036) target = $region48
      $region47: #{encoder_forward.8} parent=5 // pred_region
        %s2039 = ssub.s32 %s15, 2
        // Predicated region
        $region49: #{encoder_forward.8} parent=47 // pred_check
          %p2040 = pneg %p148
        $region50: #{encoder_forward.8} parent=47 // pred_check_branch
          %2042 = sbr.rel (%p2040) target = $region52
        $region51: #{encoder_forward.8} parent=47 // pred_region
          %s2043 = smul.u32 8, %s21
          %p2044 = scmp.lt.s32.totalorder %s2043, 15
          %s2045 = scalar_select %p2044, %s2043, 15
          %s2046 = smul.addr %s2045, 2
          %s2047 = smul.addr %s2046, 8
          %s2048 = scalar_lea.vmem %s4, %s2047
        $region52: #{encoder_forward.8} parent=47 // pred_fallthru
          _
        // Predicated region
        $region53: #{encoder_forward.8} parent=47 // pred_check
          %p2049 = pneg %p174
        $region54: #{encoder_forward.8} parent=47 // pred_check_branch
          %2051 = sbr.rel (%p2049) target = $region56
        $region55: #{encoder_forward.8} parent=47 // pred_region
          %s2052 = sand.u32 %s159, 1
          %s2053 = scalar_lea.sflag [#allocation3], %s2052
          %s2054 = sand.u32 %s159, 1
          %s2055 = smul.addr %s2054, 128
          %s2056 = scalar_lea.vmem [#allocation2], %s2055
          %2057 = dma.done %s2053, 2048
        $region56: #{encoder_forward.8} parent=47 // pred_fallthru
          _
      $region48: #{encoder_forward.8} parent=5 // pred_fallthru
        _
    $region6: #{encoder_forward.8} parent=1 // loop_footer
      %s19 = sadd.s32 1, %s15
    $region7: #{encoder_forward.8} parent=1 // loop_footer_branch
      %14 = sbr.rel target = $region3
    $region8: #{encoder_forward.8} parent=1 // loop_exit
      _
    %2058 = vsyncpa [#allocation3], 1
    %s2059 = scalar_lea.sflag [#allocation3], 1
    %2060 = vsyncpa %s2059, 1

// kernel: encoder_forward.13
$region0: #{encoder_forward.13}
  #allocation0 [shape = 'u32[]', space=smem, size = 0x4, offset = 0x4, fixed_abs, tag = 'smem constant byte address 0x4 - core index']
  #allocation1 [shape = 'u32[144,128]{1,0:T(1,128)}', space=vmem, size = 0x12000, scoped, tag = 'internal scratch']
  #allocation2 [shape = 'f32[1,1]{1,0:T(1,128)S(1)}', space=vmem, size = 0x200, scoped, tag = 'scoped memory for encoder_forward.13']
  %s0 = inlined_call_operand.vmem [shape: f32[2,2048], index: 0, kind: input, shape index: {}]
  %s1 = inlined_call_operand.vmem [shape: f32[2048,1], index: 1, kind: input, shape index: {}]
  %s2 = inlined_call_operand.<no memory space> [shape: f32[1,1], index: 2, kind: input, shape index: {}]
  %s3 = inlined_call_operand.vmem [shape: f32[2,1], index: 3, kind: output, shape index: {}]
  %s4 = sld [smem:[#allocation0]]
  $region22: #{encoder_forward.13} parent=0
    _
  %s6 = ssub.s32 1, %s4
  %s7 = scalar_select 0, %s6, %s4
  %v8 = vstv %s2
  %9 = vst [vmem:[#allocation2] sm:$0x1] %v8
  // Predicated region
  $region2: #{encoder_forward.13} parent=0 // pred_check
    _
  $region3: #{encoder_forward.13} parent=0 // pred_check_branch
    %11 = sbr.rel (0) target = $region5
  $region4: #{encoder_forward.13} parent=0 // pred_region
    _
  $region5: #{encoder_forward.13} parent=0 // pred_fallthru
    _
  // Predicated region
  $region6: #{encoder_forward.13} parent=0 // pred_check
    _
  $region7: #{encoder_forward.13} parent=0 // pred_check_branch
    %13 = sbr.rel (0) target = $region9
  $region8: #{encoder_forward.13} parent=0 // pred_region
    _
  $region9: #{encoder_forward.13} parent=0 // pred_fallthru
    _
  // Predicated region
  $region10: #{encoder_forward.13} parent=0 // pred_check
    _
  $region11: #{encoder_forward.13} parent=0 // pred_check_branch
    %15 = sbr.rel (0) target = $region13
  $region12: #{encoder_forward.13} parent=0 // pred_region
    _
  $region13: #{encoder_forward.13} parent=0 // pred_fallthru
    _
  %v16 = vld [vmem:[%s0] sm:$0xff]
  %v17 = vld [vmem:[%s0 + $0x8] sm:$0xff]
  %v18 = vld [vmem:[%s0 + $0x10] sm:$0xff]
  %v19 = vld [vmem:[%s0 + $0x18] sm:$0xff]
  %v20 = vld [vmem:[%s1] sm:$0xff]
  %v21 = vld [vmem:[%s1 + $0x8] sm:$0xff]
  %v22 = vld [vmem:[%s1 + $0x10] sm:$0xff]
  %v23 = vld [vmem:[%s1 + $0x18] sm:$0xff]
  %v24 = vld [vmem:[%s1 + $0x20] sm:$0xff]
  %v25 = vld [vmem:[%s1 + $0x28] sm:$0xff]
  %v26 = vld [vmem:[%s1 + $0x30] sm:$0xff]
  %v27 = vld [vmem:[%s1 + $0x38] sm:$0xff]
  %v28 = vld [vmem:[%s1 + $0x40] sm:$0xff]
  %v29 = vld [vmem:[%s1 + $0x48] sm:$0xff]
  %v30 = vld [vmem:[%s1 + $0x50] sm:$0xff]
  %v31 = vld [vmem:[%s1 + $0x58] sm:$0xff]
  %v32 = vld [vmem:[%s1 + $0x60] sm:$0xff]
  %v33 = vld [vmem:[%s1 + $0x68] sm:$0xff]
  %v34 = vld [vmem:[%s1 + $0x70] sm:$0xff]
  %v35 = vld [vmem:[%s1 + $0x78] sm:$0xff]
  %v36 = vld [vmem:[%s1 + $0x80] sm:$0xff]
  %v37 = vld [vmem:[%s1 + $0x88] sm:$0xff]
  %v38 = vld [vmem:[%s1 + $0x90] sm:$0xff]
  %v39 = vld [vmem:[%s1 + $0x98] sm:$0xff]
  %v40 = vld [vmem:[%s1 + $0xa0] sm:$0xff]
  %v41 = vld [vmem:[%s1 + $0xa8] sm:$0xff]
  %v42 = vld [vmem:[%s1 + $0xb0] sm:$0xff]
  %v43 = vld [vmem:[%s1 + $0xb8] sm:$0xff]
  %v44 = vld [vmem:[%s1 + $0xc0] sm:$0xff]
  %v45 = vld [vmem:[%s1 + $0xc8] sm:$0xff]
  %v46 = vld [vmem:[%s1 + $0xd0] sm:$0xff]
  %v47 = vld [vmem:[%s1 + $0xd8] sm:$0xff]
  %v48 = vld [vmem:[%s1 + $0xe0] sm:$0xff]
  %v49 = vld [vmem:[%s1 + $0xe8] sm:$0xff]
  %v50 = vld [vmem:[%s1 + $0xf0] sm:$0xff]
  %v51 = vld [vmem:[%s1 + $0xf8] sm:$0xff]
  %v52 = vld [vmem:[%s1 + $0x100] sm:$0xff]
  %v53 = vld [vmem:[%s1 + $0x108] sm:$0xff]
  %v54 = vld [vmem:[%s1 + $0x110] sm:$0xff]
  %v55 = vld [vmem:[%s1 + $0x118] sm:$0xff]
  %v56 = vld [vmem:[%s1 + $0x120] sm:$0xff]
  %v57 = vld [vmem:[%s1 + $0x128] sm:$0xff]
  %v58 = vld [vmem:[%s1 + $0x130] sm:$0xff]
  %v59 = vld [vmem:[%s1 + $0x138] sm:$0xff]
  %v60 = vld [vmem:[%s1 + $0x140] sm:$0xff]
  %v61 = vld [vmem:[%s1 + $0x148] sm:$0xff]
  %v62 = vld [vmem:[%s1 + $0x150] sm:$0xff]
  %v63 = vld [vmem:[%s1 + $0x158] sm:$0xff]
  %v64 = vld [vmem:[%s1 + $0x160] sm:$0xff]
  %v65 = vld [vmem:[%s1 + $0x168] sm:$0xff]
  %v66 = vld [vmem:[%s1 + $0x170] sm:$0xff]
  %v67 = vld [vmem:[%s1 + $0x178] sm:$0xff]
  %v68 = vld [vmem:[%s1 + $0x180] sm:$0xff]
  %v69 = vld [vmem:[%s1 + $0x188] sm:$0xff]
  %v70 = vld [vmem:[%s1 + $0x190] sm:$0xff]
  %v71 = vld [vmem:[%s1 + $0x198] sm:$0xff]
  %v72 = vld [vmem:[%s1 + $0x1a0] sm:$0xff]
  %v73 = vld [vmem:[%s1 + $0x1a8] sm:$0xff]
  %v74 = vld [vmem:[%s1 + $0x1b0] sm:$0xff]
  %v75 = vld [vmem:[%s1 + $0x1b8] sm:$0xff]
  %v76 = vld [vmem:[%s1 + $0x1c0] sm:$0xff]
  %v77 = vld [vmem:[%s1 + $0x1c8] sm:$0xff]
  %v78 = vld [vmem:[%s1 + $0x1d0] sm:$0xff]
  %v79 = vld [vmem:[%s1 + $0x1d8] sm:$0xff]
  %v80 = vld [vmem:[%s1 + $0x1e0] sm:$0xff]
  %v81 = vld [vmem:[%s1 + $0x1e8] sm:$0xff]
  %v82 = vld [vmem:[%s1 + $0x1f0] sm:$0xff]
  %v83 = vld [vmem:[%s1 + $0x1f8] sm:$0xff]
  %v84 = vld [vmem:[%s1 + $0x200] sm:$0xff]
  %v85 = vld [vmem:[%s1 + $0x208] sm:$0xff]
  %v86 = vld [vmem:[%s1 + $0x210] sm:$0xff]
  %v87 = vld [vmem:[%s1 + $0x218] sm:$0xff]
  %v88 = vld [vmem:[%s1 + $0x220] sm:$0xff]
  %v89 = vld [vmem:[%s1 + $0x228] sm:$0xff]
  %v90 = vld [vmem:[%s1 + $0x230] sm:$0xff]
  %v91 = vld [vmem:[%s1 + $0x238] sm:$0xff]
  %v92 = vld [vmem:[%s1 + $0x240] sm:$0xff]
  %v93 = vld [vmem:[%s1 + $0x248] sm:$0xff]
  %v94 = vld [vmem:[%s1 + $0x250] sm:$0xff]
  %v95 = vld [vmem:[%s1 + $0x258] sm:$0xff]
  %v96 = vld [vmem:[%s1 + $0x260] sm:$0xff]
  %v97 = vld [vmem:[%s1 + $0x268] sm:$0xff]
  %v98 = vld [vmem:[%s1 + $0x270] sm:$0xff]
  %v99 = vld [vmem:[%s1 + $0x278] sm:$0xff]
  %v100 = vld [vmem:[%s1 + $0x280] sm:$0xff]
  %v101 = vld [vmem:[%s1 + $0x288] sm:$0xff]
  %v102 = vld [vmem:[%s1 + $0x290] sm:$0xff]
  %v103 = vld [vmem:[%s1 + $0x298] sm:$0xff]
  %v104 = vld [vmem:[%s1 + $0x2a0] sm:$0xff]
  %v105 = vld [vmem:[%s1 + $0x2a8] sm:$0xff]
  %v106 = vld [vmem:[%s1 + $0x2b0] sm:$0xff]
  %v107 = vld [vmem:[%s1 + $0x2b8] sm:$0xff]
  %v108 = vld [vmem:[%s1 + $0x2c0] sm:$0xff]
  %v109 = vld [vmem:[%s1 + $0x2c8] sm:$0xff]
  %v110 = vld [vmem:[%s1 + $0x2d0] sm:$0xff]
  %v111 = vld [vmem:[%s1 + $0x2d8] sm:$0xff]
  %v112 = vld [vmem:[%s1 + $0x2e0] sm:$0xff]
  %v113 = vld [vmem:[%s1 + $0x2e8] sm:$0xff]
  %v114 = vld [vmem:[%s1 + $0x2f0] sm:$0xff]
  %v115 = vld [vmem:[%s1 + $0x2f8] sm:$0xff]
  %v116 = vld [vmem:[%s1 + $0x300] sm:$0xff]
  %v117 = vld [vmem:[%s1 + $0x308] sm:$0xff]
  %v118 = vld [vmem:[%s1 + $0x310] sm:$0xff]
  %v119 = vld [vmem:[%s1 + $0x318] sm:$0xff]
  %v120 = vld [vmem:[%s1 + $0x320] sm:$0xff]
  %v121 = vld [vmem:[%s1 + $0x328] sm:$0xff]
  %v122 = vld [vmem:[%s1 + $0x330] sm:$0xff]
  %v123 = vld [vmem:[%s1 + $0x338] sm:$0xff]
  %v124 = vld [vmem:[%s1 + $0x340] sm:$0xff]
  %v125 = vld [vmem:[%s1 + $0x348] sm:$0xff]
  %v126 = vld [vmem:[%s1 + $0x350] sm:$0xff]
  %v127 = vld [vmem:[%s1 + $0x358] sm:$0xff]
  %v128 = vld [vmem:[%s1 + $0x360] sm:$0xff]
  %v129 = vld [vmem:[%s1 + $0x368] sm:$0xff]
  %v130 = vld [vmem:[%s1 + $0x370] sm:$0xff]
  %v131 = vld [vmem:[%s1 + $0x378] sm:$0xff]
  %v132 = vld [vmem:[%s1 + $0x380] sm:$0xff]
  %v133 = vld [vmem:[%s1 + $0x388] sm:$0xff]
  %v134 = vld [vmem:[%s1 + $0x390] sm:$0xff]
  %v135 = vld [vmem:[%s1 + $0x398] sm:$0xff]
  %v136 = vld [vmem:[%s1 + $0x3a0] sm:$0xff]
  %v137 = vld [vmem:[%s1 + $0x3a8] sm:$0xff]
  %v138 = vld [vmem:[%s1 + $0x3b0] sm:$0xff]
  %v139 = vld [vmem:[%s1 + $0x3b8] sm:$0xff]
  %v140 = vld [vmem:[%s1 + $0x3c0] sm:$0xff]
  %v141 = vld [vmem:[%s1 + $0x3c8] sm:$0xff]
  %v142 = vld [vmem:[%s1 + $0x3d0] sm:$0xff]
  %v143 = vld [vmem:[%s1 + $0x3d8] sm:$0xff]
  %v144 = vld [vmem:[%s1 + $0x3e0] sm:$0xff]
  %v145 = vld [vmem:[%s1 + $0x3e8] sm:$0xff]
  %v146 = vld [vmem:[%s1 + $0x3f0] sm:$0xff]
  %v147 = vld [vmem:[%s1 + $0x3f8] sm:$0xff]
  %v148 = vld [vmem:[%s1 + $0x400] sm:$0xff]
  %v149 = vld [vmem:[%s1 + $0x408] sm:$0xff]
  %v150 = vld [vmem:[%s1 + $0x410] sm:$0xff]
  %v151 = vld [vmem:[%s1 + $0x418] sm:$0xff]
  %v152 = vld [vmem:[%s1 + $0x420] sm:$0xff]
  %v153 = vld [vmem:[%s1 + $0x428] sm:$0xff]
  %v154 = vld [vmem:[%s1 + $0x430] sm:$0xff]
  %v155 = vld [vmem:[%s1 + $0x438] sm:$0xff]
  %v156 = vld [vmem:[%s1 + $0x440] sm:$0xff]
  %v157 = vld [vmem:[%s1 + $0x448] sm:$0xff]
  %v158 = vld [vmem:[%s1 + $0x450] sm:$0xff]
  %v159 = vld [vmem:[%s1 + $0x458] sm:$0xff]
  %v160 = vld [vmem:[%s1 + $0x460] sm:$0xff]
  %v161 = vld [vmem:[%s1 + $0x468] sm:$0xff]
  %v162 = vld [vmem:[%s1 + $0x470] sm:$0xff]
  %v163 = vld [vmem:[%s1 + $0x478] sm:$0xff]
  %v164 = vld [vmem:[%s1 + $0x480] sm:$0xff]
  %v165 = vld [vmem:[%s1 + $0x488] sm:$0xff]
  %v166 = vld [vmem:[%s1 + $0x490] sm:$0xff]
  %v167 = vld [vmem:[%s1 + $0x498] sm:$0xff]
  %v168 = vld [vmem:[%s1 + $0x4a0] sm:$0xff]
  %v169 = vld [vmem:[%s1 + $0x4a8] sm:$0xff]
  %v170 = vld [vmem:[%s1 + $0x4b0] sm:$0xff]
  %v171 = vld [vmem:[%s1 + $0x4b8] sm:$0xff]
  %v172 = vld [vmem:[%s1 + $0x4c0] sm:$0xff]
  %v173 = vld [vmem:[%s1 + $0x4c8] sm:$0xff]
  %v174 = vld [vmem:[%s1 + $0x4d0] sm:$0xff]
  %v175 = vld [vmem:[%s1 + $0x4d8] sm:$0xff]
  %v176 = vld [vmem:[%s1 + $0x4e0] sm:$0xff]
  %v177 = vld [vmem:[%s1 + $0x4e8] sm:$0xff]
  %v178 = vld [vmem:[%s1 + $0x4f0] sm:$0xff]
  %v179 = vld [vmem:[%s1 + $0x4f8] sm:$0xff]
  %v180 = vld [vmem:[%s1 + $0x500] sm:$0xff]
  %v181 = vld [vmem:[%s1 + $0x508] sm:$0xff]
  %v182 = vld [vmem:[%s1 + $0x510] sm:$0xff]
  %v183 = vld [vmem:[%s1 + $0x518] sm:$0xff]
  %v184 = vld [vmem:[%s1 + $0x520] sm:$0xff]
  %v185 = vld [vmem:[%s1 + $0x528] sm:$0xff]
  %v186 = vld [vmem:[%s1 + $0x530] sm:$0xff]
  %v187 = vld [vmem:[%s1 + $0x538] sm:$0xff]
  %v188 = vld [vmem:[%s1 + $0x540] sm:$0xff]
  %v189 = vld [vmem:[%s1 + $0x548] sm:$0xff]
  %v190 = vld [vmem:[%s1 + $0x550] sm:$0xff]
  %v191 = vld [vmem:[%s1 + $0x558] sm:$0xff]
  %v192 = vld [vmem:[%s1 + $0x560] sm:$0xff]
  %v193 = vld [vmem:[%s1 + $0x568] sm:$0xff]
  %v194 = vld [vmem:[%s1 + $0x570] sm:$0xff]
  %v195 = vld [vmem:[%s1 + $0x578] sm:$0xff]
  %v196 = vld [vmem:[%s1 + $0x580] sm:$0xff]
  %v197 = vld [vmem:[%s1 + $0x588] sm:$0xff]
  %v198 = vld [vmem:[%s1 + $0x590] sm:$0xff]
  %v199 = vld [vmem:[%s1 + $0x598] sm:$0xff]
  %v200 = vld [vmem:[%s1 + $0x5a0] sm:$0xff]
  %v201 = vld [vmem:[%s1 + $0x5a8] sm:$0xff]
  %v202 = vld [vmem:[%s1 + $0x5b0] sm:$0xff]
  %v203 = vld [vmem:[%s1 + $0x5b8] sm:$0xff]
  %v204 = vld [vmem:[%s1 + $0x5c0] sm:$0xff]
  %v205 = vld [vmem:[%s1 + $0x5c8] sm:$0xff]
  %v206 = vld [vmem:[%s1 + $0x5d0] sm:$0xff]
  %v207 = vld [vmem:[%s1 + $0x5d8] sm:$0xff]
  %v208 = vld [vmem:[%s1 + $0x5e0] sm:$0xff]
  %v209 = vld [vmem:[%s1 + $0x5e8] sm:$0xff]
  %v210 = vld [vmem:[%s1 + $0x5f0] sm:$0xff]
  %v211 = vld [vmem:[%s1 + $0x5f8] sm:$0xff]
  %v212 = vld [vmem:[%s1 + $0x600] sm:$0xff]
  %v213 = vld [vmem:[%s1 + $0x608] sm:$0xff]
  %v214 = vld [vmem:[%s1 + $0x610] sm:$0xff]
  %v215 = vld [vmem:[%s1 + $0x618] sm:$0xff]
  %v216 = vld [vmem:[%s1 + $0x620] sm:$0xff]
  %v217 = vld [vmem:[%s1 + $0x628] sm:$0xff]
  %v218 = vld [vmem:[%s1 + $0x630] sm:$0xff]
  %v219 = vld [vmem:[%s1 + $0x638] sm:$0xff]
  %v220 = vld [vmem:[%s1 + $0x640] sm:$0xff]
  %v221 = vld [vmem:[%s1 + $0x648] sm:$0xff]
  %v222 = vld [vmem:[%s1 + $0x650] sm:$0xff]
  %v223 = vld [vmem:[%s1 + $0x658] sm:$0xff]
  %v224 = vld [vmem:[%s1 + $0x660] sm:$0xff]
  %v225 = vld [vmem:[%s1 + $0x668] sm:$0xff]
  %v226 = vld [vmem:[%s1 + $0x670] sm:$0xff]
  %v227 = vld [vmem:[%s1 + $0x678] sm:$0xff]
  %v228 = vld [vmem:[%s1 + $0x680] sm:$0xff]
  %v229 = vld [vmem:[%s1 + $0x688] sm:$0xff]
  %v230 = vld [vmem:[%s1 + $0x690] sm:$0xff]
  %v231 = vld [vmem:[%s1 + $0x698] sm:$0xff]
  %v232 = vld [vmem:[%s1 + $0x6a0] sm:$0xff]
  %v233 = vld [vmem:[%s1 + $0x6a8] sm:$0xff]
  %v234 = vld [vmem:[%s1 + $0x6b0] sm:$0xff]
  %v235 = vld [vmem:[%s1 + $0x6b8] sm:$0xff]
  %v236 = vld [vmem:[%s1 + $0x6c0] sm:$0xff]
  %v237 = vld [vmem:[%s1 + $0x6c8] sm:$0xff]
  %v238 = vld [vmem:[%s1 + $0x6d0] sm:$0xff]
  %v239 = vld [vmem:[%s1 + $0x6d8] sm:$0xff]
  %v240 = vld [vmem:[%s1 + $0x6e0] sm:$0xff]
  %v241 = vld [vmem:[%s1 + $0x6e8] sm:$0xff]
  %v242 = vld [vmem:[%s1 + $0x6f0] sm:$0xff]
  %v243 = vld [vmem:[%s1 + $0x6f8] sm:$0xff]
  %v244 = vld [vmem:[%s1 + $0x700] sm:$0xff]
  %v245 = vld [vmem:[%s1 + $0x708] sm:$0xff]
  %v246 = vld [vmem:[%s1 + $0x710] sm:$0xff]
  %v247 = vld [vmem:[%s1 + $0x718] sm:$0xff]
  %v248 = vld [vmem:[%s1 + $0x720] sm:$0xff]
  %v249 = vld [vmem:[%s1 + $0x728] sm:$0xff]
  %v250 = vld [vmem:[%s1 + $0x730] sm:$0xff]
  %v251 = vld [vmem:[%s1 + $0x738] sm:$0xff]
  %v252 = vld [vmem:[%s1 + $0x740] sm:$0xff]
  %v253 = vld [vmem:[%s1 + $0x748] sm:$0xff]
  %v254 = vld [vmem:[%s1 + $0x750] sm:$0xff]
  %v255 = vld [vmem:[%s1 + $0x758] sm:$0xff]
  %v256 = vld [vmem:[%s1 + $0x760] sm:$0xff]
  %v257 = vld [vmem:[%s1 + $0x768] sm:$0xff]
  %v258 = vld [vmem:[%s1 + $0x770] sm:$0xff]
  %v259 = vld [vmem:[%s1 + $0x778] sm:$0xff]
  %v260 = vld [vmem:[%s1 + $0x780] sm:$0xff]
  %v261 = vld [vmem:[%s1 + $0x788] sm:$0xff]
  %v262 = vld [vmem:[%s1 + $0x790] sm:$0xff]
  %v263 = vld [vmem:[%s1 + $0x798] sm:$0xff]
  %v264 = vld [vmem:[%s1 + $0x7a0] sm:$0xff]
  %v265 = vld [vmem:[%s1 + $0x7a8] sm:$0xff]
  %v266 = vld [vmem:[%s1 + $0x7b0] sm:$0xff]
  %v267 = vld [vmem:[%s1 + $0x7b8] sm:$0xff]
  %v268 = vld [vmem:[%s1 + $0x7c0] sm:$0xff]
  %v269 = vld [vmem:[%s1 + $0x7c8] sm:$0xff]
  %v270 = vld [vmem:[%s1 + $0x7d0] sm:$0xff]
  %v271 = vld [vmem:[%s1 + $0x7d8] sm:$0xff]
  %v272 = vld [vmem:[%s1 + $0x7e0] sm:$0xff]
  %v273 = vld [vmem:[%s1 + $0x7e8] sm:$0xff]
  %v274 = vld [vmem:[%s1 + $0x7f0] sm:$0xff]
  %v275 = vld [vmem:[%s1 + $0x7f8] sm:$0xff]
  %v276 = vld [vmem:[#allocation2] sm:$0x1]
  %v278 = vlaneseq
  %v279 = vshrl.u32 %v278, 7
  %v280 = vsub.s32 0, %v279
  %v281 = vrot.slane %v276, %v280
  %v287 = vcombine.high %v16, %v16
  %v289 = vunpack.c.l.s4 1983009808
  %v290 = vunpack.c.0.s8 %v289
  %v291 = vlaneseq
  %v292 = vshrl.u32 %v291, 7
  %v293 = vsub.s32 %v290, %v292
  %v294 = vrot.slane %v16, %v293
  %v296 = vunpack.c.l.s4 1983009808
  %v297 = vunpack.c.0.s8 %v296
  %v298 = vlaneseq
  %v299 = vshrl.u32 %v298, 7
  %v300 = vsub.s32 %v297, %v299
  %v301 = vrot.slane %v287, %v300
  %v302 = vcombine.high %v294, %v294
  %v303 = vcombine.high %v301, %v301
  %v304 = vcombine.high %v17, %v17
  %v306 = vunpack.c.l.s4 1983009808
  %v307 = vunpack.c.0.s8 %v306
  %v308 = vlaneseq
  %v309 = vshrl.u32 %v308, 7
  %v310 = vsub.s32 %v307, %v309
  %v311 = vrot.slane %v17, %v310
  %v313 = vunpack.c.l.s4 1983009808
  %v314 = vunpack.c.0.s8 %v313
  %v315 = vlaneseq
  %v316 = vshrl.u32 %v315, 7
  %v317 = vsub.s32 %v314, %v316
  %v318 = vrot.slane %v304, %v317
  %v319 = vcombine.high %v311, %v311
  %v320 = vcombine.high %v318, %v318
  %v321 = vcombine.high %v18, %v18
  %v323 = vunpack.c.l.s4 1983009808
  %v324 = vunpack.c.0.s8 %v323
  %v325 = vlaneseq
  %v326 = vshrl.u32 %v325, 7
  %v327 = vsub.s32 %v324, %v326
  %v328 = vrot.slane %v18, %v327
  %v330 = vunpack.c.l.s4 1983009808
  %v331 = vunpack.c.0.s8 %v330
  %v332 = vlaneseq
  %v333 = vshrl.u32 %v332, 7
  %v334 = vsub.s32 %v331, %v333
  %v335 = vrot.slane %v321, %v334
  %v336 = vcombine.high %v328, %v328
  %v337 = vcombine.high %v335, %v335
  %v338 = vcombine.high %v19, %v19
  %v340 = vunpack.c.l.s4 1983009808
  %v341 = vunpack.c.0.s8 %v340
  %v342 = vlaneseq
  %v343 = vshrl.u32 %v342, 7
  %v344 = vsub.s32 %v341, %v343
  %v345 = vrot.slane %v19, %v344
  %v347 = vunpack.c.l.s4 1983009808
  %v348 = vunpack.c.0.s8 %v347
  %v349 = vlaneseq
  %v350 = vshrl.u32 %v349, 7
  %v351 = vsub.s32 %v348, %v350
  %v352 = vrot.slane %v338, %v351
  %v353 = vcombine.high %v345, %v345
  %v354 = vcombine.high %v352, %v352
  %371 = vmatprep.subr.mxu0 0.0
  %372 = vmatpush1.msra.mxu0 %v35
  %373 = vmatprep.subr.mxu0 0.0
  %374 = vmatpush1.msra.mxu0 %v34
  %375 = vmatprep.subr.mxu0 0.0
  %376 = vmatpush1.msra.mxu0 %v33
  %377 = vmatprep.subr.mxu0 0.0
  %378 = vmatpush1.msra.mxu0 %v32
  %379 = vmatprep.subr.mxu0 0.0
  %380 = vmatpush1.msra.mxu0 %v31
  %381 = vmatprep.subr.mxu0 0.0
  %382 = vmatpush1.msra.mxu0 %v30
  %383 = vmatprep.subr.mxu0 0.0
  %384 = vmatpush1.msra.mxu0 %v29
  %385 = vmatprep.subr.mxu0 0.0
  %386 = vmatpush1.msra.mxu0 %v28
  %387 = vmatprep.subr.mxu0 0.0
  %388 = vmatpush1.msra.mxu0 %v27
  %389 = vmatprep.subr.mxu0 0.0
  %390 = vmatpush1.msra.mxu0 %v26
  %391 = vmatprep.subr.mxu0 0.0
  %392 = vmatpush1.msra.mxu0 %v25
  %393 = vmatprep.subr.mxu0 0.0
  %394 = vmatpush1.msra.mxu0 %v24
  %395 = vmatprep.subr.mxu0 0.0
  %396 = vmatpush1.msra.mxu0 %v23
  %397 = vmatprep.subr.mxu0 0.0
  %398 = vmatpush1.msra.mxu0 %v22
  %399 = vmatprep.subr.mxu0 0.0
  %400 = vmatpush1.msra.mxu0 %v21
  %401 = vmatprep.subr.mxu0 0.0
  %402 = vmatpush1.msra.mxu0 %v20
  %403 = vmatprep.subr.mxu0 0.0
  %404 = vmatpush2.msra.mxu0 %v51
  %405 = vmatprep.subr.mxu0 0.0
  %406 = vmatpush2.msra.mxu0 %v50
  %407 = vmatprep.subr.mxu0 0.0
  %408 = vmatpush2.msra.mxu0 %v49
  %409 = vmatprep.subr.mxu0 0.0
  %410 = vmatpush2.msra.mxu0 %v48
  %411 = vmatprep.subr.mxu0 0.0
  %412 = vmatpush2.msra.mxu0 %v47
  %413 = vmatprep.subr.mxu0 0.0
  %414 = vmatpush2.msra.mxu0 %v46
  %415 = vmatprep.subr.mxu0 0.0
  %416 = vmatpush2.msra.mxu0 %v45
  %417 = vmatprep.subr.mxu0 0.0
  %418 = vmatpush2.msra.mxu0 %v44
  %419 = vmatprep.subr.mxu0 0.0
  %420 = vmatpush2.msra.mxu0 %v43
  %421 = vmatprep.subr.mxu0 0.0
  %422 = vmatpush2.msra.mxu0 %v42
  %423 = vmatprep.subr.mxu0 0.0
  %424 = vmatpush2.msra.mxu0 %v41
  %425 = vmatprep.subr.mxu0 0.0
  %426 = vmatpush2.msra.mxu0 %v40
  %427 = vmatprep.subr.mxu0 0.0
  %428 = vmatpush2.msra.mxu0 %v39
  %429 = vmatprep.subr.mxu0 0.0
  %430 = vmatpush2.msra.mxu0 %v38
  %431 = vmatprep.subr.mxu0 0.0
  %432 = vmatpush2.msra.mxu0 %v37
  %433 = vmatprep.subr.mxu0 0.0
  %434 = vmatpush2.msra.mxu0 %v36
  %435 = vmatprep.mubr.f32.mxu0 %v302
  %436 = vmatmul.mubr.f32.gmra.mxu0 %v294
  %v437 = vpop.f32.mrf.mxu0
  %v438 = vadd.f32 %v281, %v437
  %v439 = vpop.f32.mrf.mxu0
  %440 = vdwg.mxu0
  %441 = vmatprep.subr.mxu0 0.0
  %442 = vmatpush1.msra.mxu0 %v67
  %443 = vmatprep.subr.mxu0 0.0
  %444 = vmatpush1.msra.mxu0 %v66
  %445 = vmatprep.subr.mxu0 0.0
  %446 = vmatpush1.msra.mxu0 %v65
  %447 = vmatprep.subr.mxu0 0.0
  %448 = vmatpush1.msra.mxu0 %v64
  %449 = vmatprep.subr.mxu0 0.0
  %450 = vmatpush1.msra.mxu0 %v63
  %451 = vmatprep.subr.mxu0 0.0
  %452 = vmatpush1.msra.mxu0 %v62
  %453 = vmatprep.subr.mxu0 0.0
  %454 = vmatpush1.msra.mxu0 %v61
  %455 = vmatprep.subr.mxu0 0.0
  %456 = vmatpush1.msra.mxu0 %v60
  %457 = vmatprep.subr.mxu0 0.0
  %458 = vmatpush1.msra.mxu0 %v59
  %459 = vmatprep.subr.mxu0 0.0
  %460 = vmatpush1.msra.mxu0 %v58
  %461 = vmatprep.subr.mxu0 0.0
  %462 = vmatpush1.msra.mxu0 %v57
  %463 = vmatprep.subr.mxu0 0.0
  %464 = vmatpush1.msra.mxu0 %v56
  %465 = vmatprep.subr.mxu0 0.0
  %466 = vmatpush1.msra.mxu0 %v55
  %467 = vmatprep.subr.mxu0 0.0
  %468 = vmatpush1.msra.mxu0 %v54
  %469 = vmatprep.subr.mxu0 0.0
  %470 = vmatpush1.msra.mxu0 %v53
  %471 = vmatprep.subr.mxu0 0.0
  %472 = vmatpush1.msra.mxu0 %v52
  %473 = vmatprep.subr.mxu0 0.0
  %474 = vmatpush2.msra.mxu0 %v83
  %475 = vmatprep.subr.mxu0 0.0
  %476 = vmatpush2.msra.mxu0 %v82
  %477 = vmatprep.subr.mxu0 0.0
  %478 = vmatpush2.msra.mxu0 %v81
  %479 = vmatprep.subr.mxu0 0.0
  %480 = vmatpush2.msra.mxu0 %v80
  %481 = vmatprep.subr.mxu0 0.0
  %482 = vmatpush2.msra.mxu0 %v79
  %483 = vmatprep.subr.mxu0 0.0
  %484 = vmatpush2.msra.mxu0 %v78
  %485 = vmatprep.subr.mxu0 0.0
  %486 = vmatpush2.msra.mxu0 %v77
  %487 = vmatprep.subr.mxu0 0.0
  %488 = vmatpush2.msra.mxu0 %v76
  %489 = vmatprep.subr.mxu0 0.0
  %490 = vmatpush2.msra.mxu0 %v75
  %491 = vmatprep.subr.mxu0 0.0
  %492 = vmatpush2.msra.mxu0 %v74
  %493 = vmatprep.subr.mxu0 0.0
  %494 = vmatpush2.msra.mxu0 %v73
  %495 = vmatprep.subr.mxu0 0.0
  %496 = vmatpush2.msra.mxu0 %v72
  %497 = vmatprep.subr.mxu0 0.0
  %498 = vmatpush2.msra.mxu0 %v71
  %499 = vmatprep.subr.mxu0 0.0
  %500 = vmatpush2.msra.mxu0 %v70
  %501 = vmatprep.subr.mxu0 0.0
  %502 = vmatpush2.msra.mxu0 %v69
  %503 = vmatprep.subr.mxu0 0.0
  %504 = vmatpush2.msra.mxu0 %v68
  %505 = vmatprep.mubr.f32.mxu0 %v303
  %506 = vmatmul.mubr.f32.gmra.mxu0 %v301
  %v507 = vpop.f32.mrf.mxu0
  %v508 = vadd.f32 %v438, %v507
  %v509 = vpop.f32.mrf.mxu0
  %510 = vdwg.mxu0
  %511 = vmatprep.subr.mxu0 0.0
  %512 = vmatpush1.msra.mxu0 %v99
  %513 = vmatprep.subr.mxu0 0.0
  %514 = vmatpush1.msra.mxu0 %v98
  %515 = vmatprep.subr.mxu0 0.0
  %516 = vmatpush1.msra.mxu0 %v97
  %517 = vmatprep.subr.mxu0 0.0
  %518 = vmatpush1.msra.mxu0 %v96
  %519 = vmatprep.subr.mxu0 0.0
  %520 = vmatpush1.msra.mxu0 %v95
  %521 = vmatprep.subr.mxu0 0.0
  %522 = vmatpush1.msra.mxu0 %v94
  %523 = vmatprep.subr.mxu0 0.0
  %524 = vmatpush1.msra.mxu0 %v93
  %525 = vmatprep.subr.mxu0 0.0
  %526 = vmatpush1.msra.mxu0 %v92
  %527 = vmatprep.subr.mxu0 0.0
  %528 = vmatpush1.msra.mxu0 %v91
  %529 = vmatprep.subr.mxu0 0.0
  %530 = vmatpush1.msra.mxu0 %v90
  %531 = vmatprep.subr.mxu0 0.0
  %532 = vmatpush1.msra.mxu0 %v89
  %533 = vmatprep.subr.mxu0 0.0
  %534 = vmatpush1.msra.mxu0 %v88
  %535 = vmatprep.subr.mxu0 0.0
  %536 = vmatpush1.msra.mxu0 %v87
  %537 = vmatprep.subr.mxu0 0.0
  %538 = vmatpush1.msra.mxu0 %v86
  %539 = vmatprep.subr.mxu0 0.0
  %540 = vmatpush1.msra.mxu0 %v85
  %541 = vmatprep.subr.mxu0 0.0
  %542 = vmatpush1.msra.mxu0 %v84
  %543 = vmatprep.subr.mxu0 0.0
  %544 = vmatpush2.msra.mxu0 %v115
  %545 = vmatprep.subr.mxu0 0.0
  %546 = vmatpush2.msra.mxu0 %v114
  %547 = vmatprep.subr.mxu0 0.0
  %548 = vmatpush2.msra.mxu0 %v113
  %549 = vmatprep.subr.mxu0 0.0
  %550 = vmatpush2.msra.mxu0 %v112
  %551 = vmatprep.subr.mxu0 0.0
  %552 = vmatpush2.msra.mxu0 %v111
  %553 = vmatprep.subr.mxu0 0.0
  %554 = vmatpush2.msra.mxu0 %v110
  %555 = vmatprep.subr.mxu0 0.0
  %556 = vmatpush2.msra.mxu0 %v109
  %557 = vmatprep.subr.mxu0 0.0
  %558 = vmatpush2.msra.mxu0 %v108
  %559 = vmatprep.subr.mxu0 0.0
  %560 = vmatpush2.msra.mxu0 %v107
  %561 = vmatprep.subr.mxu0 0.0
  %562 = vmatpush2.msra.mxu0 %v106
  %563 = vmatprep.subr.mxu0 0.0
  %564 = vmatpush2.msra.mxu0 %v105
  %565 = vmatprep.subr.mxu0 0.0
  %566 = vmatpush2.msra.mxu0 %v104
  %567 = vmatprep.subr.mxu0 0.0
  %568 = vmatpush2.msra.mxu0 %v103
  %569 = vmatprep.subr.mxu0 0.0
  %570 = vmatpush2.msra.mxu0 %v102
  %571 = vmatprep.subr.mxu0 0.0
  %572 = vmatpush2.msra.mxu0 %v101
  %573 = vmatprep.subr.mxu0 0.0
  %574 = vmatpush2.msra.mxu0 %v100
  %575 = vmatprep.mubr.f32.mxu0 %v319
  %576 = vmatmul.mubr.f32.gmra.mxu0 %v311
  %v577 = vpop.f32.mrf.mxu0
  %v578 = vadd.f32 %v508, %v577
  %v579 = vpop.f32.mrf.mxu0
  %580 = vdwg.mxu0
  %581 = vmatprep.subr.mxu0 0.0
  %582 = vmatpush1.msra.mxu0 %v131
  %583 = vmatprep.subr.mxu0 0.0
  %584 = vmatpush1.msra.mxu0 %v130
  %585 = vmatprep.subr.mxu0 0.0
  %586 = vmatpush1.msra.mxu0 %v129
  %587 = vmatprep.subr.mxu0 0.0
  %588 = vmatpush1.msra.mxu0 %v128
  %589 = vmatprep.subr.mxu0 0.0
  %590 = vmatpush1.msra.mxu0 %v127
  %591 = vmatprep.subr.mxu0 0.0
  %592 = vmatpush1.msra.mxu0 %v126
  %593 = vmatprep.subr.mxu0 0.0
  %594 = vmatpush1.msra.mxu0 %v125
  %595 = vmatprep.subr.mxu0 0.0
  %596 = vmatpush1.msra.mxu0 %v124
  %597 = vmatprep.subr.mxu0 0.0
  %598 = vmatpush1.msra.mxu0 %v123
  %599 = vmatprep.subr.mxu0 0.0
  %600 = vmatpush1.msra.mxu0 %v122
  %601 = vmatprep.subr.mxu0 0.0
  %602 = vmatpush1.msra.mxu0 %v121
  %603 = vmatprep.subr.mxu0 0.0
  %604 = vmatpush1.msra.mxu0 %v120
  %605 = vmatprep.subr.mxu0 0.0
  %606 = vmatpush1.msra.mxu0 %v119
  %607 = vmatprep.subr.mxu0 0.0
  %608 = vmatpush1.msra.mxu0 %v118
  %609 = vmatprep.subr.mxu0 0.0
  %610 = vmatpush1.msra.mxu0 %v117
  %611 = vmatprep.subr.mxu0 0.0
  %612 = vmatpush1.msra.mxu0 %v116
  %613 = vmatprep.subr.mxu0 0.0
  %614 = vmatpush2.msra.mxu0 %v147
  %615 = vmatprep.subr.mxu0 0.0
  %616 = vmatpush2.msra.mxu0 %v146
  %617 = vmatprep.subr.mxu0 0.0
  %618 = vmatpush2.msra.mxu0 %v145
  %619 = vmatprep.subr.mxu0 0.0
  %620 = vmatpush2.msra.mxu0 %v144
  %621 = vmatprep.subr.mxu0 0.0
  %622 = vmatpush2.msra.mxu0 %v143
  %623 = vmatprep.subr.mxu0 0.0
  %624 = vmatpush2.msra.mxu0 %v142
  %625 = vmatprep.subr.mxu0 0.0
  %626 = vmatpush2.msra.mxu0 %v141
  %627 = vmatprep.subr.mxu0 0.0
  %628 = vmatpush2.msra.mxu0 %v140
  %629 = vmatprep.subr.mxu0 0.0
  %630 = vmatpush2.msra.mxu0 %v139
  %631 = vmatprep.subr.mxu0 0.0
  %632 = vmatpush2.msra.mxu0 %v138
  %633 = vmatprep.subr.mxu0 0.0
  %634 = vmatpush2.msra.mxu0 %v137
  %635 = vmatprep.subr.mxu0 0.0
  %636 = vmatpush2.msra.mxu0 %v136
  %637 = vmatprep.subr.mxu0 0.0
  %638 = vmatpush2.msra.mxu0 %v135
  %639 = vmatprep.subr.mxu0 0.0
  %640 = vmatpush2.msra.mxu0 %v134
  %641 = vmatprep.subr.mxu0 0.0
  %642 = vmatpush2.msra.mxu0 %v133
  %643 = vmatprep.subr.mxu0 0.0
  %644 = vmatpush2.msra.mxu0 %v132
  %645 = vmatprep.mubr.f32.mxu0 %v320
  %646 = vmatmul.mubr.f32.gmra.mxu0 %v318
  %v647 = vpop.f32.mrf.mxu0
  %v648 = vadd.f32 %v578, %v647
  %v649 = vpop.f32.mrf.mxu0
  %650 = vdwg.mxu0
  %651 = vmatprep.subr.mxu0 0.0
  %652 = vmatpush1.msra.mxu0 %v163
  %653 = vmatprep.subr.mxu0 0.0
  %654 = vmatpush1.msra.mxu0 %v162
  %655 = vmatprep.subr.mxu0 0.0
  %656 = vmatpush1.msra.mxu0 %v161
  %657 = vmatprep.subr.mxu0 0.0
  %658 = vmatpush1.msra.mxu0 %v160
  %659 = vmatprep.subr.mxu0 0.0
  %660 = vmatpush1.msra.mxu0 %v159
  %661 = vmatprep.subr.mxu0 0.0
  %662 = vmatpush1.msra.mxu0 %v158
  %663 = vmatprep.subr.mxu0 0.0
  %664 = vmatpush1.msra.mxu0 %v157
  %665 = vmatprep.subr.mxu0 0.0
  %666 = vmatpush1.msra.mxu0 %v156
  %667 = vmatprep.subr.mxu0 0.0
  %668 = vmatpush1.msra.mxu0 %v155
  %669 = vmatprep.subr.mxu0 0.0
  %670 = vmatpush1.msra.mxu0 %v154
  %671 = vmatprep.subr.mxu0 0.0
  %672 = vmatpush1.msra.mxu0 %v153
  %673 = vmatprep.subr.mxu0 0.0
  %674 = vmatpush1.msra.mxu0 %v152
  %675 = vmatprep.subr.mxu0 0.0
  %676 = vmatpush1.msra.mxu0 %v151
  %677 = vmatprep.subr.mxu0 0.0
  %678 = vmatpush1.msra.mxu0 %v150
  %679 = vmatprep.subr.mxu0 0.0
  %680 = vmatpush1.msra.mxu0 %v149
  %681 = vmatprep.subr.mxu0 0.0
  %682 = vmatpush1.msra.mxu0 %v148
  %683 = vmatprep.subr.mxu0 0.0
  %684 = vmatpush2.msra.mxu0 %v179
  %685 = vmatprep.subr.mxu0 0.0
  %686 = vmatpush2.msra.mxu0 %v178
  %687 = vmatprep.subr.mxu0 0.0
  %688 = vmatpush2.msra.mxu0 %v177
  %689 = vmatprep.subr.mxu0 0.0
  %690 = vmatpush2.msra.mxu0 %v176
  %691 = vmatprep.subr.mxu0 0.0
  %692 = vmatpush2.msra.mxu0 %v175
  %693 = vmatprep.subr.mxu0 0.0
  %694 = vmatpush2.msra.mxu0 %v174
  %695 = vmatprep.subr.mxu0 0.0
  %696 = vmatpush2.msra.mxu0 %v173
  %697 = vmatprep.subr.mxu0 0.0
  %698 = vmatpush2.msra.mxu0 %v172
  %699 = vmatprep.subr.mxu0 0.0
  %700 = vmatpush2.msra.mxu0 %v171
  %701 = vmatprep.subr.mxu0 0.0
  %702 = vmatpush2.msra.mxu0 %v170
  %703 = vmatprep.subr.mxu0 0.0
  %704 = vmatpush2.msra.mxu0 %v169
  %705 = vmatprep.subr.mxu0 0.0
  %706 = vmatpush2.msra.mxu0 %v168
  %707 = vmatprep.subr.mxu0 0.0
  %708 = vmatpush2.msra.mxu0 %v167
  %709 = vmatprep.subr.mxu0 0.0
  %710 = vmatpush2.msra.mxu0 %v166
  %711 = vmatprep.subr.mxu0 0.0
  %712 = vmatpush2.msra.mxu0 %v165
  %713 = vmatprep.subr.mxu0 0.0
  %714 = vmatpush2.msra.mxu0 %v164
  %715 = vmatprep.mubr.f32.mxu0 %v336
  %716 = vmatmul.mubr.f32.gmra.mxu0 %v328
  %v717 = vpop.f32.mrf.mxu0
  %v718 = vadd.f32 %v648, %v717
  %v719 = vpop.f32.mrf.mxu0
  %720 = vdwg.mxu0
  %721 = vmatprep.subr.mxu0 0.0
  %722 = vmatpush1.msra.mxu0 %v195
  %723 = vmatprep.subr.mxu0 0.0
  %724 = vmatpush1.msra.mxu0 %v194
  %725 = vmatprep.subr.mxu0 0.0
  %726 = vmatpush1.msra.mxu0 %v193
  %727 = vmatprep.subr.mxu0 0.0
  %728 = vmatpush1.msra.mxu0 %v192
  %729 = vmatprep.subr.mxu0 0.0
  %730 = vmatpush1.msra.mxu0 %v191
  %731 = vmatprep.subr.mxu0 0.0
  %732 = vmatpush1.msra.mxu0 %v190
  %733 = vmatprep.subr.mxu0 0.0
  %734 = vmatpush1.msra.mxu0 %v189
  %735 = vmatprep.subr.mxu0 0.0
  %736 = vmatpush1.msra.mxu0 %v188
  %737 = vmatprep.subr.mxu0 0.0
  %738 = vmatpush1.msra.mxu0 %v187
  %739 = vmatprep.subr.mxu0 0.0
  %740 = vmatpush1.msra.mxu0 %v186
  %741 = vmatprep.subr.mxu0 0.0
  %742 = vmatpush1.msra.mxu0 %v185
  %743 = vmatprep.subr.mxu0 0.0
  %744 = vmatpush1.msra.mxu0 %v184
  %745 = vmatprep.subr.mxu0 0.0
  %746 = vmatpush1.msra.mxu0 %v183
  %747 = vmatprep.subr.mxu0 0.0
  %748 = vmatpush1.msra.mxu0 %v182
  %749 = vmatprep.subr.mxu0 0.0
  %750 = vmatpush1.msra.mxu0 %v181
  %751 = vmatprep.subr.mxu0 0.0
  %752 = vmatpush1.msra.mxu0 %v180
  %753 = vmatprep.subr.mxu0 0.0
  %754 = vmatpush2.msra.mxu0 %v211
  %755 = vmatprep.subr.mxu0 0.0
  %756 = vmatpush2.msra.mxu0 %v210
  %757 = vmatprep.subr.mxu0 0.0
  %758 = vmatpush2.msra.mxu0 %v209
  %759 = vmatprep.subr.mxu0 0.0
  %760 = vmatpush2.msra.mxu0 %v208
  %761 = vmatprep.subr.mxu0 0.0
  %762 = vmatpush2.msra.mxu0 %v207
  %763 = vmatprep.subr.mxu0 0.0
  %764 = vmatpush2.msra.mxu0 %v206
  %765 = vmatprep.subr.mxu0 0.0
  %766 = vmatpush2.msra.mxu0 %v205
  %767 = vmatprep.subr.mxu0 0.0
  %768 = vmatpush2.msra.mxu0 %v204
  %769 = vmatprep.subr.mxu0 0.0
  %770 = vmatpush2.msra.mxu0 %v203
  %771 = vmatprep.subr.mxu0 0.0
  %772 = vmatpush2.msra.mxu0 %v202
  %773 = vmatprep.subr.mxu0 0.0
  %774 = vmatpush2.msra.mxu0 %v201
  %775 = vmatprep.subr.mxu0 0.0
  %776 = vmatpush2.msra.mxu0 %v200
  %777 = vmatprep.subr.mxu0 0.0
  %778 = vmatpush2.msra.mxu0 %v199
  %779 = vmatprep.subr.mxu0 0.0
  %780 = vmatpush2.msra.mxu0 %v198
  %781 = vmatprep.subr.mxu0 0.0
  %782 = vmatpush2.msra.mxu0 %v197
  %783 = vmatprep.subr.mxu0 0.0
  %784 = vmatpush2.msra.mxu0 %v196
  %785 = vmatprep.mubr.f32.mxu0 %v337
  %786 = vmatmul.mubr.f32.gmra.mxu0 %v335
  %v787 = vpop.f32.mrf.mxu0
  %v788 = vadd.f32 %v718, %v787
  %v789 = vpop.f32.mrf.mxu0
  %790 = vdwg.mxu0
  %791 = vmatprep.subr.mxu0 0.0
  %792 = vmatpush1.msra.mxu0 %v227
  %793 = vmatprep.subr.mxu0 0.0
  %794 = vmatpush1.msra.mxu0 %v226
  %795 = vmatprep.subr.mxu0 0.0
  %796 = vmatpush1.msra.mxu0 %v225
  %797 = vmatprep.subr.mxu0 0.0
  %798 = vmatpush1.msra.mxu0 %v224
  %799 = vmatprep.subr.mxu0 0.0
  %800 = vmatpush1.msra.mxu0 %v223
  %801 = vmatprep.subr.mxu0 0.0
  %802 = vmatpush1.msra.mxu0 %v222
  %803 = vmatprep.subr.mxu0 0.0
  %804 = vmatpush1.msra.mxu0 %v221
  %805 = vmatprep.subr.mxu0 0.0
  %806 = vmatpush1.msra.mxu0 %v220
  %807 = vmatprep.subr.mxu0 0.0
  %808 = vmatpush1.msra.mxu0 %v219
  %809 = vmatprep.subr.mxu0 0.0
  %810 = vmatpush1.msra.mxu0 %v218
  %811 = vmatprep.subr.mxu0 0.0
  %812 = vmatpush1.msra.mxu0 %v217
  %813 = vmatprep.subr.mxu0 0.0
  %814 = vmatpush1.msra.mxu0 %v216
  %815 = vmatprep.subr.mxu0 0.0
  %816 = vmatpush1.msra.mxu0 %v215
  %817 = vmatprep.subr.mxu0 0.0
  %818 = vmatpush1.msra.mxu0 %v214
  %819 = vmatprep.subr.mxu0 0.0
  %820 = vmatpush1.msra.mxu0 %v213
  %821 = vmatprep.subr.mxu0 0.0
  %822 = vmatpush1.msra.mxu0 %v212
  %823 = vmatprep.subr.mxu0 0.0
  %824 = vmatpush2.msra.mxu0 %v243
  %825 = vmatprep.subr.mxu0 0.0
  %826 = vmatpush2.msra.mxu0 %v242
  %827 = vmatprep.subr.mxu0 0.0
  %828 = vmatpush2.msra.mxu0 %v241
  %829 = vmatprep.subr.mxu0 0.0
  %830 = vmatpush2.msra.mxu0 %v240
  %831 = vmatprep.subr.mxu0 0.0
  %832 = vmatpush2.msra.mxu0 %v239
  %833 = vmatprep.subr.mxu0 0.0
  %834 = vmatpush2.msra.mxu0 %v238
  %835 = vmatprep.subr.mxu0 0.0
  %836 = vmatpush2.msra.mxu0 %v237
  %837 = vmatprep.subr.mxu0 0.0
  %838 = vmatpush2.msra.mxu0 %v236
  %839 = vmatprep.subr.mxu0 0.0
  %840 = vmatpush2.msra.mxu0 %v235
  %841 = vmatprep.subr.mxu0 0.0
  %842 = vmatpush2.msra.mxu0 %v234
  %843 = vmatprep.subr.mxu0 0.0
  %844 = vmatpush2.msra.mxu0 %v233
  %845 = vmatprep.subr.mxu0 0.0
  %846 = vmatpush2.msra.mxu0 %v232
  %847 = vmatprep.subr.mxu0 0.0
  %848 = vmatpush2.msra.mxu0 %v231
  %849 = vmatprep.subr.mxu0 0.0
  %850 = vmatpush2.msra.mxu0 %v230
  %851 = vmatprep.subr.mxu0 0.0
  %852 = vmatpush2.msra.mxu0 %v229
  %853 = vmatprep.subr.mxu0 0.0
  %854 = vmatpush2.msra.mxu0 %v228
  %855 = vmatprep.mubr.f32.mxu0 %v353
  %856 = vmatmul.mubr.f32.gmra.mxu0 %v345
  %v857 = vpop.f32.mrf.mxu0
  %v858 = vadd.f32 %v788, %v857
  %v859 = vpop.f32.mrf.mxu0
  %860 = vdwg.mxu0
  %861 = vmatprep.subr.mxu0 0.0
  %862 = vmatpush1.msra.mxu0 %v259
  %863 = vmatprep.subr.mxu0 0.0
  %864 = vmatpush1.msra.mxu0 %v258
  %865 = vmatprep.subr.mxu0 0.0
  %866 = vmatpush1.msra.mxu0 %v257
  %867 = vmatprep.subr.mxu0 0.0
  %868 = vmatpush1.msra.mxu0 %v256
  %869 = vmatprep.subr.mxu0 0.0
  %870 = vmatpush1.msra.mxu0 %v255
  %871 = vmatprep.subr.mxu0 0.0
  %872 = vmatpush1.msra.mxu0 %v254
  %873 = vmatprep.subr.mxu0 0.0
  %874 = vmatpush1.msra.mxu0 %v253
  %875 = vmatprep.subr.mxu0 0.0
  %876 = vmatpush1.msra.mxu0 %v252
  %877 = vmatprep.subr.mxu0 0.0
  %878 = vmatpush1.msra.mxu0 %v251
  %879 = vmatprep.subr.mxu0 0.0
  %880 = vmatpush1.msra.mxu0 %v250
  %881 = vmatprep.subr.mxu0 0.0
  %882 = vmatpush1.msra.mxu0 %v249
  %883 = vmatprep.subr.mxu0 0.0
  %884 = vmatpush1.msra.mxu0 %v248
  %885 = vmatprep.subr.mxu0 0.0
  %886 = vmatpush1.msra.mxu0 %v247
  %887 = vmatprep.subr.mxu0 0.0
  %888 = vmatpush1.msra.mxu0 %v246
  %889 = vmatprep.subr.mxu0 0.0
  %890 = vmatpush1.msra.mxu0 %v245
  %891 = vmatprep.subr.mxu0 0.0
  %892 = vmatpush1.msra.mxu0 %v244
  %893 = vmatprep.subr.mxu0 0.0
  %894 = vmatpush2.msra.mxu0 %v275
  %895 = vmatprep.subr.mxu0 0.0
  %896 = vmatpush2.msra.mxu0 %v274
  %897 = vmatprep.subr.mxu0 0.0
  %898 = vmatpush2.msra.mxu0 %v273
  %899 = vmatprep.subr.mxu0 0.0
  %900 = vmatpush2.msra.mxu0 %v272
  %901 = vmatprep.subr.mxu0 0.0
  %902 = vmatpush2.msra.mxu0 %v271
  %903 = vmatprep.subr.mxu0 0.0
  %904 = vmatpush2.msra.mxu0 %v270
  %905 = vmatprep.subr.mxu0 0.0
  %906 = vmatpush2.msra.mxu0 %v269
  %907 = vmatprep.subr.mxu0 0.0
  %908 = vmatpush2.msra.mxu0 %v268
  %909 = vmatprep.subr.mxu0 0.0
  %910 = vmatpush2.msra.mxu0 %v267
  %911 = vmatprep.subr.mxu0 0.0
  %912 = vmatpush2.msra.mxu0 %v266
  %913 = vmatprep.subr.mxu0 0.0
  %914 = vmatpush2.msra.mxu0 %v265
  %915 = vmatprep.subr.mxu0 0.0
  %916 = vmatpush2.msra.mxu0 %v264
  %917 = vmatprep.subr.mxu0 0.0
  %918 = vmatpush2.msra.mxu0 %v263
  %919 = vmatprep.subr.mxu0 0.0
  %920 = vmatpush2.msra.mxu0 %v262
  %921 = vmatprep.subr.mxu0 0.0
  %922 = vmatpush2.msra.mxu0 %v261
  %923 = vmatprep.subr.mxu0 0.0
  %924 = vmatpush2.msra.mxu0 %v260
  %925 = vmatprep.mubr.f32.mxu0 %v354
  %926 = vmatmul.mubr.f32.gmra.mxu0 %v352
  %v927 = vpop.f32.mrf.mxu0
  %v928 = vadd.f32 %v858, %v927
  %v929 = vpop.f32.mrf.mxu0
  %930 = vdwg.mxu0
  %v931 = vsub.f32 0.0, %v928
  %v932 = vmul.f32 %v931, 1.442695
  %v933 = vpow.pop %v932
  %v934 = vadd.f32 %v933, 1.0
  %v935 = vrcp.pop %v934
  %v936 = vmul.f32 1.0, %v935
  %vm937 = vcmask 1024
  %938 = vst.msk [vmem:[%s3] sm:$0x3] %vm937, %v936
  // Predicated region
  $region14: #{encoder_forward.13} parent=0 // pred_check
    _
  $region15: #{encoder_forward.13} parent=0 // pred_check_branch
    %940 = sbr.rel (0) target = $region17
  $region16: #{encoder_forward.13} parent=0 // pred_region
    _
  $region17: #{encoder_forward.13} parent=0 // pred_fallthru
    _
  // Predicated region
  $region18: #{encoder_forward.13} parent=0 // pred_check
    _
  $region19: #{encoder_forward.13} parent=0 // pred_check_branch
    %942 = sbr.rel (0) target = $region21
  $region20: #{encoder_forward.13} parent=0 // pred_region
    _
  $region21: #{encoder_forward.13} parent=0 // pred_fallthru
    _

</llo_original>
